<compile_context>
chip_gen: v5e
topology: v5e:2x2
jax: 0.10.0
libtpu: 0.0.40
codegen_flags: <defaults>
</compile_context>

<pallas_src>
import jax
import jax.numpy as jnp
from jax import lax
from jax.experimental import pallas as pl
from jax.experimental.pallas import tpu as pltpu


def _cpc_kernel(x_ref, s1_ref, t1_ref, w1_ref, s2_ref, t2_ref, w2_ref,
                cb2_ref, o_ref, pad1, slab1, pad2, slab2):
    NB, H, W, Cin = x_ref.shape
    Cout = o_ref.shape[3]
    M = NB * H * W

    # Zero only the 1-pixel halo of the padded scratch buffers; the interior is
    # fully overwritten below, so a full-buffer clear every step is wasted stores.
    for pad, C in ((pad1, Cin), (pad2, Cout)):
        pad[:, 0:1, :, :] = jnp.zeros((NB, 1, W + 2, C), pad.dtype)
        pad[:, H + 1:H + 2, :, :] = jnp.zeros((NB, 1, W + 2, C), pad.dtype)
        pad[:, :, 0:1, :] = jnp.zeros((NB, H + 2, 1, C), pad.dtype)
        pad[:, :, W + 1:W + 2, :] = jnp.zeros((NB, H + 2, 1, C), pad.dtype)

    # ---- stage 1: BN1 (eval mode, folded affine) + ReLU in f32 ----
    x = x_ref[...].astype(jnp.float32)
    y = jnp.maximum(x * s1_ref[0] + t1_ref[0], 0.0)
    pad1[:, 1:H + 1, 1:W + 1, :] = y.astype(pad1.dtype)

    # ---- conv1: build bf16 im2col slab, then ONE MXU matmul (f32 acc) ----
    for di in range(3):
        for dj in range(3):
            t = di * 3 + dj
            slab1[:, :, :, t * Cin:(t + 1) * Cin] = (
                pad1[:, di:di + H, dj:dj + W, :].astype(slab1.dtype))
    acc1 = jnp.dot(slab1[...].reshape(M, 9 * Cin), w1_ref[...],
                   preferred_element_type=jnp.float32)        # (M, Cout) f32

    # ---- stage 2: BN2 (conv1 bias folded into its shift) + ReLU in f32 ----
    z = jnp.maximum(acc1 * s2_ref[...] + t2_ref[...], 0.0)
    pad2[:, 1:H + 1, 1:W + 1, :] = z.reshape(NB, H, W, Cout).astype(pad2.dtype)

    # ---- conv2: build bf16 im2col slab, then ONE MXU matmul (f32 acc) ----
    for di in range(3):
        for dj in range(3):
            t = di * 3 + dj
            slab2[:, :, :, t * Cout:(t + 1) * Cout] = (
                pad2[:, di:di + H, dj:dj + W, :].astype(slab2.dtype))
    acc2 = jnp.dot(slab2[...].reshape(M, 9 * Cout), w2_ref[...],
                   preferred_element_type=jnp.float32)
    out = acc2 + cb2_ref[...]
    o_ref[...] = out.reshape(NB, H, W, Cout).astype(o_ref.dtype)


def continus_paralle_conv(x_nchw, params, *, block_b=None):
    """x_nchw: (B, Cin, H, W) float32 -> (B, Cout, H, W) float32."""
    B, Cin, H, W = x_nchw.shape
    Cout = params["w2"].shape[0]
    eps = 1e-5

    # ---- fold BN (eval mode) into per-channel scale/shift (plain-JAX glue) ----
    s1 = params["g1"] / jnp.sqrt(params["v1"] + eps)
    t1 = params["b1"] - params["m1"] * s1
    s2 = params["g2"] / jnp.sqrt(params["v2"] + eps)
    # fold the conv1 bias into the BN2 shift:  BN2(conv1 + cb1) = conv1*s2 + t2eff
    t2 = params["b2"] - params["m2"] * s2 + params["cb1"] * s2

    s1 = s1.reshape(1, Cin).astype(jnp.float32)
    t1 = t1.reshape(1, Cin).astype(jnp.float32)
    s2 = s2.reshape(1, Cout).astype(jnp.float32)
    t2 = t2.reshape(1, Cout).astype(jnp.float32)
    cb2 = params["cb2"].reshape(1, Cout).astype(jnp.float32)

    # conv weights: PyTorch (Cout, Cin, kh, kw) -> im2col slab (9*Cin, Cout), bf16
    w1_slab = jnp.transpose(params["w1"], (2, 3, 1, 0)).reshape(9 * Cin, Cout)
    w2_slab = jnp.transpose(params["w2"], (2, 3, 1, 0)).reshape(9 * Cout, Cout)
    w1_slab = w1_slab.astype(jnp.bfloat16)
    w2_slab = w2_slab.astype(jnp.bfloat16)

    x_nhwc = jnp.transpose(x_nchw, (0, 2, 3, 1)).astype(jnp.float32)

    # Pack several tiny images per grid step (amortize per-step overhead, grow the
    # matmul M dim) but keep >=2 steps when B allows so the "parallel" batch axis
    # can shard across TensorCores on multi-core chips (v7x).
    if block_b is None:
        block_b = 1
        while (block_b * 2 * H * W <= 256 and B % (block_b * 2) == 0
               and block_b * 2 <= max(B // 2, 1)):
            block_b *= 2
    assert B % block_b == 0, "block_b must divide the batch"
    grid = (B // block_b,)

    flops = 2 * B * H * W * 9 * (Cin * Cout + Cout * Cout)
    bytes_accessed = (x_nhwc.size * 4 + B * H * W * Cout * 4
                      + w1_slab.size * 2 + w2_slab.size * 2
                      + 2 * (Cin + 3 * Cout) * 4)

    out_nhwc = pl.pallas_call(
        _cpc_kernel,
        out_shape=jax.ShapeDtypeStruct((B, H, W, Cout), jnp.float32),
        grid_spec=pltpu.PrefetchScalarGridSpec(
            num_scalar_prefetch=0,
            grid=grid,
            in_specs=[
                pl.BlockSpec((block_b, H, W, Cin), lambda b: (b, 0, 0, 0)),
                pl.BlockSpec((1, Cin), lambda b: (0, 0)),
                pl.BlockSpec((1, Cin), lambda b: (0, 0)),
                pl.BlockSpec((9 * Cin, Cout), lambda b: (0, 0)),
                pl.BlockSpec((1, Cout), lambda b: (0, 0)),
                pl.BlockSpec((1, Cout), lambda b: (0, 0)),
                pl.BlockSpec((9 * Cout, Cout), lambda b: (0, 0)),
                pl.BlockSpec((1, Cout), lambda b: (0, 0)),
            ],
            out_specs=pl.BlockSpec((block_b, H, W, Cout),
                                   lambda b: (b, 0, 0, 0)),
            scratch_shapes=[
                # padded activations (f32: keeps halo-offset stores simple);
                # im2col slabs feeding the MXU are bf16.
                pltpu.VMEM((block_b, H + 2, W + 2, Cin), jnp.float32),
                pltpu.VMEM((block_b, H, W, 9 * Cin), jnp.bfloat16),
                pltpu.VMEM((block_b, H + 2, W + 2, Cout), jnp.float32),
                pltpu.VMEM((block_b, H, W, 9 * Cout), jnp.bfloat16),
            ],
        ),
        compiler_params=pltpu.CompilerParams(
            dimension_semantics=("parallel",)),
        cost_estimate=pl.CostEstimate(
            flops=flops, transcendentals=0, bytes_accessed=bytes_accessed),
    )(x_nhwc, s1, t1, w1_slab, s2, t2, w2_slab, cb2)

    return jnp.transpose(out_nhwc, (0, 3, 1, 2))


def _reference(x_nchw, params):
    """Pure-JAX f32 reference (lax.conv) for correctness checking."""
    eps = 1e-5
    s1 = params["g1"] / jnp.sqrt(params["v1"] + eps)
    t1 = params["b1"] - params["m1"] * s1
    s2 = params["g2"] / jnp.sqrt(params["v2"] + eps)
    t2 = params["b2"] - params["m2"] * s2

    x = jnp.transpose(x_nchw, (0, 2, 3, 1))
    y = jnp.maximum(x * s1 + t1, 0.0)
    w1 = jnp.transpose(params["w1"], (2, 3, 1, 0))   # HWIO
    c1 = lax.conv_general_dilated(
        y, w1, (1, 1), "SAME",
        dimension_numbers=("NHWC", "HWIO", "NHWC")) + params["cb1"]
    z = jnp.maximum(c1 * s2 + t2, 0.0)
    w2 = jnp.transpose(params["w2"], (2, 3, 1, 0))
    c2 = lax.conv_general_dilated(
        z, w2, (1, 1), "SAME",
        dimension_numbers=("NHWC", "HWIO", "NHWC")) + params["cb2"]
    return jnp.transpose(c2, (0, 3, 1, 2))


def _init_params(key, cin, cout):
    ks = jax.random.split(key, 12)
    return {
        # BatchNorm2d(cin)
        "g1": 1.0 + 0.1 * jax.random.normal(ks[0], (cin,), jnp.float32),
        "b1": 0.1 * jax.random.normal(ks[1], (cin,), jnp.float32),
        "m1": 0.05 * jax.random.normal(ks[2], (cin,), jnp.float32),
        "v1": jnp.abs(jax.random.normal(ks[3], (cin,), jnp.float32)) + 0.5,
        # Conv2d(cin, cout, 3, padding=1)
        "w1": 0.1 * jax.random.normal(ks[4], (cout, cin, 3, 3), jnp.float32),
        "cb1": 0.1 * jax.random.normal(ks[5], (cout,), jnp.float32),
        # BatchNorm2d(cout)
        "g2": 1.0 + 0.1 * jax.random.normal(ks[6], (cout,), jnp.float32),
        "b2": 0.1 * jax.random.normal(ks[7], (cout,), jnp.float32),
        "m2": 0.05 * jax.random.normal(ks[8], (cout,), jnp.float32),
        "v2": jnp.abs(jax.random.normal(ks[9], (cout,), jnp.float32)) + 0.5,
        # Conv2d(cout, cout, 3, padding=1)
        "w2": 0.1 * jax.random.normal(ks[10], (cout, cout, 3, 3), jnp.float32),
        "cb2": 0.1 * jax.random.normal(ks[11], (cout,), jnp.float32),
    }


if __name__ == "__main__":
    B, Cin, Cout, H, W = 2, 4, 8, 16, 16
    key = jax.random.PRNGKey(0)
    k_x, k_p = jax.random.split(key)
    x = jax.random.normal(k_x, (B, Cin, H, W), jnp.float32)
    params = _init_params(k_p, Cin, Cout)

    out = continus_paralle_conv(x, params)
    out = jax.block_until_ready(out)

    ref = jax.block_until_ready(_reference(x, params))
    assert out.shape == (B, Cout, H, W)
    # bf16 MXU operands with f32 accumulation -> tolerance loosened accordingly.
    assert jnp.allclose(out, ref, rtol=5e-2, atol=5e-2), "mismatch vs reference"

    print("KERNEL_OK")
</pallas_src>

<mosaic_0001>
module attributes {stable_mosaic.version = 11 : i64} {
  func.func @_cpc_kernel(%arg0: i32, %arg1: memref<1x16x16x4xf32, #tpu.memory_space<vmem>>, %arg2: memref<1x4xf32, #tpu.memory_space<vmem>>, %arg3: memref<1x4xf32, #tpu.memory_space<vmem>>, %arg4: memref<36x8xbf16, #tpu.memory_space<vmem>>, %arg5: memref<1x8xf32, #tpu.memory_space<vmem>>, %arg6: memref<1x8xf32, #tpu.memory_space<vmem>>, %arg7: memref<72x8xbf16, #tpu.memory_space<vmem>>, %arg8: memref<1x8xf32, #tpu.memory_space<vmem>>, %arg9: memref<1x16x16x8xf32, #tpu.memory_space<vmem>>, %arg10: memref<1x18x18x4xf32, #tpu.memory_space<vmem>>, %arg11: memref<1x16x16x36xbf16, #tpu.memory_space<vmem>>, %arg12: memref<1x18x18x8xf32, #tpu.memory_space<vmem>>, %arg13: memref<1x16x16x72xbf16, #tpu.memory_space<vmem>>) attributes {dimension_semantics = [#tpu.dimension_semantics<parallel>], iteration_bounds = array<i64: 2>, scalar_prefetch = 0 : i64, scratch_operands = 4 : i64, tpu.core_type = #tpu.core_type<tc>, window_params = [{transform_indices = @transform_0, window_bounds = array<i64: 1, 16, 16, 4>}, {pipeline_mode = #tpu.pipeline_mode<synchronous>, transform_indices = @transform_1, window_bounds = array<i64: 1, 4>}, {pipeline_mode = #tpu.pipeline_mode<synchronous>, transform_indices = @transform_2, window_bounds = array<i64: 1, 4>}, {pipeline_mode = #tpu.pipeline_mode<synchronous>, transform_indices = @transform_3, window_bounds = array<i64: 36, 8>}, {pipeline_mode = #tpu.pipeline_mode<synchronous>, transform_indices = @transform_4, window_bounds = array<i64: 1, 8>}, {pipeline_mode = #tpu.pipeline_mode<synchronous>, transform_indices = @transform_5, window_bounds = array<i64: 1, 8>}, {pipeline_mode = #tpu.pipeline_mode<synchronous>, transform_indices = @transform_6, window_bounds = array<i64: 72, 8>}, {pipeline_mode = #tpu.pipeline_mode<synchronous>, transform_indices = @transform_7, window_bounds = array<i64: 1, 8>}, {transform_indices = @transform_8, window_bounds = array<i64: 1, 16, 16, 8>}]} {
    %cst = arith.constant 0.000000e+00 : f32
    %0 = vector.broadcast %cst : f32 to vector<1x1x18x4xf32>
    %c0 = arith.constant 0 : index
    %c0_0 = arith.constant 0 : index
    %c0_1 = arith.constant 0 : index
    %c0_2 = arith.constant 0 : index
    %1 = vector.load %arg10[%c0, %c0_0, %c0_1, %c0_2] : memref<1x18x18x4xf32, #tpu.memory_space<vmem>>, vector<1x1x18x4xf32>
    tpu.vector_store %arg10[%c0, %c0_0, %c0_1, %c0_2], %0 {strides = array<i32>} : memref<1x18x18x4xf32, #tpu.memory_space<vmem>>, vector<1x1x18x4xf32>,
    %cst_3 = arith.constant 0.000000e+00 : f32
    %2 = vector.broadcast %cst_3 : f32 to vector<1x1x18x4xf32>
    %c0_4 = arith.constant 0 : index
    %c17 = arith.constant 17 : index
    %c0_5 = arith.constant 0 : index
    %c0_6 = arith.constant 0 : index
    %3 = vector.load %arg10[%c0_4, %c17, %c0_5, %c0_6] : memref<1x18x18x4xf32, #tpu.memory_space<vmem>>, vector<1x1x18x4xf32>
    tpu.vector_store %arg10[%c0_4, %c17, %c0_5, %c0_6], %2 {strides = array<i32>} : memref<1x18x18x4xf32, #tpu.memory_space<vmem>>, vector<1x1x18x4xf32>,
    %cst_7 = arith.constant 0.000000e+00 : f32
    %4 = vector.broadcast %cst_7 : f32 to vector<1x18x1x4xf32>
    %c0_8 = arith.constant 0 : index
    %c0_9 = arith.constant 0 : index
    %c0_10 = arith.constant 0 : index
    %c0_11 = arith.constant 0 : index
    %5 = vector.load %arg10[%c0_8, %c0_9, %c0_10, %c0_11] : memref<1x18x18x4xf32, #tpu.memory_space<vmem>>, vector<1x18x1x4xf32>
    tpu.vector_store %arg10[%c0_8, %c0_9, %c0_10, %c0_11], %4 {strides = array<i32>} : memref<1x18x18x4xf32, #tpu.memory_space<vmem>>, vector<1x18x1x4xf32>,
    %cst_12 = arith.constant 0.000000e+00 : f32
    %6 = vector.broadcast %cst_12 : f32 to vector<1x18x1x4xf32>
    %c0_13 = arith.constant 0 : index
    %c0_14 = arith.constant 0 : index
    %c17_15 = arith.constant 17 : index
    %c0_16 = arith.constant 0 : index
    %7 = vector.load %arg10[%c0_13, %c0_14, %c17_15, %c0_16] : memref<1x18x18x4xf32, #tpu.memory_space<vmem>>, vector<1x18x1x4xf32>
    tpu.vector_store %arg10[%c0_13, %c0_14, %c17_15, %c0_16], %6 {strides = array<i32>} : memref<1x18x18x4xf32, #tpu.memory_space<vmem>>, vector<1x18x1x4xf32>,
    %cst_17 = arith.constant 0.000000e+00 : f32
    %8 = vector.broadcast %cst_17 : f32 to vector<1x1x18x8xf32>
    %c0_18 = arith.constant 0 : index
    %c0_19 = arith.constant 0 : index
    %c0_20 = arith.constant 0 : index
    %c0_21 = arith.constant 0 : index
    %9 = vector.load %arg12[%c0_18, %c0_19, %c0_20, %c0_21] : memref<1x18x18x8xf32, #tpu.memory_space<vmem>>, vector<1x1x18x8xf32>
    tpu.vector_store %arg12[%c0_18, %c0_19, %c0_20, %c0_21], %8 {strides = array<i32>} : memref<1x18x18x8xf32, #tpu.memory_space<vmem>>, vector<1x1x18x8xf32>,
    %cst_22 = arith.constant 0.000000e+00 : f32
    %10 = vector.broadcast %cst_22 : f32 to vector<1x1x18x8xf32>
    %c0_23 = arith.constant 0 : index
    %c17_24 = arith.constant 17 : index
    %c0_25 = arith.constant 0 : index
    %c0_26 = arith.constant 0 : index
    %11 = vector.load %arg12[%c0_23, %c17_24, %c0_25, %c0_26] : memref<1x18x18x8xf32, #tpu.memory_space<vmem>>, vector<1x1x18x8xf32>
    tpu.vector_store %arg12[%c0_23, %c17_24, %c0_25, %c0_26], %10 {strides = array<i32>} : memref<1x18x18x8xf32, #tpu.memory_space<vmem>>, vector<1x1x18x8xf32>,
    %cst_27 = arith.constant 0.000000e+00 : f32
    %12 = vector.broadcast %cst_27 : f32 to vector<1x18x1x8xf32>
    %c0_28 = arith.constant 0 : index
    %c0_29 = arith.constant 0 : index
    %c0_30 = arith.constant 0 : index
    %c0_31 = arith.constant 0 : index
    %13 = vector.load %arg12[%c0_28, %c0_29, %c0_30, %c0_31] : memref<1x18x18x8xf32, #tpu.memory_space<vmem>>, vector<1x18x1x8xf32>
    tpu.vector_store %arg12[%c0_28, %c0_29, %c0_30, %c0_31], %12 {strides = array<i32>} : memref<1x18x18x8xf32, #tpu.memory_space<vmem>>, vector<1x18x1x8xf32>,
    %cst_32 = arith.constant 0.000000e+00 : f32
    %14 = vector.broadcast %cst_32 : f32 to vector<1x18x1x8xf32>
    %c0_33 = arith.constant 0 : index
    %c0_34 = arith.constant 0 : index
    %c17_35 = arith.constant 17 : index
    %c0_36 = arith.constant 0 : index
    %15 = vector.load %arg12[%c0_33, %c0_34, %c17_35, %c0_36] : memref<1x18x18x8xf32, #tpu.memory_space<vmem>>, vector<1x18x1x8xf32>
    tpu.vector_store %arg12[%c0_33, %c0_34, %c17_35, %c0_36], %14 {strides = array<i32>} : memref<1x18x18x8xf32, #tpu.memory_space<vmem>>, vector<1x18x1x8xf32>,
    %c0_37 = arith.constant 0 : index
    %c0_38 = arith.constant 0 : index
    %c0_39 = arith.constant 0 : index
    %c0_40 = arith.constant 0 : index
    %16 = vector.load %arg1[%c0_37, %c0_38, %c0_39, %c0_40] : memref<1x16x16x4xf32, #tpu.memory_space<vmem>>, vector<1x16x16x4xf32>
    %c0_41 = arith.constant 0 : index
    %c0_42 = arith.constant 0 : index
    %17 = vector.load %arg2[%c0_41, %c0_42] : memref<1x4xf32, #tpu.memory_space<vmem>>, vector<1x4xf32>
    %18 = vector.shape_cast %17 : vector<1x4xf32> to vector<4xf32>
    %19 = vector.shape_cast %18 : vector<4xf32> to vector<1x1x1x4xf32>
    %20 = vector.broadcast %19 : vector<1x1x1x4xf32> to vector<1x16x16x4xf32>
    %21 = arith.mulf %16, %20 : vector<1x16x16x4xf32>
    %c0_43 = arith.constant 0 : index
    %c0_44 = arith.constant 0 : index
    %22 = vector.load %arg3[%c0_43, %c0_44] : memref<1x4xf32, #tpu.memory_space<vmem>>, vector<1x4xf32>
    %23 = vector.shape_cast %22 : vector<1x4xf32> to vector<4xf32>
    %24 = vector.shape_cast %23 : vector<4xf32> to vector<1x1x1x4xf32>
    %25 = vector.broadcast %24 : vector<1x1x1x4xf32> to vector<1x16x16x4xf32>
    %26 = arith.addf %21, %25 : vector<1x16x16x4xf32>
    %cst_45 = arith.constant 0.000000e+00 : f32
    %27 = vector.broadcast %cst_45 : f32 to vector<1x16x16x4xf32>
    %28 = arith.maximumf %26, %27 : vector<1x16x16x4xf32>
    %c0_46 = arith.constant 0 : index
    %c1 = arith.constant 1 : index
    %c1_47 = arith.constant 1 : index
    %c0_48 = arith.constant 0 : index
    %29 = vector.load %arg10[%c0_46, %c1, %c1_47, %c0_48] : memref<1x18x18x4xf32, #tpu.memory_space<vmem>>, vector<1x16x16x4xf32>
    tpu.vector_store %arg10[%c0_46, %c1, %c1_47, %c0_48], %28 {strides = array<i32>} : memref<1x18x18x4xf32, #tpu.memory_space<vmem>>, vector<1x16x16x4xf32>,
    %c0_49 = arith.constant 0 : index
    %c0_50 = arith.constant 0 : index
    %c0_51 = arith.constant 0 : index
    %c0_52 = arith.constant 0 : index
    %30 = vector.load %arg10[%c0_49, %c0_50, %c0_51, %c0_52] : memref<1x18x18x4xf32, #tpu.memory_space<vmem>>, vector<1x16x16x4xf32>
    %31 = arith.truncf %30 : vector<1x16x16x4xf32> to vector<1x16x16x4xbf16>
    %c0_53 = arith.constant 0 : index
    %c0_54 = arith.constant 0 : index
    %c0_55 = arith.constant 0 : index
    %c0_56 = arith.constant 0 : index
    %32 = vector.load %arg11[%c0_53, %c0_54, %c0_55, %c0_56] : memref<1x16x16x36xbf16, #tpu.memory_space<vmem>>, vector<1x16x16x4xbf16>
    tpu.vector_store %arg11[%c0_53, %c0_54, %c0_55, %c0_56], %31 {strides = array<i32>} : memref<1x16x16x36xbf16, #tpu.memory_space<vmem>>, vector<1x16x16x4xbf16>,
    %c0_57 = arith.constant 0 : index
    %c0_58 = arith.constant 0 : index
    %c1_59 = arith.constant 1 : index
    %c0_60 = arith.constant 0 : index
    %33 = vector.load %arg10[%c0_57, %c0_58, %c1_59, %c0_60] : memref<1x18x18x4xf32, #tpu.memory_space<vmem>>, vector<1x16x16x4xf32>
    %34 = arith.truncf %33 : vector<1x16x16x4xf32> to vector<1x16x16x4xbf16>
    %c0_61 = arith.constant 0 : index
    %c0_62 = arith.constant 0 : index
    %c0_63 = arith.constant 0 : index
    %c4 = arith.constant 4 : index
    %35 = vector.load %arg11[%c0_61, %c0_62, %c0_63, %c4] : memref<1x16x16x36xbf16, #tpu.memory_space<vmem>>, vector<1x16x16x4xbf16>
    tpu.vector_store %arg11[%c0_61, %c0_62, %c0_63, %c4], %34 {strides = array<i32>} : memref<1x16x16x36xbf16, #tpu.memory_space<vmem>>, vector<1x16x16x4xbf16>,
    %c0_64 = arith.constant 0 : index
    %c0_65 = arith.constant 0 : index
    %c2 = arith.constant 2 : index
    %c0_66 = arith.constant 0 : index
    %36 = vector.load %arg10[%c0_64, %c0_65, %c2, %c0_66] : memref<1x18x18x4xf32, #tpu.memory_space<vmem>>, vector<1x16x16x4xf32>
    %37 = arith.truncf %36 : vector<1x16x16x4xf32> to vector<1x16x16x4xbf16>
    %c0_67 = arith.constant 0 : index
    %c0_68 = arith.constant 0 : index
    %c0_69 = arith.constant 0 : index
    %c8 = arith.constant 8 : index
    %38 = vector.load %arg11[%c0_67, %c0_68, %c0_69, %c8] : memref<1x16x16x36xbf16, #tpu.memory_space<vmem>>, vector<1x16x16x4xbf16>
    tpu.vector_store %arg11[%c0_67, %c0_68, %c0_69, %c8], %37 {strides = array<i32>} : memref<1x16x16x36xbf16, #tpu.memory_space<vmem>>, vector<1x16x16x4xbf16>,
    %c0_70 = arith.constant 0 : index
    %c1_71 = arith.constant 1 : index
    %c0_72 = arith.constant 0 : index
    %c0_73 = arith.constant 0 : index
    %39 = vector.load %arg10[%c0_70, %c1_71, %c0_72, %c0_73] : memref<1x18x18x4xf32, #tpu.memory_space<vmem>>, vector<1x16x16x4xf32>
    %40 = arith.truncf %39 : vector<1x16x16x4xf32> to vector<1x16x16x4xbf16>
    %c0_74 = arith.constant 0 : index
    %c0_75 = arith.constant 0 : index
    %c0_76 = arith.constant 0 : index
    %c12 = arith.constant 12 : index
    %41 = vector.load %arg11[%c0_74, %c0_75, %c0_76, %c12] : memref<1x16x16x36xbf16, #tpu.memory_space<vmem>>, vector<1x16x16x4xbf16>
    tpu.vector_store %arg11[%c0_74, %c0_75, %c0_76, %c12], %40 {strides = array<i32>} : memref<1x16x16x36xbf16, #tpu.memory_space<vmem>>, vector<1x16x16x4xbf16>,
    %c0_77 = arith.constant 0 : index
    %c1_78 = arith.constant 1 : index
    %c1_79 = arith.constant 1 : index
    %c0_80 = arith.constant 0 : index
    %42 = vector.load %arg10[%c0_77, %c1_78, %c1_79, %c0_80] : memref<1x18x18x4xf32, #tpu.memory_space<vmem>>, vector<1x16x16x4xf32>
    %43 = arith.truncf %42 : vector<1x16x16x4xf32> to vector<1x16x16x4xbf16>
    %c0_81 = arith.constant 0 : index
    %c0_82 = arith.constant 0 : index
    %c0_83 = arith.constant 0 : index
    %c16 = arith.constant 16 : index
    %44 = vector.load %arg11[%c0_81, %c0_82, %c0_83, %c16] : memref<1x16x16x36xbf16, #tpu.memory_space<vmem>>, vector<1x16x16x4xbf16>
    tpu.vector_store %arg11[%c0_81, %c0_82, %c0_83, %c16], %43 {strides = array<i32>} : memref<1x16x16x36xbf16, #tpu.memory_space<vmem>>, vector<1x16x16x4xbf16>,
    %c0_84 = arith.constant 0 : index
    %c1_85 = arith.constant 1 : index
    %c2_86 = arith.constant 2 : index
    %c0_87 = arith.constant 0 : index
    %45 = vector.load %arg10[%c0_84, %c1_85, %c2_86, %c0_87] : memref<1x18x18x4xf32, #tpu.memory_space<vmem>>, vector<1x16x16x4xf32>
    %46 = arith.truncf %45 : vector<1x16x16x4xf32> to vector<1x16x16x4xbf16>
    %c0_88 = arith.constant 0 : index
    %c0_89 = arith.constant 0 : index
    %c0_90 = arith.constant 0 : index
    %c20 = arith.constant 20 : index
    %47 = vector.load %arg11[%c0_88, %c0_89, %c0_90, %c20] : memref<1x16x16x36xbf16, #tpu.memory_space<vmem>>, vector<1x16x16x4xbf16>
    tpu.vector_store %arg11[%c0_88, %c0_89, %c0_90, %c20], %46 {strides = array<i32>} : memref<1x16x16x36xbf16, #tpu.memory_space<vmem>>, vector<1x16x16x4xbf16>,
    %c0_91 = arith.constant 0 : index
    %c2_92 = arith.constant 2 : index
    %c0_93 = arith.constant 0 : index
    %c0_94 = arith.constant 0 : index
    %48 = vector.load %arg10[%c0_91, %c2_92, %c0_93, %c0_94] : memref<1x18x18x4xf32, #tpu.memory_space<vmem>>, vector<1x16x16x4xf32>
    %49 = arith.truncf %48 : vector<1x16x16x4xf32> to vector<1x16x16x4xbf16>
    %c0_95 = arith.constant 0 : index
    %c0_96 = arith.constant 0 : index
    %c0_97 = arith.constant 0 : index
    %c24 = arith.constant 24 : index
    %50 = vector.load %arg11[%c0_95, %c0_96, %c0_97, %c24] : memref<1x16x16x36xbf16, #tpu.memory_space<vmem>>, vector<1x16x16x4xbf16>
    tpu.vector_store %arg11[%c0_95, %c0_96, %c0_97, %c24], %49 {strides = array<i32>} : memref<1x16x16x36xbf16, #tpu.memory_space<vmem>>, vector<1x16x16x4xbf16>,
    %c0_98 = arith.constant 0 : index
    %c2_99 = arith.constant 2 : index
    %c1_100 = arith.constant 1 : index
    %c0_101 = arith.constant 0 : index
    %51 = vector.load %arg10[%c0_98, %c2_99, %c1_100, %c0_101] : memref<1x18x18x4xf32, #tpu.memory_space<vmem>>, vector<1x16x16x4xf32>
    %52 = arith.truncf %51 : vector<1x16x16x4xf32> to vector<1x16x16x4xbf16>
    %c0_102 = arith.constant 0 : index
    %c0_103 = arith.constant 0 : index
    %c0_104 = arith.constant 0 : index
    %c28 = arith.constant 28 : index
    %53 = vector.load %arg11[%c0_102, %c0_103, %c0_104, %c28] : memref<1x16x16x36xbf16, #tpu.memory_space<vmem>>, vector<1x16x16x4xbf16>
    tpu.vector_store %arg11[%c0_102, %c0_103, %c0_104, %c28], %52 {strides = array<i32>} : memref<1x16x16x36xbf16, #tpu.memory_space<vmem>>, vector<1x16x16x4xbf16>,
    %c0_105 = arith.constant 0 : index
    %c2_106 = arith.constant 2 : index
    %c2_107 = arith.constant 2 : index
    %c0_108 = arith.constant 0 : index
    %54 = vector.load %arg10[%c0_105, %c2_106, %c2_107, %c0_108] : memref<1x18x18x4xf32, #tpu.memory_space<vmem>>, vector<1x16x16x4xf32>
    %55 = arith.truncf %54 : vector<1x16x16x4xf32> to vector<1x16x16x4xbf16>
    %c0_109 = arith.constant 0 : index
    %c0_110 = arith.constant 0 : index
    %c0_111 = arith.constant 0 : index
    %c32 = arith.constant 32 : index
    %56 = vector.load %arg11[%c0_109, %c0_110, %c0_111, %c32] : memref<1x16x16x36xbf16, #tpu.memory_space<vmem>>, vector<1x16x16x4xbf16>
    tpu.vector_store %arg11[%c0_109, %c0_110, %c0_111, %c32], %55 {strides = array<i32>} : memref<1x16x16x36xbf16, #tpu.memory_space<vmem>>, vector<1x16x16x4xbf16>,
    %c0_112 = arith.constant 0 : index
    %c0_113 = arith.constant 0 : index
    %c0_114 = arith.constant 0 : index
    %c0_115 = arith.constant 0 : index
    %57 = vector.load %arg11[%c0_112, %c0_113, %c0_114, %c0_115] : memref<1x16x16x36xbf16, #tpu.memory_space<vmem>>, vector<1x16x16x36xbf16>
    %58 = vector.shape_cast %57 : vector<1x16x16x36xbf16> to vector<256x36xbf16>
    %c0_116 = arith.constant 0 : index
    %c0_117 = arith.constant 0 : index
    %59 = vector.load %arg4[%c0_116, %c0_117] : memref<36x8xbf16, #tpu.memory_space<vmem>>, vector<36x8xbf16>
    %cst_118 = arith.constant dense<0.000000e+00> : vector<256x8xf32>
    %60 = tpu.matmul %58, %59, %cst_118 {dimension_numbers = #tpu.dot_dimension_numbers<[1], [0], [0], [1], [0, 0, 1, 1], [], []>} : vector<256x36xbf16>, vector<36x8xbf16>, vector<256x8xf32> -> vector<256x8xf32>
    %c0_119 = arith.constant 0 : index
    %c0_120 = arith.constant 0 : index
    %61 = vector.load %arg5[%c0_119, %c0_120] : memref<1x8xf32, #tpu.memory_space<vmem>>, vector<1x8xf32>
    %62 = vector.broadcast %61 : vector<1x8xf32> to vector<256x8xf32>
    %63 = arith.mulf %60, %62 : vector<256x8xf32>
    %c0_121 = arith.constant 0 : index
    %c0_122 = arith.constant 0 : index
    %64 = vector.load %arg6[%c0_121, %c0_122] : memref<1x8xf32, #tpu.memory_space<vmem>>, vector<1x8xf32>
    %65 = vector.broadcast %64 : vector<1x8xf32> to vector<256x8xf32>
    %66 = arith.addf %63, %65 : vector<256x8xf32>
    %cst_123 = arith.constant 0.000000e+00 : f32
    %67 = vector.broadcast %cst_123 : f32 to vector<256x8xf32>
    %68 = arith.maximumf %66, %67 : vector<256x8xf32>
    %69 = vector.shape_cast %68 : vector<256x8xf32> to vector<1x16x16x8xf32>
    %c0_124 = arith.constant 0 : index
    %c1_125 = arith.constant 1 : index
    %c1_126 = arith.constant 1 : index
    %c0_127 = arith.constant 0 : index
    %70 = vector.load %arg12[%c0_124, %c1_125, %c1_126, %c0_127] : memref<1x18x18x8xf32, #tpu.memory_space<vmem>>, vector<1x16x16x8xf32>
    tpu.vector_store %arg12[%c0_124, %c1_125, %c1_126, %c0_127], %69 {strides = array<i32>} : memref<1x18x18x8xf32, #tpu.memory_space<vmem>>, vector<1x16x16x8xf32>,
    %c0_128 = arith.constant 0 : index
    %c0_129 = arith.constant 0 : index
    %c0_130 = arith.constant 0 : index
    %c0_131 = arith.constant 0 : index
    %71 = vector.load %arg12[%c0_128, %c0_129, %c0_130, %c0_131] : memref<1x18x18x8xf32, #tpu.memory_space<vmem>>, vector<1x16x16x8xf32>
    %72 = arith.truncf %71 : vector<1x16x16x8xf32> to vector<1x16x16x8xbf16>
    %c0_132 = arith.constant 0 : index
    %c0_133 = arith.constant 0 : index
    %c0_134 = arith.constant 0 : index
    %c0_135 = arith.constant 0 : index
    %73 = vector.load %arg13[%c0_132, %c0_133, %c0_134, %c0_135] : memref<1x16x16x72xbf16, #tpu.memory_space<vmem>>, vector<1x16x16x8xbf16>
    tpu.vector_store %arg13[%c0_132, %c0_133, %c0_134, %c0_135], %72 {strides = array<i32>} : memref<1x16x16x72xbf16, #tpu.memory_space<vmem>>, vector<1x16x16x8xbf16>,
    %c0_136 = arith.constant 0 : index
    %c0_137 = arith.constant 0 : index
    %c1_138 = arith.constant 1 : index
    %c0_139 = arith.constant 0 : index
    %74 = vector.load %arg12[%c0_136, %c0_137, %c1_138, %c0_139] : memref<1x18x18x8xf32, #tpu.memory_space<vmem>>, vector<1x16x16x8xf32>
    %75 = arith.truncf %74 : vector<1x16x16x8xf32> to vector<1x16x16x8xbf16>
    %c0_140 = arith.constant 0 : index
    %c0_141 = arith.constant 0 : index
    %c0_142 = arith.constant 0 : index
    %c8_143 = arith.constant 8 : index
    %76 = vector.load %arg13[%c0_140, %c0_141, %c0_142, %c8_143] : memref<1x16x16x72xbf16, #tpu.memory_space<vmem>>, vector<1x16x16x8xbf16>
    tpu.vector_store %arg13[%c0_140, %c0_141, %c0_142, %c8_143], %75 {strides = array<i32>} : memref<1x16x16x72xbf16, #tpu.memory_space<vmem>>, vector<1x16x16x8xbf16>,
    %c0_144 = arith.constant 0 : index
    %c0_145 = arith.constant 0 : index
    %c2_146 = arith.constant 2 : index
    %c0_147 = arith.constant 0 : index
    %77 = vector.load %arg12[%c0_144, %c0_145, %c2_146, %c0_147] : memref<1x18x18x8xf32, #tpu.memory_space<vmem>>, vector<1x16x16x8xf32>
    %78 = arith.truncf %77 : vector<1x16x16x8xf32> to vector<1x16x16x8xbf16>
    %c0_148 = arith.constant 0 : index
    %c0_149 = arith.constant 0 : index
    %c0_150 = arith.constant 0 : index
    %c16_151 = arith.constant 16 : index
    %79 = vector.load %arg13[%c0_148, %c0_149, %c0_150, %c16_151] : memref<1x16x16x72xbf16, #tpu.memory_space<vmem>>, vector<1x16x16x8xbf16>
    tpu.vector_store %arg13[%c0_148, %c0_149, %c0_150, %c16_151], %78 {strides = array<i32>} : memref<1x16x16x72xbf16, #tpu.memory_space<vmem>>, vector<1x16x16x8xbf16>,
    %c0_152 = arith.constant 0 : index
    %c1_153 = arith.constant 1 : index
    %c0_154 = arith.constant 0 : index
    %c0_155 = arith.constant 0 : index
    %80 = vector.load %arg12[%c0_152, %c1_153, %c0_154, %c0_155] : memref<1x18x18x8xf32, #tpu.memory_space<vmem>>, vector<1x16x16x8xf32>
    %81 = arith.truncf %80 : vector<1x16x16x8xf32> to vector<1x16x16x8xbf16>
    %c0_156 = arith.constant 0 : index
    %c0_157 = arith.constant 0 : index
    %c0_158 = arith.constant 0 : index
    %c24_159 = arith.constant 24 : index
    %82 = vector.load %arg13[%c0_156, %c0_157, %c0_158, %c24_159] : memref<1x16x16x72xbf16, #tpu.memory_space<vmem>>, vector<1x16x16x8xbf16>
    tpu.vector_store %arg13[%c0_156, %c0_157, %c0_158, %c24_159], %81 {strides = array<i32>} : memref<1x16x16x72xbf16, #tpu.memory_space<vmem>>, vector<1x16x16x8xbf16>,
    %c0_160 = arith.constant 0 : index
    %c1_161 = arith.constant 1 : index
    %c1_162 = arith.constant 1 : index
    %c0_163 = arith.constant 0 : index
    %83 = vector.load %arg12[%c0_160, %c1_161, %c1_162, %c0_163] : memref<1x18x18x8xf32, #tpu.memory_space<vmem>>, vector<1x16x16x8xf32>
    %84 = arith.truncf %83 : vector<1x16x16x8xf32> to vector<1x16x16x8xbf16>
    %c0_164 = arith.constant 0 : index
    %c0_165 = arith.constant 0 : index
    %c0_166 = arith.constant 0 : index
    %c32_167 = arith.constant 32 : index
    %85 = vector.load %arg13[%c0_164, %c0_165, %c0_166, %c32_167] : memref<1x16x16x72xbf16, #tpu.memory_space<vmem>>, vector<1x16x16x8xbf16>
    tpu.vector_store %arg13[%c0_164, %c0_165, %c0_166, %c32_167], %84 {strides = array<i32>} : memref<1x16x16x72xbf16, #tpu.memory_space<vmem>>, vector<1x16x16x8xbf16>,
    %c0_168 = arith.constant 0 : index
    %c1_169 = arith.constant 1 : index
    %c2_170 = arith.constant 2 : index
    %c0_171 = arith.constant 0 : index
    %86 = vector.load %arg12[%c0_168, %c1_169, %c2_170, %c0_171] : memref<1x18x18x8xf32, #tpu.memory_space<vmem>>, vector<1x16x16x8xf32>
    %87 = arith.truncf %86 : vector<1x16x16x8xf32> to vector<1x16x16x8xbf16>
    %c0_172 = arith.constant 0 : index
    %c0_173 = arith.constant 0 : index
    %c0_174 = arith.constant 0 : index
    %c40 = arith.constant 40 : index
    %88 = vector.load %arg13[%c0_172, %c0_173, %c0_174, %c40] : memref<1x16x16x72xbf16, #tpu.memory_space<vmem>>, vector<1x16x16x8xbf16>
    tpu.vector_store %arg13[%c0_172, %c0_173, %c0_174, %c40], %87 {strides = array<i32>} : memref<1x16x16x72xbf16, #tpu.memory_space<vmem>>, vector<1x16x16x8xbf16>,
    %c0_175 = arith.constant 0 : index
    %c2_176 = arith.constant 2 : index
    %c0_177 = arith.constant 0 : index
    %c0_178 = arith.constant 0 : index
    %89 = vector.load %arg12[%c0_175, %c2_176, %c0_177, %c0_178] : memref<1x18x18x8xf32, #tpu.memory_space<vmem>>, vector<1x16x16x8xf32>
    %90 = arith.truncf %89 : vector<1x16x16x8xf32> to vector<1x16x16x8xbf16>
    %c0_179 = arith.constant 0 : index
    %c0_180 = arith.constant 0 : index
    %c0_181 = arith.constant 0 : index
    %c48 = arith.constant 48 : index
    %91 = vector.load %arg13[%c0_179, %c0_180, %c0_181, %c48] : memref<1x16x16x72xbf16, #tpu.memory_space<vmem>>, vector<1x16x16x8xbf16>
    tpu.vector_store %arg13[%c0_179, %c0_180, %c0_181, %c48], %90 {strides = array<i32>} : memref<1x16x16x72xbf16, #tpu.memory_space<vmem>>, vector<1x16x16x8xbf16>,
    %c0_182 = arith.constant 0 : index
    %c2_183 = arith.constant 2 : index
    %c1_184 = arith.constant 1 : index
    %c0_185 = arith.constant 0 : index
    %92 = vector.load %arg12[%c0_182, %c2_183, %c1_184, %c0_185] : memref<1x18x18x8xf32, #tpu.memory_space<vmem>>, vector<1x16x16x8xf32>
    %93 = arith.truncf %92 : vector<1x16x16x8xf32> to vector<1x16x16x8xbf16>
    %c0_186 = arith.constant 0 : index
    %c0_187 = arith.constant 0 : index
    %c0_188 = arith.constant 0 : index
    %c56 = arith.constant 56 : index
    %94 = vector.load %arg13[%c0_186, %c0_187, %c0_188, %c56] : memref<1x16x16x72xbf16, #tpu.memory_space<vmem>>, vector<1x16x16x8xbf16>
    tpu.vector_store %arg13[%c0_186, %c0_187, %c0_188, %c56], %93 {strides = array<i32>} : memref<1x16x16x72xbf16, #tpu.memory_space<vmem>>, vector<1x16x16x8xbf16>,
    %c0_189 = arith.constant 0 : index
    %c2_190 = arith.constant 2 : index
    %c2_191 = arith.constant 2 : index
    %c0_192 = arith.constant 0 : index
    %95 = vector.load %arg12[%c0_189, %c2_190, %c2_191, %c0_192] : memref<1x18x18x8xf32, #tpu.memory_space<vmem>>, vector<1x16x16x8xf32>
    %96 = arith.truncf %95 : vector<1x16x16x8xf32> to vector<1x16x16x8xbf16>
    %c0_193 = arith.constant 0 : index
    %c0_194 = arith.constant 0 : index
    %c0_195 = arith.constant 0 : index
    %c64 = arith.constant 64 : index
    %97 = vector.load %arg13[%c0_193, %c0_194, %c0_195, %c64] : memref<1x16x16x72xbf16, #tpu.memory_space<vmem>>, vector<1x16x16x8xbf16>
    tpu.vector_store %arg13[%c0_193, %c0_194, %c0_195, %c64], %96 {strides = array<i32>} : memref<1x16x16x72xbf16, #tpu.memory_space<vmem>>, vector<1x16x16x8xbf16>,
    %c0_196 = arith.constant 0 : index
    %c0_197 = arith.constant 0 : index
    %c0_198 = arith.constant 0 : index
    %c0_199 = arith.constant 0 : index
    %98 = vector.load %arg13[%c0_196, %c0_197, %c0_198, %c0_199] : memref<1x16x16x72xbf16, #tpu.memory_space<vmem>>, vector<1x16x16x72xbf16>
    %99 = vector.shape_cast %98 : vector<1x16x16x72xbf16> to vector<256x72xbf16>
    %c0_200 = arith.constant 0 : index
    %c0_201 = arith.constant 0 : index
    %100 = vector.load %arg7[%c0_200, %c0_201] : memref<72x8xbf16, #tpu.memory_space<vmem>>, vector<72x8xbf16>
    %cst_202 = arith.constant dense<0.000000e+00> : vector<256x8xf32>
    %101 = tpu.matmul %99, %100, %cst_202 {dimension_numbers = #tpu.dot_dimension_numbers<[1], [0], [0], [1], [0, 0, 1, 1], [], []>} : vector<256x72xbf16>, vector<72x8xbf16>, vector<256x8xf32> -> vector<256x8xf32>
    %c0_203 = arith.constant 0 : index
    %c0_204 = arith.constant 0 : index
    %102 = vector.load %arg8[%c0_203, %c0_204] : memref<1x8xf32, #tpu.memory_space<vmem>>, vector<1x8xf32>
    %103 = vector.broadcast %102 : vector<1x8xf32> to vector<256x8xf32>
    %104 = arith.addf %101, %103 : vector<256x8xf32>
    %105 = vector.shape_cast %104 : vector<256x8xf32> to vector<1x16x16x8xf32>
    %c0_205 = arith.constant 0 : index
    %c0_206 = arith.constant 0 : index
    %c0_207 = arith.constant 0 : index
    %c0_208 = arith.constant 0 : index
    %106 = vector.load %arg9[%c0_205, %c0_206, %c0_207, %c0_208] : memref<1x16x16x8xf32, #tpu.memory_space<vmem>>, vector<1x16x16x8xf32>
    tpu.vector_store %arg9[%c0_205, %c0_206, %c0_207, %c0_208], %105 {strides = array<i32>} : memref<1x16x16x8xf32, #tpu.memory_space<vmem>>, vector<1x16x16x8xf32>,
    return
  }
  func.func @transform_0(%arg0: i32) -> (i32, i32, i32, i32) {
    %c0_i32 = arith.constant 0 : i32
    %c0_i32_0 = arith.constant 0 : i32
    %c0_i32_1 = arith.constant 0 : i32
    %c0_i32_2 = arith.constant 0 : i32
    return %arg0, %c0_i32, %c0_i32_0, %c0_i32_1 : i32, i32, i32, i32
  }
  func.func @transform_1(%arg0: i32) -> (i32, i32) {
    %c0_i32 = arith.constant 0 : i32
    %c0_i32_0 = arith.constant 0 : i32
    %c0_i32_1 = arith.constant 0 : i32
    return %c0_i32, %c0_i32_0 : i32, i32
  }
  func.func @transform_2(%arg0: i32) -> (i32, i32) {
    %c0_i32 = arith.constant 0 : i32
    %c0_i32_0 = arith.constant 0 : i32
    %c0_i32_1 = arith.constant 0 : i32
    return %c0_i32, %c0_i32_0 : i32, i32
  }
  func.func @transform_3(%arg0: i32) -> (i32, i32) {
    %c0_i32 = arith.constant 0 : i32
    %c0_i32_0 = arith.constant 0 : i32
    %c0_i32_1 = arith.constant 0 : i32
    return %c0_i32, %c0_i32_0 : i32, i32
  }
  func.func @transform_4(%arg0: i32) -> (i32, i32) {
    %c0_i32 = arith.constant 0 : i32
    %c0_i32_0 = arith.constant 0 : i32
    %c0_i32_1 = arith.constant 0 : i32
    return %c0_i32, %c0_i32_0 : i32, i32
  }
  func.func @transform_5(%arg0: i32) -> (i32, i32) {
    %c0_i32 = arith.constant 0 : i32
    %c0_i32_0 = arith.constant 0 : i32
    %c0_i32_1 = arith.constant 0 : i32
    return %c0_i32, %c0_i32_0 : i32, i32
  }
  func.func @transform_6(%arg0: i32) -> (i32, i32) {
    %c0_i32 = arith.constant 0 : i32
    %c0_i32_0 = arith.constant 0 : i32
    %c0_i32_1 = arith.constant 0 : i32
    return %c0_i32, %c0_i32_0 : i32, i32
  }
  func.func @transform_7(%arg0: i32) -> (i32, i32) {
    %c0_i32 = arith.constant 0 : i32
    %c0_i32_0 = arith.constant 0 : i32
    %c0_i32_1 = arith.constant 0 : i32
    return %c0_i32, %c0_i32_0 : i32, i32
  }
  func.func @transform_8(%arg0: i32) -> (i32, i32, i32, i32) {
    %c0_i32 = arith.constant 0 : i32
    %c0_i32_0 = arith.constant 0 : i32
    %c0_i32_1 = arith.constant 0 : i32
    %c0_i32_2 = arith.constant 0 : i32
    return %arg0, %c0_i32, %c0_i32_0, %c0_i32_1 : i32, i32, i32, i32
  }
}

</mosaic_0001>

<llo_original>
// kernel: tpu_custom_call.1
$region0: #{tpu_custom_call.1}
  #allocation0 [shape = 'u32[]', space=smem, size = 0x4, offset = 0x4, fixed_abs, tag = 'smem constant byte address 0x4 - core index']
  #allocation1 [shape = 'u32[72,128]{1,0:T(1,128)}', space=vmem, size = 0x9000, scoped, tag = 'internal scratch']
  #allocation2 [shape = 'f32[1,18,18,4]{3,2,1,0:T(8,128)}', space=vmem, size = 0x36000, scoped, tag = 'scratch operand']
  #allocation3 [shape = 'bf16[1,16,16,36]{3,2,1,0:T(8,128)(2,1)}', space=vmem, size = 0x10000, scoped, tag = 'scratch operand']
  #allocation4 [shape = 'f32[1,18,18,8]{3,2,1,0:T(8,128)}', space=vmem, size = 0x36000, scoped, tag = 'scratch operand']
  #allocation5 [shape = 'bf16[1,16,16,72]{3,2,1,0:T(8,128)(2,1)}', space=vmem, size = 0x10000, scoped, tag = 'scratch operand']
  %s0 = inlined_call_operand.vmem [shape: f32[2,16,16,4], index: 0, kind: input, shape index: {}]
  %s1 = inlined_call_operand.vmem [shape: f32[1,4], index: 1, kind: input, shape index: {}]
  %s2 = inlined_call_operand.vmem [shape: f32[1,4], index: 2, kind: input, shape index: {}]
  %s3 = inlined_call_operand.vmem [shape: bf16[36,8], index: 3, kind: input, shape index: {}]
  %s4 = inlined_call_operand.vmem [shape: f32[1,8], index: 4, kind: input, shape index: {}]
  %s5 = inlined_call_operand.vmem [shape: f32[1,8], index: 5, kind: input, shape index: {}]
  %s6 = inlined_call_operand.vmem [shape: bf16[72,8], index: 6, kind: input, shape index: {}]
  %s7 = inlined_call_operand.vmem [shape: f32[1,8], index: 7, kind: input, shape index: {}]
  %s8 = inlined_call_operand.vmem [shape: f32[2,16,16,8], index: 8, kind: output, shape index: {}]
  %s9 = sld [smem:[#allocation0]]
  $region65: #{tpu_custom_call.1} parent=0
    _
  %s11 = ssub.s32 1, %s9
  %s12 = scalar_select 0, %s11, %s9
  loop: start=0, step=1, limit=4
  $region2: #{tpu_custom_call.1} parent=0 // loop_pre_header
    _
  $region3: #{tpu_custom_call.1} parent=0 // loop_header
    %s14 = sphi 0, %s18
    %p15 = scmp.ge.s32.totalorder %s14, 4
    %s24 = sphi 0, %s26
    %s27 = sphi 0, %s24
    %s28 = sphi 0, %s27
    %s44 = sphi 0, %s28
    %s48 = sphi 0, %s48
    %s50 = sphi 0, %s48
    %s51 = sphi 0, %s50
    %s65 = sphi 0, %s51
    %s69 = sphi 0, %s69
    %s71 = sphi 0, %s69
    %s72 = sphi 0, %s71
    %s86 = sphi 0, %s72
    %s90 = sphi 0, %s90
    %s92 = sphi 0, %s90
    %s93 = sphi 0, %s92
    %s107 = sphi 0, %s93
    %s111 = sphi 0, %s111
    %s113 = sphi 0, %s111
    %s114 = sphi 0, %s113
    %s128 = sphi 0, %s114
    %s132 = sphi 0, %s132
    %s134 = sphi 0, %s132
    %s135 = sphi 0, %s134
    %s149 = sphi 0, %s135
    %s153 = sphi 0, %s153
    %s155 = sphi 0, %s153
    %s156 = sphi 0, %s155
    %s170 = sphi 0, %s156
    %s174 = sphi 0, %s174
    %s176 = sphi 0, %s174
    %s177 = sphi 0, %s176
    %s191 = sphi 0, %s177
    %s197 = sphi 0, %s199
    %s200 = sphi 0, %s197
    %s201 = sphi 0, %s200
    %s217 = sphi 0, %s201
  $region4: #{tpu_custom_call.1} parent=0 // loop_header_branch
    %17 = sbr.rel (%p15) target = $region8
  $region5: #{tpu_custom_call.1} parent=0 // loop_body
    %s19 = ssub.s32 %s14, 1
    %s20 = ssub.s32 %s14, 2
    %s21 = sadd.s32 %s14, 1
    %s22 = ssub.s32 %s14, %s21
    %p23 = scmp.eq.s32.totalorder %s22, 0
    %s25 = sadd.s32 %s24, 1
    %s26 = scalar_select %p23, %s24, %s25
    %p29 = pneg %p23
    %p30 = scmp.eq.s32.totalorder %s14, 1
    %p31 = por %p29, %p30
    %p32 = scmp.ne.s32.totalorder %s24, %s27
    %p33 = scmp.eq.s32.totalorder %s14, 0
    %p34 = por %p32, %p33
    %p35 = scmp.ne.s32.totalorder %s24, %s27
    %p36 = scmp.eq.s32.totalorder %s19, 1
    %p37 = por %p35, %p36
    %p38 = scmp.ne.s32.totalorder %s27, %s28
    %p39 = scmp.eq.s32.totalorder %s19, 0
    %p40 = por %p38, %p39
    %p41 = scmp.ne.s32.totalorder %s27, %s28
    %p42 = scmp.eq.s32.totalorder %s20, 1
    %p43 = por %p41, %p42
    %p45 = scmp.ne.s32.totalorder %s28, %s44
    %p46 = scmp.eq.s32.totalorder %s20, 0
    %p47 = por %p45, %p46
    %s49 = sadd.s32 %s48, 1
    %p52 = scmp.eq.s32.totalorder %s14, 1
    %p53 = scmp.ne.s32.totalorder %s48, %s50
    %p54 = scmp.eq.s32.totalorder %s14, 0
    %p55 = por %p53, %p54
    %p56 = scmp.ne.s32.totalorder %s48, %s50
    %p57 = scmp.eq.s32.totalorder %s19, 1
    %p58 = por %p56, %p57
    %p59 = scmp.ne.s32.totalorder %s50, %s51
    %p60 = scmp.eq.s32.totalorder %s19, 0
    %p61 = por %p59, %p60
    %p62 = scmp.ne.s32.totalorder %s50, %s51
    %p63 = scmp.eq.s32.totalorder %s20, 1
    %p64 = por %p62, %p63
    %p66 = scmp.ne.s32.totalorder %s51, %s65
    %p67 = scmp.eq.s32.totalorder %s20, 0
    %p68 = por %p66, %p67
    %s70 = sadd.s32 %s69, 1
    %p73 = scmp.eq.s32.totalorder %s14, 1
    %p74 = scmp.ne.s32.totalorder %s69, %s71
    %p75 = scmp.eq.s32.totalorder %s14, 0
    %p76 = por %p74, %p75
    %p77 = scmp.ne.s32.totalorder %s69, %s71
    %p78 = scmp.eq.s32.totalorder %s19, 1
    %p79 = por %p77, %p78
    %p80 = scmp.ne.s32.totalorder %s71, %s72
    %p81 = scmp.eq.s32.totalorder %s19, 0
    %p82 = por %p80, %p81
    %p83 = scmp.ne.s32.totalorder %s71, %s72
    %p84 = scmp.eq.s32.totalorder %s20, 1
    %p85 = por %p83, %p84
    %p87 = scmp.ne.s32.totalorder %s72, %s86
    %p88 = scmp.eq.s32.totalorder %s20, 0
    %p89 = por %p87, %p88
    %s91 = sadd.s32 %s90, 1
    %p94 = scmp.eq.s32.totalorder %s14, 1
    %p95 = scmp.ne.s32.totalorder %s90, %s92
    %p96 = scmp.eq.s32.totalorder %s14, 0
    %p97 = por %p95, %p96
    %p98 = scmp.ne.s32.totalorder %s90, %s92
    %p99 = scmp.eq.s32.totalorder %s19, 1
    %p100 = por %p98, %p99
    %p101 = scmp.ne.s32.totalorder %s92, %s93
    %p102 = scmp.eq.s32.totalorder %s19, 0
    %p103 = por %p101, %p102
    %p104 = scmp.ne.s32.totalorder %s92, %s93
    %p105 = scmp.eq.s32.totalorder %s20, 1
    %p106 = por %p104, %p105
    %p108 = scmp.ne.s32.totalorder %s93, %s107
    %p109 = scmp.eq.s32.totalorder %s20, 0
    %p110 = por %p108, %p109
    %s112 = sadd.s32 %s111, 1
    %p115 = scmp.eq.s32.totalorder %s14, 1
    %p116 = scmp.ne.s32.totalorder %s111, %s113
    %p117 = scmp.eq.s32.totalorder %s14, 0
    %p118 = por %p116, %p117
    %p119 = scmp.ne.s32.totalorder %s111, %s113
    %p120 = scmp.eq.s32.totalorder %s19, 1
    %p121 = por %p119, %p120
    %p122 = scmp.ne.s32.totalorder %s113, %s114
    %p123 = scmp.eq.s32.totalorder %s19, 0
    %p124 = por %p122, %p123
    %p125 = scmp.ne.s32.totalorder %s113, %s114
    %p126 = scmp.eq.s32.totalorder %s20, 1
    %p127 = por %p125, %p126
    %p129 = scmp.ne.s32.totalorder %s114, %s128
    %p130 = scmp.eq.s32.totalorder %s20, 0
    %p131 = por %p129, %p130
    %s133 = sadd.s32 %s132, 1
    %p136 = scmp.eq.s32.totalorder %s14, 1
    %p137 = scmp.ne.s32.totalorder %s132, %s134
    %p138 = scmp.eq.s32.totalorder %s14, 0
    %p139 = por %p137, %p138
    %p140 = scmp.ne.s32.totalorder %s132, %s134
    %p141 = scmp.eq.s32.totalorder %s19, 1
    %p142 = por %p140, %p141
    %p143 = scmp.ne.s32.totalorder %s134, %s135
    %p144 = scmp.eq.s32.totalorder %s19, 0
    %p145 = por %p143, %p144
    %p146 = scmp.ne.s32.totalorder %s134, %s135
    %p147 = scmp.eq.s32.totalorder %s20, 1
    %p148 = por %p146, %p147
    %p150 = scmp.ne.s32.totalorder %s135, %s149
    %p151 = scmp.eq.s32.totalorder %s20, 0
    %p152 = por %p150, %p151
    %s154 = sadd.s32 %s153, 1
    %p157 = scmp.eq.s32.totalorder %s14, 1
    %p158 = scmp.ne.s32.totalorder %s153, %s155
    %p159 = scmp.eq.s32.totalorder %s14, 0
    %p160 = por %p158, %p159
    %p161 = scmp.ne.s32.totalorder %s153, %s155
    %p162 = scmp.eq.s32.totalorder %s19, 1
    %p163 = por %p161, %p162
    %p164 = scmp.ne.s32.totalorder %s155, %s156
    %p165 = scmp.eq.s32.totalorder %s19, 0
    %p166 = por %p164, %p165
    %p167 = scmp.ne.s32.totalorder %s155, %s156
    %p168 = scmp.eq.s32.totalorder %s20, 1
    %p169 = por %p167, %p168
    %p171 = scmp.ne.s32.totalorder %s156, %s170
    %p172 = scmp.eq.s32.totalorder %s20, 0
    %p173 = por %p171, %p172
    %s175 = sadd.s32 %s174, 1
    %p178 = scmp.eq.s32.totalorder %s14, 1
    %p179 = scmp.ne.s32.totalorder %s174, %s176
    %p180 = scmp.eq.s32.totalorder %s14, 0
    %p181 = por %p179, %p180
    %p182 = scmp.ne.s32.totalorder %s174, %s176
    %p183 = scmp.eq.s32.totalorder %s19, 1
    %p184 = por %p182, %p183
    %p185 = scmp.ne.s32.totalorder %s176, %s177
    %p186 = scmp.eq.s32.totalorder %s19, 0
    %p187 = por %p185, %p186
    %p188 = scmp.ne.s32.totalorder %s176, %s177
    %p189 = scmp.eq.s32.totalorder %s20, 1
    %p190 = por %p188, %p189
    %p192 = scmp.ne.s32.totalorder %s177, %s191
    %p193 = scmp.eq.s32.totalorder %s20, 0
    %p194 = por %p192, %p193
    %s195 = ssub.s32 %s14, %s21
    %p196 = scmp.eq.s32.totalorder %s195, 0
    %s198 = sadd.s32 %s197, 1
    %s199 = scalar_select %p196, %s197, %s198
    %p202 = pneg %p196
    %p203 = scmp.eq.s32.totalorder %s14, 1
    %p204 = por %p202, %p203
    %p205 = scmp.ne.s32.totalorder %s197, %s200
    %p206 = scmp.eq.s32.totalorder %s14, 0
    %p207 = por %p205, %p206
    %p208 = scmp.ne.s32.totalorder %s197, %s200
    %p209 = scmp.eq.s32.totalorder %s19, 1
    %p210 = por %p208, %p209
    %p211 = scmp.ne.s32.totalorder %s200, %s201
    %p212 = scmp.eq.s32.totalorder %s19, 0
    %p213 = por %p211, %p212
    %p214 = scmp.ne.s32.totalorder %s200, %s201
    %p215 = scmp.eq.s32.totalorder %s20, 1
    %p216 = por %p214, %p215
    %p218 = scmp.ne.s32.totalorder %s201, %s217
    %p219 = scmp.eq.s32.totalorder %s20, 0
    %p220 = por %p218, %p219
    %p221 = scmp.le.s32.totalorder 1, %s14
    %p222 = scmp.lt.s32.totalorder %s14, 3
    %p223 = pnand %p221, %p222
    %p224 = pneg %p223
    // Predicated region
    $region9: #{tpu_custom_call.1} parent=5 // pred_check
      _
    $region10: #{tpu_custom_call.1} parent=5 // pred_check_branch
      %226 = sbr.rel (%p223) target = $region12
    $region11: #{tpu_custom_call.1} parent=5 // pred_region
      %s227 = ssub.s32 %s14, 1
      // Predicated region
      $region13: #{tpu_custom_call.1} parent=11 // pred_check
        %p228 = pneg %p61
      $region14: #{tpu_custom_call.1} parent=11 // pred_check_branch
        %230 = sbr.rel (%p228) target = $region16
      $region15: #{tpu_custom_call.1} parent=11 // pred_region
        _
      $region16: #{tpu_custom_call.1} parent=11 // pred_fallthru
        _
      // Predicated region
      $region17: #{tpu_custom_call.1} parent=11 // pred_check
        %p231 = pneg %p82
      $region18: #{tpu_custom_call.1} parent=11 // pred_check_branch
        %233 = sbr.rel (%p231) target = $region20
      $region19: #{tpu_custom_call.1} parent=11 // pred_region
        _
      $region20: #{tpu_custom_call.1} parent=11 // pred_fallthru
        _
      // Predicated region
      $region21: #{tpu_custom_call.1} parent=11 // pred_check
        %p234 = pneg %p103
      $region22: #{tpu_custom_call.1} parent=11 // pred_check_branch
        %236 = sbr.rel (%p234) target = $region24
      $region23: #{tpu_custom_call.1} parent=11 // pred_region
        _
      $region24: #{tpu_custom_call.1} parent=11 // pred_fallthru
        _
      // Predicated region
      $region25: #{tpu_custom_call.1} parent=11 // pred_check
        %p237 = pneg %p124
      $region26: #{tpu_custom_call.1} parent=11 // pred_check_branch
        %239 = sbr.rel (%p237) target = $region28
      $region27: #{tpu_custom_call.1} parent=11 // pred_region
        _
      $region28: #{tpu_custom_call.1} parent=11 // pred_fallthru
        _
      // Predicated region
      $region29: #{tpu_custom_call.1} parent=11 // pred_check
        %p240 = pneg %p145
      $region30: #{tpu_custom_call.1} parent=11 // pred_check_branch
        %242 = sbr.rel (%p240) target = $region32
      $region31: #{tpu_custom_call.1} parent=11 // pred_region
        _
      $region32: #{tpu_custom_call.1} parent=11 // pred_fallthru
        _
      // Predicated region
      $region33: #{tpu_custom_call.1} parent=11 // pred_check
        %p243 = pneg %p166
      $region34: #{tpu_custom_call.1} parent=11 // pred_check_branch
        %245 = sbr.rel (%p243) target = $region36
      $region35: #{tpu_custom_call.1} parent=11 // pred_region
        _
      $region36: #{tpu_custom_call.1} parent=11 // pred_fallthru
        _
      // Predicated region
      $region37: #{tpu_custom_call.1} parent=11 // pred_check
        %p246 = pneg %p187
      $region38: #{tpu_custom_call.1} parent=11 // pred_check_branch
        %248 = sbr.rel (%p246) target = $region40
      $region39: #{tpu_custom_call.1} parent=11 // pred_region
        _
      $region40: #{tpu_custom_call.1} parent=11 // pred_fallthru
        _
    $region12: #{tpu_custom_call.1} parent=5 // pred_fallthru
      _
    %p249 = scmp.lt.s32.totalorder %s14, 2
    // Predicated region
    $region41: #{tpu_custom_call.1} parent=5 // pred_check
      %p250 = pneg %p249
    $region42: #{tpu_custom_call.1} parent=5 // pred_check_branch
      %252 = sbr.rel (%p250) target = $region44
    $region43: #{tpu_custom_call.1} parent=5 // pred_region
      // Predicated region
      $region45: #{tpu_custom_call.1} parent=43 // pred_check
        %p253 = pneg %p34
      $region46: #{tpu_custom_call.1} parent=43 // pred_check_branch
        %255 = sbr.rel (%p253) target = $region48
      $region47: #{tpu_custom_call.1} parent=43 // pred_region
        %p256 = scmp.lt.s32.totalorder %s14, 1
        %s257 = scalar_select %p256, %s14, 1
        %s258 = smul.addr %s257, 32
        %s259 = smul.addr %s258, 8
        %s260 = scalar_lea.vmem %s0, %s259
      $region48: #{tpu_custom_call.1} parent=43 // pred_fallthru
        _
    $region44: #{tpu_custom_call.1} parent=5 // pred_fallthru
      _
    %p261 = scmp.le.s32.totalorder 1, %s14
    %p262 = scmp.lt.s32.totalorder %s14, 3
    %p263 = pnand %p261, %p262
    %p264 = pneg %p263
    // Predicated region
    $region49: #{tpu_custom_call.1} parent=5 // pred_check
      _
    $region50: #{tpu_custom_call.1} parent=5 // pred_check_branch
      %266 = sbr.rel (%p263) target = $region52
    $region51: #{tpu_custom_call.1} parent=5 // pred_region
      %s267 = ssub.s32 %s14, 1
      %p268 = scmp.lt.s32.totalorder %s19, 1
      %s269 = scalar_select %p268, %s19, 1
      %s270 = smul.addr %s269, 32
      %s271 = smul.addr %s270, 8
      %s272 = scalar_lea.vmem %s0, %s271
      %p273 = pneg %p40
      %p274 = pneg %p37
      %p275 = pneg %p61
      %p276 = pneg %p58
      %p277 = pneg %p82
      %p278 = pneg %p79
      %p279 = pneg %p103
      %p280 = pneg %p100
      %p281 = pneg %p124
      %p282 = pneg %p121
      %p283 = pneg %p145
      %p284 = pneg %p142
      %p285 = pneg %p166
      %p286 = pneg %p163
      %p287 = pneg %p187
      %p288 = pneg %p184
      %p289 = pneg %p213
      %p290 = pneg %p210
      %p291 = scmp.lt.s32.totalorder %s19, 1
      %s292 = scalar_select %p291, %s19, 1
      %s293 = smul.addr %s292, 32
      %s294 = smul.addr %s293, 8
      %s295 = scalar_lea.vmem %s8, %s294
      %p296 = scmp.lt.s32.totalorder %s19, 1
      %s297 = scalar_select %p296, %s19, 1
      %s298 = smul.addr %s297, 32
      %s299 = smul.addr %s298, 8
      %s300 = scalar_lea.vmem %s0, %s299
      %p301 = scmp.lt.s32.totalorder %s19, 1
      %s302 = scalar_select %p301, %s19, 1
      %s303 = smul.addr %s302, 32
      %s304 = smul.addr %s303, 8
      %s305 = scalar_lea.vmem %s8, %s304
      %vm307 = vcmask 31744
      %308 = vst.msk [vmem:[#allocation2] sm:$0xff] %vm307, 0.0
      %309 = vst.msk [vmem:[#allocation2 + $0x8] sm:$0xff] %vm307, 0.0
      %vm310 = vcmask 25600
      %311 = vst.msk [vmem:[#allocation2 + $0x10] sm:$0x3] %vm310, 0.0
      %s312 = scalar_lea.vmem [#allocation2], 408
      %313 = vst.msk [vmem:[%s312] sm:$0xff] %vm307, 0.0
      %314 = vst.msk [vmem:[%s312 + $0x8] sm:$0xff] %vm307, 0.0
      %315 = vst.msk [vmem:[%s312 + $0x10] sm:$0x3] %vm310, 0.0
      %vm316 = vcmask 24576
      %317 = vst.msk [vmem:[#allocation2] sm:$0x1] %vm316, 0.0
      %318 = vst.msk [vmem:[#allocation2 + $0x18] sm:$0x1] %vm316, 0.0
      %319 = vst.msk [vmem:[#allocation2 + $0x30] sm:$0x1] %vm316, 0.0
      %320 = vst.msk [vmem:[#allocation2 + $0x48] sm:$0x1] %vm316, 0.0
      %321 = vst.msk [vmem:[#allocation2 + $0x60] sm:$0x1] %vm316, 0.0
      %322 = vst.msk [vmem:[#allocation2 + $0x78] sm:$0x1] %vm316, 0.0
      %323 = vst.msk [vmem:[#allocation2 + $0x90] sm:$0x1] %vm316, 0.0
      %324 = vst.msk [vmem:[#allocation2 + $0xa8] sm:$0x1] %vm316, 0.0
      %325 = vst.msk [vmem:[#allocation2 + $0xc0] sm:$0x1] %vm316, 0.0
      %326 = vst.msk [vmem:[#allocation2 + $0xd8] sm:$0x1] %vm316, 0.0
      %327 = vst.msk [vmem:[#allocation2 + $0xf0] sm:$0x1] %vm316, 0.0
      %328 = vst.msk [vmem:[#allocation2 + $0x108] sm:$0x1] %vm316, 0.0
      %329 = vst.msk [vmem:[#allocation2 + $0x120] sm:$0x1] %vm316, 0.0
      %330 = vst.msk [vmem:[#allocation2 + $0x138] sm:$0x1] %vm316, 0.0
      %331 = vst.msk [vmem:[#allocation2 + $0x150] sm:$0x1] %vm316, 0.0
      %332 = vst.msk [vmem:[#allocation2 + $0x168] sm:$0x1] %vm316, 0.0
      %333 = vst.msk [vmem:[#allocation2 + $0x180] sm:$0x1] %vm316, 0.0
      %334 = vst.msk [vmem:[#allocation2 + $0x198] sm:$0x1] %vm316, 0.0
      %335 = vst.msk [vmem:[#allocation2 + $0x11] sm:$0x1] %vm316, 0.0
      %336 = vst.msk [vmem:[#allocation2 + $0x29] sm:$0x1] %vm316, 0.0
      %337 = vst.msk [vmem:[#allocation2 + $0x41] sm:$0x1] %vm316, 0.0
      %338 = vst.msk [vmem:[#allocation2 + $0x59] sm:$0x1] %vm316, 0.0
      %339 = vst.msk [vmem:[#allocation2 + $0x71] sm:$0x1] %vm316, 0.0
      %340 = vst.msk [vmem:[#allocation2 + $0x89] sm:$0x1] %vm316, 0.0
      %341 = vst.msk [vmem:[#allocation2 + $0xa1] sm:$0x1] %vm316, 0.0
      %342 = vst.msk [vmem:[#allocation2 + $0xb9] sm:$0x1] %vm316, 0.0
      %343 = vst.msk [vmem:[#allocation2 + $0xd1] sm:$0x1] %vm316, 0.0
      %344 = vst.msk [vmem:[#allocation2 + $0xe9] sm:$0x1] %vm316, 0.0
      %345 = vst.msk [vmem:[#allocation2 + $0x101] sm:$0x1] %vm316, 0.0
      %346 = vst.msk [vmem:[#allocation2 + $0x119] sm:$0x1] %vm316, 0.0
      %347 = vst.msk [vmem:[#allocation2 + $0x131] sm:$0x1] %vm316, 0.0
      %348 = vst.msk [vmem:[#allocation2 + $0x149] sm:$0x1] %vm316, 0.0
      %349 = vst.msk [vmem:[#allocation2 + $0x161] sm:$0x1] %vm316, 0.0
      %350 = vst.msk [vmem:[#allocation2 + $0x179] sm:$0x1] %vm316, 0.0
      %351 = vst.msk [vmem:[#allocation2 + $0x191] sm:$0x1] %vm316, 0.0
      %352 = vst.msk [vmem:[#allocation2 + $0x1a9] sm:$0x1] %vm316, 0.0
      %vm353 = vcmask 64512
      %354 = vst.msk [vmem:[#allocation4] sm:$0xff] %vm353, 0.0
      %355 = vst.msk [vmem:[#allocation4 + $0x8] sm:$0xff] %vm353, 0.0
      %vm356 = vcmask 58368
      %357 = vst.msk [vmem:[#allocation4 + $0x10] sm:$0x3] %vm356, 0.0
      %s358 = scalar_lea.vmem [#allocation4], 408
      %359 = vst.msk [vmem:[%s358] sm:$0xff] %vm353, 0.0
      %360 = vst.msk [vmem:[%s358 + $0x8] sm:$0xff] %vm353, 0.0
      %361 = vst.msk [vmem:[%s358 + $0x10] sm:$0x3] %vm356, 0.0
      %vm362 = vcmask 57344
      %363 = vst.msk [vmem:[#allocation4] sm:$0x1] %vm362, 0.0
      %364 = vst.msk [vmem:[#allocation4 + $0x18] sm:$0x1] %vm362, 0.0
      %365 = vst.msk [vmem:[#allocation4 + $0x30] sm:$0x1] %vm362, 0.0
      %366 = vst.msk [vmem:[#allocation4 + $0x48] sm:$0x1] %vm362, 0.0
      %367 = vst.msk [vmem:[#allocation4 + $0x60] sm:$0x1] %vm362, 0.0
      %368 = vst.msk [vmem:[#allocation4 + $0x78] sm:$0x1] %vm362, 0.0
      %369 = vst.msk [vmem:[#allocation4 + $0x90] sm:$0x1] %vm362, 0.0
      %370 = vst.msk [vmem:[#allocation4 + $0xa8] sm:$0x1] %vm362, 0.0
      %371 = vst.msk [vmem:[#allocation4 + $0xc0] sm:$0x1] %vm362, 0.0
      %372 = vst.msk [vmem:[#allocation4 + $0xd8] sm:$0x1] %vm362, 0.0
      %373 = vst.msk [vmem:[#allocation4 + $0xf0] sm:$0x1] %vm362, 0.0
      %374 = vst.msk [vmem:[#allocation4 + $0x108] sm:$0x1] %vm362, 0.0
      %375 = vst.msk [vmem:[#allocation4 + $0x120] sm:$0x1] %vm362, 0.0
      %376 = vst.msk [vmem:[#allocation4 + $0x138] sm:$0x1] %vm362, 0.0
      %377 = vst.msk [vmem:[#allocation4 + $0x150] sm:$0x1] %vm362, 0.0
      %378 = vst.msk [vmem:[#allocation4 + $0x168] sm:$0x1] %vm362, 0.0
      %379 = vst.msk [vmem:[#allocation4 + $0x180] sm:$0x1] %vm362, 0.0
      %380 = vst.msk [vmem:[#allocation4 + $0x198] sm:$0x1] %vm362, 0.0
      %381 = vst.msk [vmem:[#allocation4 + $0x11] sm:$0x1] %vm362, 0.0
      %382 = vst.msk [vmem:[#allocation4 + $0x29] sm:$0x1] %vm362, 0.0
      %383 = vst.msk [vmem:[#allocation4 + $0x41] sm:$0x1] %vm362, 0.0
      %384 = vst.msk [vmem:[#allocation4 + $0x59] sm:$0x1] %vm362, 0.0
      %385 = vst.msk [vmem:[#allocation4 + $0x71] sm:$0x1] %vm362, 0.0
      %386 = vst.msk [vmem:[#allocation4 + $0x89] sm:$0x1] %vm362, 0.0
      %387 = vst.msk [vmem:[#allocation4 + $0xa1] sm:$0x1] %vm362, 0.0
      %388 = vst.msk [vmem:[#allocation4 + $0xb9] sm:$0x1] %vm362, 0.0
      %389 = vst.msk [vmem:[#allocation4 + $0xd1] sm:$0x1] %vm362, 0.0
      %390 = vst.msk [vmem:[#allocation4 + $0xe9] sm:$0x1] %vm362, 0.0
      %391 = vst.msk [vmem:[#allocation4 + $0x101] sm:$0x1] %vm362, 0.0
      %392 = vst.msk [vmem:[#allocation4 + $0x119] sm:$0x1] %vm362, 0.0
      %393 = vst.msk [vmem:[#allocation4 + $0x131] sm:$0x1] %vm362, 0.0
      %394 = vst.msk [vmem:[#allocation4 + $0x149] sm:$0x1] %vm362, 0.0
      %395 = vst.msk [vmem:[#allocation4 + $0x161] sm:$0x1] %vm362, 0.0
      %396 = vst.msk [vmem:[#allocation4 + $0x179] sm:$0x1] %vm362, 0.0
      %397 = vst.msk [vmem:[#allocation4 + $0x191] sm:$0x1] %vm362, 0.0
      %398 = vst.msk [vmem:[#allocation4 + $0x1a9] sm:$0x1] %vm362, 0.0
      %v399 = vld [vmem:[%s300] sm:$0xff]
      %v400 = vld [vmem:[%s300 + $0x8] sm:$0xff]
      %v401 = vld [vmem:[%s300 + $0x10] sm:$0xff]
      %v402 = vld [vmem:[%s300 + $0x18] sm:$0xff]
      %v403 = vld [vmem:[%s300 + $0x20] sm:$0xff]
      %v404 = vld [vmem:[%s300 + $0x28] sm:$0xff]
      %v405 = vld [vmem:[%s300 + $0x30] sm:$0xff]
      %v406 = vld [vmem:[%s300 + $0x38] sm:$0xff]
      %v407 = vld [vmem:[%s300 + $0x40] sm:$0xff]
      %v408 = vld [vmem:[%s300 + $0x48] sm:$0xff]
      %v409 = vld [vmem:[%s300 + $0x50] sm:$0xff]
      %v410 = vld [vmem:[%s300 + $0x58] sm:$0xff]
      %v411 = vld [vmem:[%s300 + $0x60] sm:$0xff]
      %v412 = vld [vmem:[%s300 + $0x68] sm:$0xff]
      %v413 = vld [vmem:[%s300 + $0x70] sm:$0xff]
      %v414 = vld [vmem:[%s300 + $0x78] sm:$0xff]
      %v415 = vld [vmem:[%s300 + $0x80] sm:$0xff]
      %v416 = vld [vmem:[%s300 + $0x88] sm:$0xff]
      %v417 = vld [vmem:[%s300 + $0x90] sm:$0xff]
      %v418 = vld [vmem:[%s300 + $0x98] sm:$0xff]
      %v419 = vld [vmem:[%s300 + $0xa0] sm:$0xff]
      %v420 = vld [vmem:[%s300 + $0xa8] sm:$0xff]
      %v421 = vld [vmem:[%s300 + $0xb0] sm:$0xff]
      %v422 = vld [vmem:[%s300 + $0xb8] sm:$0xff]
      %v423 = vld [vmem:[%s300 + $0xc0] sm:$0xff]
      %v424 = vld [vmem:[%s300 + $0xc8] sm:$0xff]
      %v425 = vld [vmem:[%s300 + $0xd0] sm:$0xff]
      %v426 = vld [vmem:[%s300 + $0xd8] sm:$0xff]
      %v427 = vld [vmem:[%s300 + $0xe0] sm:$0xff]
      %v428 = vld [vmem:[%s300 + $0xe8] sm:$0xff]
      %v429 = vld [vmem:[%s300 + $0xf0] sm:$0xff]
      %v430 = vld [vmem:[%s300 + $0xf8] sm:$0xff]
      %v431 = vld [vmem:[%s1] sm:$0x1]
      %v433 = vperm.slane %v431, 0
      %v435 = vmul.f32 %v399, %v433
      %v436 = vmul.f32 %v400, %v433
      %v437 = vmul.f32 %v401, %v433
      %v438 = vmul.f32 %v402, %v433
      %v439 = vmul.f32 %v403, %v433
      %v440 = vmul.f32 %v404, %v433
      %v441 = vmul.f32 %v405, %v433
      %v442 = vmul.f32 %v406, %v433
      %v443 = vmul.f32 %v407, %v433
      %v444 = vmul.f32 %v408, %v433
      %v445 = vmul.f32 %v409, %v433
      %v446 = vmul.f32 %v410, %v433
      %v447 = vmul.f32 %v411, %v433
      %v448 = vmul.f32 %v412, %v433
      %v449 = vmul.f32 %v413, %v433
      %v450 = vmul.f32 %v414, %v433
      %v451 = vmul.f32 %v415, %v433
      %v452 = vmul.f32 %v416, %v433
      %v453 = vmul.f32 %v417, %v433
      %v454 = vmul.f32 %v418, %v433
      %v455 = vmul.f32 %v419, %v433
      %v456 = vmul.f32 %v420, %v433
      %v457 = vmul.f32 %v421, %v433
      %v458 = vmul.f32 %v422, %v433
      %v459 = vmul.f32 %v423, %v433
      %v460 = vmul.f32 %v424, %v433
      %v461 = vmul.f32 %v425, %v433
      %v462 = vmul.f32 %v426, %v433
      %v463 = vmul.f32 %v427, %v433
      %v464 = vmul.f32 %v428, %v433
      %v465 = vmul.f32 %v429, %v433
      %v466 = vmul.f32 %v430, %v433
      %v467 = vld [vmem:[%s2] sm:$0x1]
      %v469 = vperm.slane %v467, 0
      %v471 = vadd.f32 %v435, %v469
      %v472 = vadd.f32 %v436, %v469
      %v473 = vadd.f32 %v437, %v469
      %v474 = vadd.f32 %v438, %v469
      %v475 = vadd.f32 %v439, %v469
      %v476 = vadd.f32 %v440, %v469
      %v477 = vadd.f32 %v441, %v469
      %v478 = vadd.f32 %v442, %v469
      %v479 = vadd.f32 %v443, %v469
      %v480 = vadd.f32 %v444, %v469
      %v481 = vadd.f32 %v445, %v469
      %v482 = vadd.f32 %v446, %v469
      %v483 = vadd.f32 %v447, %v469
      %v484 = vadd.f32 %v448, %v469
      %v485 = vadd.f32 %v449, %v469
      %v486 = vadd.f32 %v450, %v469
      %v487 = vadd.f32 %v451, %v469
      %v488 = vadd.f32 %v452, %v469
      %v489 = vadd.f32 %v453, %v469
      %v490 = vadd.f32 %v454, %v469
      %v491 = vadd.f32 %v455, %v469
      %v492 = vadd.f32 %v456, %v469
      %v493 = vadd.f32 %v457, %v469
      %v494 = vadd.f32 %v458, %v469
      %v495 = vadd.f32 %v459, %v469
      %v496 = vadd.f32 %v460, %v469
      %v497 = vadd.f32 %v461, %v469
      %v498 = vadd.f32 %v462, %v469
      %v499 = vadd.f32 %v463, %v469
      %v500 = vadd.f32 %v464, %v469
      %v501 = vadd.f32 %v465, %v469
      %v502 = vadd.f32 %v466, %v469
      %v503 = vmax.f32 %v471, 0.0
      %v504 = vmax.f32 %v472, 0.0
      %v505 = vmax.f32 %v473, 0.0
      %v506 = vmax.f32 %v474, 0.0
      %v507 = vmax.f32 %v475, 0.0
      %v508 = vmax.f32 %v476, 0.0
      %v509 = vmax.f32 %v477, 0.0
      %v510 = vmax.f32 %v478, 0.0
      %v511 = vmax.f32 %v479, 0.0
      %v512 = vmax.f32 %v480, 0.0
      %v513 = vmax.f32 %v481, 0.0
      %v514 = vmax.f32 %v482, 0.0
      %v515 = vmax.f32 %v483, 0.0
      %v516 = vmax.f32 %v484, 0.0
      %v517 = vmax.f32 %v485, 0.0
      %v518 = vmax.f32 %v486, 0.0
      %v519 = vmax.f32 %v487, 0.0
      %v520 = vmax.f32 %v488, 0.0
      %v521 = vmax.f32 %v489, 0.0
      %v522 = vmax.f32 %v490, 0.0
      %v523 = vmax.f32 %v491, 0.0
      %v524 = vmax.f32 %v492, 0.0
      %v525 = vmax.f32 %v493, 0.0
      %v526 = vmax.f32 %v494, 0.0
      %v527 = vmax.f32 %v495, 0.0
      %v528 = vmax.f32 %v496, 0.0
      %v529 = vmax.f32 %v497, 0.0
      %v530 = vmax.f32 %v498, 0.0
      %v531 = vmax.f32 %v499, 0.0
      %v532 = vmax.f32 %v500, 0.0
      %v533 = vmax.f32 %v501, 0.0
      %v534 = vmax.f32 %v502, 0.0
      %s535 = scalar_lea.vmem [#allocation2], 24
      %536 = vst.msk [vmem:[%s535 + $0x1] sm:$0xff] %vm307, %v503
      %537 = vst.msk [vmem:[%s535 + $0x9] sm:$0xff] %vm307, %v504
      %538 = vst.msk [vmem:[%s535 + $0x19] sm:$0xff] %vm307, %v505
      %539 = vst.msk [vmem:[%s535 + $0x21] sm:$0xff] %vm307, %v506
      %540 = vst.msk [vmem:[%s535 + $0x31] sm:$0xff] %vm307, %v507
      %541 = vst.msk [vmem:[%s535 + $0x39] sm:$0xff] %vm307, %v508
      %542 = vst.msk [vmem:[%s535 + $0x49] sm:$0xff] %vm307, %v509
      %543 = vst.msk [vmem:[%s535 + $0x51] sm:$0xff] %vm307, %v510
      %544 = vst.msk [vmem:[%s535 + $0x61] sm:$0xff] %vm307, %v511
      %545 = vst.msk [vmem:[%s535 + $0x69] sm:$0xff] %vm307, %v512
      %546 = vst.msk [vmem:[%s535 + $0x79] sm:$0xff] %vm307, %v513
      %547 = vst.msk [vmem:[%s535 + $0x81] sm:$0xff] %vm307, %v514
      %548 = vst.msk [vmem:[%s535 + $0x91] sm:$0xff] %vm307, %v515
      %549 = vst.msk [vmem:[%s535 + $0x99] sm:$0xff] %vm307, %v516
      %550 = vst.msk [vmem:[%s535 + $0xa9] sm:$0xff] %vm307, %v517
      %551 = vst.msk [vmem:[%s535 + $0xb1] sm:$0xff] %vm307, %v518
      %552 = vst.msk [vmem:[%s535 + $0xc1] sm:$0xff] %vm307, %v519
      %553 = vst.msk [vmem:[%s535 + $0xc9] sm:$0xff] %vm307, %v520
      %554 = vst.msk [vmem:[%s535 + $0xd9] sm:$0xff] %vm307, %v521
      %555 = vst.msk [vmem:[%s535 + $0xe1] sm:$0xff] %vm307, %v522
      %556 = vst.msk [vmem:[%s535 + $0xf1] sm:$0xff] %vm307, %v523
      %557 = vst.msk [vmem:[%s535 + $0xf9] sm:$0xff] %vm307, %v524
      %558 = vst.msk [vmem:[%s535 + $0x109] sm:$0xff] %vm307, %v525
      %559 = vst.msk [vmem:[%s535 + $0x111] sm:$0xff] %vm307, %v526
      %560 = vst.msk [vmem:[%s535 + $0x121] sm:$0xff] %vm307, %v527
      %561 = vst.msk [vmem:[%s535 + $0x129] sm:$0xff] %vm307, %v528
      %562 = vst.msk [vmem:[%s535 + $0x139] sm:$0xff] %vm307, %v529
      %563 = vst.msk [vmem:[%s535 + $0x141] sm:$0xff] %vm307, %v530
      %564 = vst.msk [vmem:[%s535 + $0x151] sm:$0xff] %vm307, %v531
      %565 = vst.msk [vmem:[%s535 + $0x159] sm:$0xff] %vm307, %v532
      %566 = vst.msk [vmem:[%s535 + $0x169] sm:$0xff] %vm307, %v533
      %567 = vst.msk [vmem:[%s535 + $0x171] sm:$0xff] %vm307, %v534
      %v568 = vld [vmem:[#allocation2] sm:$0xff]
      %v569 = vld [vmem:[#allocation2 + $0x8] sm:$0xff]
      %v570 = vld [vmem:[#allocation2 + $0x18] sm:$0xff]
      %v571 = vld [vmem:[#allocation2 + $0x20] sm:$0xff]
      %v572 = vld [vmem:[#allocation2 + $0x30] sm:$0xff]
      %v573 = vld [vmem:[#allocation2 + $0x38] sm:$0xff]
      %v574 = vld [vmem:[#allocation2 + $0x48] sm:$0xff]
      %v575 = vld [vmem:[#allocation2 + $0x50] sm:$0xff]
      %v576 = vld [vmem:[#allocation2 + $0x60] sm:$0xff]
      %v577 = vld [vmem:[#allocation2 + $0x68] sm:$0xff]
      %v578 = vld [vmem:[#allocation2 + $0x78] sm:$0xff]
      %v579 = vld [vmem:[#allocation2 + $0x80] sm:$0xff]
      %v580 = vld [vmem:[#allocation2 + $0x90] sm:$0xff]
      %v581 = vld [vmem:[#allocation2 + $0x98] sm:$0xff]
      %v582 = vld [vmem:[#allocation2 + $0xa8] sm:$0xff]
      %v583 = vld [vmem:[#allocation2 + $0xb0] sm:$0xff]
      %v584 = vld [vmem:[#allocation2 + $0xc0] sm:$0xff]
      %v585 = vld [vmem:[#allocation2 + $0xc8] sm:$0xff]
      %v586 = vld [vmem:[#allocation2 + $0xd8] sm:$0xff]
      %v587 = vld [vmem:[#allocation2 + $0xe0] sm:$0xff]
      %v588 = vld [vmem:[#allocation2 + $0xf0] sm:$0xff]
      %v589 = vld [vmem:[#allocation2 + $0xf8] sm:$0xff]
      %v590 = vld [vmem:[#allocation2 + $0x108] sm:$0xff]
      %v591 = vld [vmem:[#allocation2 + $0x110] sm:$0xff]
      %v592 = vld [vmem:[#allocation2 + $0x120] sm:$0xff]
      %v593 = vld [vmem:[#allocation2 + $0x128] sm:$0xff]
      %v594 = vld [vmem:[#allocation2 + $0x138] sm:$0xff]
      %v595 = vld [vmem:[#allocation2 + $0x140] sm:$0xff]
      %v596 = vld [vmem:[#allocation2 + $0x150] sm:$0xff]
      %v597 = vld [vmem:[#allocation2 + $0x158] sm:$0xff]
      %v598 = vld [vmem:[#allocation2 + $0x168] sm:$0xff]
      %v599 = vld [vmem:[#allocation2 + $0x170] sm:$0xff]
      %v600 = vpack.c.bf16 %v568, %v568
      %v601 = vpack.c.bf16 %v569, %v569
      %v602 = vpack.c.bf16 %v570, %v570
      %v603 = vpack.c.bf16 %v571, %v571
      %v604 = vpack.c.bf16 %v572, %v572
      %v605 = vpack.c.bf16 %v573, %v573
      %v606 = vpack.c.bf16 %v574, %v574
      %v607 = vpack.c.bf16 %v575, %v575
      %v608 = vpack.c.bf16 %v576, %v576
      %v609 = vpack.c.bf16 %v577, %v577
      %v610 = vpack.c.bf16 %v578, %v578
      %v611 = vpack.c.bf16 %v579, %v579
      %v612 = vpack.c.bf16 %v580, %v580
      %v613 = vpack.c.bf16 %v581, %v581
      %v614 = vpack.c.bf16 %v582, %v582
      %v615 = vpack.c.bf16 %v583, %v583
      %v616 = vpack.c.bf16 %v584, %v584
      %v617 = vpack.c.bf16 %v585, %v585
      %v618 = vpack.c.bf16 %v586, %v586
      %v619 = vpack.c.bf16 %v587, %v587
      %v620 = vpack.c.bf16 %v588, %v588
      %v621 = vpack.c.bf16 %v589, %v589
      %v622 = vpack.c.bf16 %v590, %v590
      %v623 = vpack.c.bf16 %v591, %v591
      %v624 = vpack.c.bf16 %v592, %v592
      %v625 = vpack.c.bf16 %v593, %v593
      %v626 = vpack.c.bf16 %v594, %v594
      %v627 = vpack.c.bf16 %v595, %v595
      %v628 = vpack.c.bf16 %v596, %v596
      %v629 = vpack.c.bf16 %v597, %v597
      %v630 = vpack.c.bf16 %v598, %v598
      %v631 = vpack.c.bf16 %v599, %v599
      %vm632 = vcmask 27648
      %633 = vst.msk [vmem:[#allocation3] sm:$0xf] %vm632, %v600
      %634 = vst.msk [vmem:[#allocation3 + $0x4] sm:$0xf] %vm632, %v601
      %635 = vst.msk [vmem:[#allocation3 + $0x8] sm:$0xf] %vm632, %v602
      %636 = vst.msk [vmem:[#allocation3 + $0xc] sm:$0xf] %vm632, %v603
      %637 = vst.msk [vmem:[#allocation3 + $0x10] sm:$0xf] %vm632, %v604
      %638 = vst.msk [vmem:[#allocation3 + $0x14] sm:$0xf] %vm632, %v605
      %639 = vst.msk [vmem:[#allocation3 + $0x18] sm:$0xf] %vm632, %v606
      %640 = vst.msk [vmem:[#allocation3 + $0x1c] sm:$0xf] %vm632, %v607
      %641 = vst.msk [vmem:[#allocation3 + $0x20] sm:$0xf] %vm632, %v608
      %642 = vst.msk [vmem:[#allocation3 + $0x24] sm:$0xf] %vm632, %v609
      %643 = vst.msk [vmem:[#allocation3 + $0x28] sm:$0xf] %vm632, %v610
      %644 = vst.msk [vmem:[#allocation3 + $0x2c] sm:$0xf] %vm632, %v611
      %645 = vst.msk [vmem:[#allocation3 + $0x30] sm:$0xf] %vm632, %v612
      %646 = vst.msk [vmem:[#allocation3 + $0x34] sm:$0xf] %vm632, %v613
      %647 = vst.msk [vmem:[#allocation3 + $0x38] sm:$0xf] %vm632, %v614
      %648 = vst.msk [vmem:[#allocation3 + $0x3c] sm:$0xf] %vm632, %v615
      %649 = vst.msk [vmem:[#allocation3 + $0x40] sm:$0xf] %vm632, %v616
      %650 = vst.msk [vmem:[#allocation3 + $0x44] sm:$0xf] %vm632, %v617
      %651 = vst.msk [vmem:[#allocation3 + $0x48] sm:$0xf] %vm632, %v618
      %652 = vst.msk [vmem:[#allocation3 + $0x4c] sm:$0xf] %vm632, %v619
      %653 = vst.msk [vmem:[#allocation3 + $0x50] sm:$0xf] %vm632, %v620
      %654 = vst.msk [vmem:[#allocation3 + $0x54] sm:$0xf] %vm632, %v621
      %655 = vst.msk [vmem:[#allocation3 + $0x58] sm:$0xf] %vm632, %v622
      %656 = vst.msk [vmem:[#allocation3 + $0x5c] sm:$0xf] %vm632, %v623
      %657 = vst.msk [vmem:[#allocation3 + $0x60] sm:$0xf] %vm632, %v624
      %658 = vst.msk [vmem:[#allocation3 + $0x64] sm:$0xf] %vm632, %v625
      %659 = vst.msk [vmem:[#allocation3 + $0x68] sm:$0xf] %vm632, %v626
      %660 = vst.msk [vmem:[#allocation3 + $0x6c] sm:$0xf] %vm632, %v627
      %661 = vst.msk [vmem:[#allocation3 + $0x70] sm:$0xf] %vm632, %v628
      %662 = vst.msk [vmem:[#allocation3 + $0x74] sm:$0xf] %vm632, %v629
      %663 = vst.msk [vmem:[#allocation3 + $0x78] sm:$0xf] %vm632, %v630
      %664 = vst.msk [vmem:[#allocation3 + $0x7c] sm:$0xf] %vm632, %v631
      %v665 = vld [vmem:[#allocation2 + $0x1] sm:$0xff]
      %v666 = vld [vmem:[#allocation2 + $0x9] sm:$0xff]
      %v667 = vld [vmem:[#allocation2 + $0x19] sm:$0xff]
      %v668 = vld [vmem:[#allocation2 + $0x21] sm:$0xff]
      %v669 = vld [vmem:[#allocation2 + $0x31] sm:$0xff]
      %v670 = vld [vmem:[#allocation2 + $0x39] sm:$0xff]
      %v671 = vld [vmem:[#allocation2 + $0x49] sm:$0xff]
      %v672 = vld [vmem:[#allocation2 + $0x51] sm:$0xff]
      %v673 = vld [vmem:[#allocation2 + $0x61] sm:$0xff]
      %v674 = vld [vmem:[#allocation2 + $0x69] sm:$0xff]
      %v675 = vld [vmem:[#allocation2 + $0x79] sm:$0xff]
      %v676 = vld [vmem:[#allocation2 + $0x81] sm:$0xff]
      %v677 = vld [vmem:[#allocation2 + $0x91] sm:$0xff]
      %v678 = vld [vmem:[#allocation2 + $0x99] sm:$0xff]
      %v679 = vld [vmem:[#allocation2 + $0xa9] sm:$0xff]
      %v680 = vld [vmem:[#allocation2 + $0xb1] sm:$0xff]
      %v681 = vld [vmem:[#allocation2 + $0xc1] sm:$0xff]
      %v682 = vld [vmem:[#allocation2 + $0xc9] sm:$0xff]
      %v683 = vld [vmem:[#allocation2 + $0xd9] sm:$0xff]
      %v684 = vld [vmem:[#allocation2 + $0xe1] sm:$0xff]
      %v685 = vld [vmem:[#allocation2 + $0xf1] sm:$0xff]
      %v686 = vld [vmem:[#allocation2 + $0xf9] sm:$0xff]
      %v687 = vld [vmem:[#allocation2 + $0x109] sm:$0xff]
      %v688 = vld [vmem:[#allocation2 + $0x111] sm:$0xff]
      %v689 = vld [vmem:[#allocation2 + $0x121] sm:$0xff]
      %v690 = vld [vmem:[#allocation2 + $0x129] sm:$0xff]
      %v691 = vld [vmem:[#allocation2 + $0x139] sm:$0xff]
      %v692 = vld [vmem:[#allocation2 + $0x141] sm:$0xff]
      %v693 = vld [vmem:[#allocation2 + $0x151] sm:$0xff]
      %v694 = vld [vmem:[#allocation2 + $0x159] sm:$0xff]
      %v695 = vld [vmem:[#allocation2 + $0x169] sm:$0xff]
      %v696 = vld [vmem:[#allocation2 + $0x171] sm:$0xff]
      %v697 = vpack.c.bf16 %v665, %v665
      %v698 = vpack.c.bf16 %v666, %v666
      %v699 = vpack.c.bf16 %v667, %v667
      %v700 = vpack.c.bf16 %v668, %v668
      %v701 = vpack.c.bf16 %v669, %v669
      %v702 = vpack.c.bf16 %v670, %v670
      %v703 = vpack.c.bf16 %v671, %v671
      %v704 = vpack.c.bf16 %v672, %v672
      %v705 = vpack.c.bf16 %v673, %v673
      %v706 = vpack.c.bf16 %v674, %v674
      %v707 = vpack.c.bf16 %v675, %v675
      %v708 = vpack.c.bf16 %v676, %v676
      %v709 = vpack.c.bf16 %v677, %v677
      %v710 = vpack.c.bf16 %v678, %v678
      %v711 = vpack.c.bf16 %v679, %v679
      %v712 = vpack.c.bf16 %v680, %v680
      %v713 = vpack.c.bf16 %v681, %v681
      %v714 = vpack.c.bf16 %v682, %v682
      %v715 = vpack.c.bf16 %v683, %v683
      %v716 = vpack.c.bf16 %v684, %v684
      %v717 = vpack.c.bf16 %v685, %v685
      %v718 = vpack.c.bf16 %v686, %v686
      %v719 = vpack.c.bf16 %v687, %v687
      %v720 = vpack.c.bf16 %v688, %v688
      %v721 = vpack.c.bf16 %v689, %v689
      %v722 = vpack.c.bf16 %v690, %v690
      %v723 = vpack.c.bf16 %v691, %v691
      %v724 = vpack.c.bf16 %v692, %v692
      %v725 = vpack.c.bf16 %v693, %v693
      %v726 = vpack.c.bf16 %v694, %v694
      %v727 = vpack.c.bf16 %v695, %v695
      %v728 = vpack.c.bf16 %v696, %v696
      %761 = vrot.lane.b32.xlu0 %v697, 4
      %v762 = vpop.permute.xlu0 %761
      %763 = vrot.lane.b32.xlu0 %v698, 4
      %v764 = vpop.permute.xlu0 %763
      %765 = vrot.lane.b32.xlu0 %v699, 4
      %v766 = vpop.permute.xlu0 %765
      %767 = vrot.lane.b32.xlu0 %v700, 4
      %v768 = vpop.permute.xlu0 %767
      %769 = vrot.lane.b32.xlu0 %v701, 4
      %v770 = vpop.permute.xlu0 %769
      %771 = vrot.lane.b32.xlu0 %v702, 4
      %v772 = vpop.permute.xlu0 %771
      %773 = vrot.lane.b32.xlu0 %v703, 4
      %v774 = vpop.permute.xlu0 %773
      %775 = vrot.lane.b32.xlu0 %v704, 4
      %v776 = vpop.permute.xlu0 %775
      %777 = vrot.lane.b32.xlu0 %v705, 4
      %v778 = vpop.permute.xlu0 %777
      %779 = vrot.lane.b32.xlu0 %v706, 4
      %v780 = vpop.permute.xlu0 %779
      %781 = vrot.lane.b32.xlu0 %v707, 4
      %v782 = vpop.permute.xlu0 %781
      %783 = vrot.lane.b32.xlu0 %v708, 4
      %v784 = vpop.permute.xlu0 %783
      %785 = vrot.lane.b32.xlu0 %v709, 4
      %v786 = vpop.permute.xlu0 %785
      %787 = vrot.lane.b32.xlu0 %v710, 4
      %v788 = vpop.permute.xlu0 %787
      %789 = vrot.lane.b32.xlu0 %v711, 4
      %v790 = vpop.permute.xlu0 %789
      %791 = vrot.lane.b32.xlu0 %v712, 4
      %v792 = vpop.permute.xlu0 %791
      %793 = vrot.lane.b32.xlu0 %v713, 4
      %v794 = vpop.permute.xlu0 %793
      %795 = vrot.lane.b32.xlu0 %v714, 4
      %v796 = vpop.permute.xlu0 %795
      %797 = vrot.lane.b32.xlu0 %v715, 4
      %v798 = vpop.permute.xlu0 %797
      %799 = vrot.lane.b32.xlu0 %v716, 4
      %v800 = vpop.permute.xlu0 %799
      %801 = vrot.lane.b32.xlu0 %v717, 4
      %v802 = vpop.permute.xlu0 %801
      %803 = vrot.lane.b32.xlu0 %v718, 4
      %v804 = vpop.permute.xlu0 %803
      %805 = vrot.lane.b32.xlu0 %v719, 4
      %v806 = vpop.permute.xlu0 %805
      %807 = vrot.lane.b32.xlu0 %v720, 4
      %v808 = vpop.permute.xlu0 %807
      %809 = vrot.lane.b32.xlu0 %v721, 4
      %v810 = vpop.permute.xlu0 %809
      %811 = vrot.lane.b32.xlu0 %v722, 4
      %v812 = vpop.permute.xlu0 %811
      %813 = vrot.lane.b32.xlu0 %v723, 4
      %v814 = vpop.permute.xlu0 %813
      %815 = vrot.lane.b32.xlu0 %v724, 4
      %v816 = vpop.permute.xlu0 %815
      %817 = vrot.lane.b32.xlu0 %v725, 4
      %v818 = vpop.permute.xlu0 %817
      %819 = vrot.lane.b32.xlu0 %v726, 4
      %v820 = vpop.permute.xlu0 %819
      %821 = vrot.lane.b32.xlu0 %v727, 4
      %v822 = vpop.permute.xlu0 %821
      %823 = vrot.lane.b32.xlu0 %v728, 4
      %v824 = vpop.permute.xlu0 %823
      %vm857 = vcmask 60448
      %858 = vst.msk [vmem:[#allocation3] sm:$0xf] %vm857, %v762
      %859 = vst.msk [vmem:[#allocation3 + $0x4] sm:$0xf] %vm857, %v764
      %860 = vst.msk [vmem:[#allocation3 + $0x8] sm:$0xf] %vm857, %v766
      %861 = vst.msk [vmem:[#allocation3 + $0xc] sm:$0xf] %vm857, %v768
      %862 = vst.msk [vmem:[#allocation3 + $0x10] sm:$0xf] %vm857, %v770
      %863 = vst.msk [vmem:[#allocation3 + $0x14] sm:$0xf] %vm857, %v772
      %864 = vst.msk [vmem:[#allocation3 + $0x18] sm:$0xf] %vm857, %v774
      %865 = vst.msk [vmem:[#allocation3 + $0x1c] sm:$0xf] %vm857, %v776
      %866 = vst.msk [vmem:[#allocation3 + $0x20] sm:$0xf] %vm857, %v778
      %867 = vst.msk [vmem:[#allocation3 + $0x24] sm:$0xf] %vm857, %v780
      %868 = vst.msk [vmem:[#allocation3 + $0x28] sm:$0xf] %vm857, %v782
      %869 = vst.msk [vmem:[#allocation3 + $0x2c] sm:$0xf] %vm857, %v784
      %870 = vst.msk [vmem:[#allocation3 + $0x30] sm:$0xf] %vm857, %v786
      %871 = vst.msk [vmem:[#allocation3 + $0x34] sm:$0xf] %vm857, %v788
      %872 = vst.msk [vmem:[#allocation3 + $0x38] sm:$0xf] %vm857, %v790
      %873 = vst.msk [vmem:[#allocation3 + $0x3c] sm:$0xf] %vm857, %v792
      %874 = vst.msk [vmem:[#allocation3 + $0x40] sm:$0xf] %vm857, %v794
      %875 = vst.msk [vmem:[#allocation3 + $0x44] sm:$0xf] %vm857, %v796
      %876 = vst.msk [vmem:[#allocation3 + $0x48] sm:$0xf] %vm857, %v798
      %877 = vst.msk [vmem:[#allocation3 + $0x4c] sm:$0xf] %vm857, %v800
      %878 = vst.msk [vmem:[#allocation3 + $0x50] sm:$0xf] %vm857, %v802
      %879 = vst.msk [vmem:[#allocation3 + $0x54] sm:$0xf] %vm857, %v804
      %880 = vst.msk [vmem:[#allocation3 + $0x58] sm:$0xf] %vm857, %v806
      %881 = vst.msk [vmem:[#allocation3 + $0x5c] sm:$0xf] %vm857, %v808
      %882 = vst.msk [vmem:[#allocation3 + $0x60] sm:$0xf] %vm857, %v810
      %883 = vst.msk [vmem:[#allocation3 + $0x64] sm:$0xf] %vm857, %v812
      %884 = vst.msk [vmem:[#allocation3 + $0x68] sm:$0xf] %vm857, %v814
      %885 = vst.msk [vmem:[#allocation3 + $0x6c] sm:$0xf] %vm857, %v816
      %886 = vst.msk [vmem:[#allocation3 + $0x70] sm:$0xf] %vm857, %v818
      %887 = vst.msk [vmem:[#allocation3 + $0x74] sm:$0xf] %vm857, %v820
      %888 = vst.msk [vmem:[#allocation3 + $0x78] sm:$0xf] %vm857, %v822
      %889 = vst.msk [vmem:[#allocation3 + $0x7c] sm:$0xf] %vm857, %v824
      %v890 = vld [vmem:[#allocation2 + $0x2] sm:$0xff]
      %v891 = vld [vmem:[#allocation2 + $0xa] sm:$0xff]
      %v892 = vld [vmem:[#allocation2 + $0x1a] sm:$0xff]
      %v893 = vld [vmem:[#allocation2 + $0x22] sm:$0xff]
      %v894 = vld [vmem:[#allocation2 + $0x32] sm:$0xff]
      %v895 = vld [vmem:[#allocation2 + $0x3a] sm:$0xff]
      %v896 = vld [vmem:[#allocation2 + $0x4a] sm:$0xff]
      %v897 = vld [vmem:[#allocation2 + $0x52] sm:$0xff]
      %v898 = vld [vmem:[#allocation2 + $0x62] sm:$0xff]
      %v899 = vld [vmem:[#allocation2 + $0x6a] sm:$0xff]
      %v900 = vld [vmem:[#allocation2 + $0x7a] sm:$0xff]
      %v901 = vld [vmem:[#allocation2 + $0x82] sm:$0xff]
      %v902 = vld [vmem:[#allocation2 + $0x92] sm:$0xff]
      %v903 = vld [vmem:[#allocation2 + $0x9a] sm:$0xff]
      %v904 = vld [vmem:[#allocation2 + $0xaa] sm:$0xff]
      %v905 = vld [vmem:[#allocation2 + $0xb2] sm:$0xff]
      %v906 = vld [vmem:[#allocation2 + $0xc2] sm:$0xff]
      %v907 = vld [vmem:[#allocation2 + $0xca] sm:$0xff]
      %v908 = vld [vmem:[#allocation2 + $0xda] sm:$0xff]
      %v909 = vld [vmem:[#allocation2 + $0xe2] sm:$0xff]
      %v910 = vld [vmem:[#allocation2 + $0xf2] sm:$0xff]
      %v911 = vld [vmem:[#allocation2 + $0xfa] sm:$0xff]
      %v912 = vld [vmem:[#allocation2 + $0x10a] sm:$0xff]
      %v913 = vld [vmem:[#allocation2 + $0x112] sm:$0xff]
      %v914 = vld [vmem:[#allocation2 + $0x122] sm:$0xff]
      %v915 = vld [vmem:[#allocation2 + $0x12a] sm:$0xff]
      %v916 = vld [vmem:[#allocation2 + $0x13a] sm:$0xff]
      %v917 = vld [vmem:[#allocation2 + $0x142] sm:$0xff]
      %v918 = vld [vmem:[#allocation2 + $0x152] sm:$0xff]
      %v919 = vld [vmem:[#allocation2 + $0x15a] sm:$0xff]
      %v920 = vld [vmem:[#allocation2 + $0x16a] sm:$0xff]
      %v921 = vld [vmem:[#allocation2 + $0x172] sm:$0xff]
      %v922 = vpack.c.bf16 %v890, %v890
      %v923 = vpack.c.bf16 %v891, %v891
      %v924 = vpack.c.bf16 %v892, %v892
      %v925 = vpack.c.bf16 %v893, %v893
      %v926 = vpack.c.bf16 %v894, %v894
      %v927 = vpack.c.bf16 %v895, %v895
      %v928 = vpack.c.bf16 %v896, %v896
      %v929 = vpack.c.bf16 %v897, %v897
      %v930 = vpack.c.bf16 %v898, %v898
      %v931 = vpack.c.bf16 %v899, %v899
      %v932 = vpack.c.bf16 %v900, %v900
      %v933 = vpack.c.bf16 %v901, %v901
      %v934 = vpack.c.bf16 %v902, %v902
      %v935 = vpack.c.bf16 %v903, %v903
      %v936 = vpack.c.bf16 %v904, %v904
      %v937 = vpack.c.bf16 %v905, %v905
      %v938 = vpack.c.bf16 %v906, %v906
      %v939 = vpack.c.bf16 %v907, %v907
      %v940 = vpack.c.bf16 %v908, %v908
      %v941 = vpack.c.bf16 %v909, %v909
      %v942 = vpack.c.bf16 %v910, %v910
      %v943 = vpack.c.bf16 %v911, %v911
      %v944 = vpack.c.bf16 %v912, %v912
      %v945 = vpack.c.bf16 %v913, %v913
      %v946 = vpack.c.bf16 %v914, %v914
      %v947 = vpack.c.bf16 %v915, %v915
      %v948 = vpack.c.bf16 %v916, %v916
      %v949 = vpack.c.bf16 %v917, %v917
      %v950 = vpack.c.bf16 %v918, %v918
      %v951 = vpack.c.bf16 %v919, %v919
      %v952 = vpack.c.bf16 %v920, %v920
      %v953 = vpack.c.bf16 %v921, %v921
      %986 = vrot.lane.b32.xlu0 %v922, 8
      %v987 = vpop.permute.xlu0 %986
      %988 = vrot.lane.b32.xlu0 %v923, 8
      %v989 = vpop.permute.xlu0 %988
      %990 = vrot.lane.b32.xlu0 %v924, 8
      %v991 = vpop.permute.xlu0 %990
      %992 = vrot.lane.b32.xlu0 %v925, 8
      %v993 = vpop.permute.xlu0 %992
      %994 = vrot.lane.b32.xlu0 %v926, 8
      %v995 = vpop.permute.xlu0 %994
      %996 = vrot.lane.b32.xlu0 %v927, 8
      %v997 = vpop.permute.xlu0 %996
      %998 = vrot.lane.b32.xlu0 %v928, 8
      %v999 = vpop.permute.xlu0 %998
      %1000 = vrot.lane.b32.xlu0 %v929, 8
      %v1001 = vpop.permute.xlu0 %1000
      %1002 = vrot.lane.b32.xlu0 %v930, 8
      %v1003 = vpop.permute.xlu0 %1002
      %1004 = vrot.lane.b32.xlu0 %v931, 8
      %v1005 = vpop.permute.xlu0 %1004
      %1006 = vrot.lane.b32.xlu0 %v932, 8
      %v1007 = vpop.permute.xlu0 %1006
      %1008 = vrot.lane.b32.xlu0 %v933, 8
      %v1009 = vpop.permute.xlu0 %1008
      %1010 = vrot.lane.b32.xlu0 %v934, 8
      %v1011 = vpop.permute.xlu0 %1010
      %1012 = vrot.lane.b32.xlu0 %v935, 8
      %v1013 = vpop.permute.xlu0 %1012
      %1014 = vrot.lane.b32.xlu0 %v936, 8
      %v1015 = vpop.permute.xlu0 %1014
      %1016 = vrot.lane.b32.xlu0 %v937, 8
      %v1017 = vpop.permute.xlu0 %1016
      %1018 = vrot.lane.b32.xlu0 %v938, 8
      %v1019 = vpop.permute.xlu0 %1018
      %1020 = vrot.lane.b32.xlu0 %v939, 8
      %v1021 = vpop.permute.xlu0 %1020
      %1022 = vrot.lane.b32.xlu0 %v940, 8
      %v1023 = vpop.permute.xlu0 %1022
      %1024 = vrot.lane.b32.xlu0 %v941, 8
      %v1025 = vpop.permute.xlu0 %1024
      %1026 = vrot.lane.b32.xlu0 %v942, 8
      %v1027 = vpop.permute.xlu0 %1026
      %1028 = vrot.lane.b32.xlu0 %v943, 8
      %v1029 = vpop.permute.xlu0 %1028
      %1030 = vrot.lane.b32.xlu0 %v944, 8
      %v1031 = vpop.permute.xlu0 %1030
      %1032 = vrot.lane.b32.xlu0 %v945, 8
      %v1033 = vpop.permute.xlu0 %1032
      %1034 = vrot.lane.b32.xlu0 %v946, 8
      %v1035 = vpop.permute.xlu0 %1034
      %1036 = vrot.lane.b32.xlu0 %v947, 8
      %v1037 = vpop.permute.xlu0 %1036
      %1038 = vrot.lane.b32.xlu0 %v948, 8
      %v1039 = vpop.permute.xlu0 %1038
      %1040 = vrot.lane.b32.xlu0 %v949, 8
      %v1041 = vpop.permute.xlu0 %1040
      %1042 = vrot.lane.b32.xlu0 %v950, 8
      %v1043 = vpop.permute.xlu0 %1042
      %1044 = vrot.lane.b32.xlu0 %v951, 8
      %v1045 = vpop.permute.xlu0 %1044
      %1046 = vrot.lane.b32.xlu0 %v952, 8
      %v1047 = vpop.permute.xlu0 %1046
      %1048 = vrot.lane.b32.xlu0 %v953, 8
      %v1049 = vpop.permute.xlu0 %1048
      %vm1082 = vcmask 93248
      %1083 = vst.msk [vmem:[#allocation3] sm:$0xf] %vm1082, %v987
      %1084 = vst.msk [vmem:[#allocation3 + $0x4] sm:$0xf] %vm1082, %v989
      %1085 = vst.msk [vmem:[#allocation3 + $0x8] sm:$0xf] %vm1082, %v991
      %1086 = vst.msk [vmem:[#allocation3 + $0xc] sm:$0xf] %vm1082, %v993
      %1087 = vst.msk [vmem:[#allocation3 + $0x10] sm:$0xf] %vm1082, %v995
      %1088 = vst.msk [vmem:[#allocation3 + $0x14] sm:$0xf] %vm1082, %v997
      %1089 = vst.msk [vmem:[#allocation3 + $0x18] sm:$0xf] %vm1082, %v999
      %1090 = vst.msk [vmem:[#allocation3 + $0x1c] sm:$0xf] %vm1082, %v1001
      %1091 = vst.msk [vmem:[#allocation3 + $0x20] sm:$0xf] %vm1082, %v1003
      %1092 = vst.msk [vmem:[#allocation3 + $0x24] sm:$0xf] %vm1082, %v1005
      %1093 = vst.msk [vmem:[#allocation3 + $0x28] sm:$0xf] %vm1082, %v1007
      %1094 = vst.msk [vmem:[#allocation3 + $0x2c] sm:$0xf] %vm1082, %v1009
      %1095 = vst.msk [vmem:[#allocation3 + $0x30] sm:$0xf] %vm1082, %v1011
      %1096 = vst.msk [vmem:[#allocation3 + $0x34] sm:$0xf] %vm1082, %v1013
      %1097 = vst.msk [vmem:[#allocation3 + $0x38] sm:$0xf] %vm1082, %v1015
      %1098 = vst.msk [vmem:[#allocation3 + $0x3c] sm:$0xf] %vm1082, %v1017
      %1099 = vst.msk [vmem:[#allocation3 + $0x40] sm:$0xf] %vm1082, %v1019
      %1100 = vst.msk [vmem:[#allocation3 + $0x44] sm:$0xf] %vm1082, %v1021
      %1101 = vst.msk [vmem:[#allocation3 + $0x48] sm:$0xf] %vm1082, %v1023
      %1102 = vst.msk [vmem:[#allocation3 + $0x4c] sm:$0xf] %vm1082, %v1025
      %1103 = vst.msk [vmem:[#allocation3 + $0x50] sm:$0xf] %vm1082, %v1027
      %1104 = vst.msk [vmem:[#allocation3 + $0x54] sm:$0xf] %vm1082, %v1029
      %1105 = vst.msk [vmem:[#allocation3 + $0x58] sm:$0xf] %vm1082, %v1031
      %1106 = vst.msk [vmem:[#allocation3 + $0x5c] sm:$0xf] %vm1082, %v1033
      %1107 = vst.msk [vmem:[#allocation3 + $0x60] sm:$0xf] %vm1082, %v1035
      %1108 = vst.msk [vmem:[#allocation3 + $0x64] sm:$0xf] %vm1082, %v1037
      %1109 = vst.msk [vmem:[#allocation3 + $0x68] sm:$0xf] %vm1082, %v1039
      %1110 = vst.msk [vmem:[#allocation3 + $0x6c] sm:$0xf] %vm1082, %v1041
      %1111 = vst.msk [vmem:[#allocation3 + $0x70] sm:$0xf] %vm1082, %v1043
      %1112 = vst.msk [vmem:[#allocation3 + $0x74] sm:$0xf] %vm1082, %v1045
      %1113 = vst.msk [vmem:[#allocation3 + $0x78] sm:$0xf] %vm1082, %v1047
      %1114 = vst.msk [vmem:[#allocation3 + $0x7c] sm:$0xf] %vm1082, %v1049
      %v1115 = vld [vmem:[%s535] sm:$0xff]
      %v1116 = vld [vmem:[%s535 + $0x8] sm:$0xff]
      %v1117 = vld [vmem:[%s535 + $0x18] sm:$0xff]
      %v1118 = vld [vmem:[%s535 + $0x20] sm:$0xff]
      %v1119 = vld [vmem:[%s535 + $0x30] sm:$0xff]
      %v1120 = vld [vmem:[%s535 + $0x38] sm:$0xff]
      %v1121 = vld [vmem:[%s535 + $0x48] sm:$0xff]
      %v1122 = vld [vmem:[%s535 + $0x50] sm:$0xff]
      %v1123 = vld [vmem:[%s535 + $0x60] sm:$0xff]
      %v1124 = vld [vmem:[%s535 + $0x68] sm:$0xff]
      %v1125 = vld [vmem:[%s535 + $0x78] sm:$0xff]
      %v1126 = vld [vmem:[%s535 + $0x80] sm:$0xff]
      %v1127 = vld [vmem:[%s535 + $0x90] sm:$0xff]
      %v1128 = vld [vmem:[%s535 + $0x98] sm:$0xff]
      %v1129 = vld [vmem:[%s535 + $0xa8] sm:$0xff]
      %v1130 = vld [vmem:[%s535 + $0xb0] sm:$0xff]
      %v1131 = vld [vmem:[%s535 + $0xc0] sm:$0xff]
      %v1132 = vld [vmem:[%s535 + $0xc8] sm:$0xff]
      %v1133 = vld [vmem:[%s535 + $0xd8] sm:$0xff]
      %v1134 = vld [vmem:[%s535 + $0xe0] sm:$0xff]
      %v1135 = vld [vmem:[%s535 + $0xf0] sm:$0xff]
      %v1136 = vld [vmem:[%s535 + $0xf8] sm:$0xff]
      %v1137 = vld [vmem:[%s535 + $0x108] sm:$0xff]
      %v1138 = vld [vmem:[%s535 + $0x110] sm:$0xff]
      %v1139 = vld [vmem:[%s535 + $0x120] sm:$0xff]
      %v1140 = vld [vmem:[%s535 + $0x128] sm:$0xff]
      %v1141 = vld [vmem:[%s535 + $0x138] sm:$0xff]
      %v1142 = vld [vmem:[%s535 + $0x140] sm:$0xff]
      %v1143 = vld [vmem:[%s535 + $0x150] sm:$0xff]
      %v1144 = vld [vmem:[%s535 + $0x158] sm:$0xff]
      %v1145 = vld [vmem:[%s535 + $0x168] sm:$0xff]
      %v1146 = vld [vmem:[%s535 + $0x170] sm:$0xff]
      %v1147 = vpack.c.bf16 %v1115, %v1115
      %v1148 = vpack.c.bf16 %v1116, %v1116
      %v1149 = vpack.c.bf16 %v1117, %v1117
      %v1150 = vpack.c.bf16 %v1118, %v1118
      %v1151 = vpack.c.bf16 %v1119, %v1119
      %v1152 = vpack.c.bf16 %v1120, %v1120
      %v1153 = vpack.c.bf16 %v1121, %v1121
      %v1154 = vpack.c.bf16 %v1122, %v1122
      %v1155 = vpack.c.bf16 %v1123, %v1123
      %v1156 = vpack.c.bf16 %v1124, %v1124
      %v1157 = vpack.c.bf16 %v1125, %v1125
      %v1158 = vpack.c.bf16 %v1126, %v1126
      %v1159 = vpack.c.bf16 %v1127, %v1127
      %v1160 = vpack.c.bf16 %v1128, %v1128
      %v1161 = vpack.c.bf16 %v1129, %v1129
      %v1162 = vpack.c.bf16 %v1130, %v1130
      %v1163 = vpack.c.bf16 %v1131, %v1131
      %v1164 = vpack.c.bf16 %v1132, %v1132
      %v1165 = vpack.c.bf16 %v1133, %v1133
      %v1166 = vpack.c.bf16 %v1134, %v1134
      %v1167 = vpack.c.bf16 %v1135, %v1135
      %v1168 = vpack.c.bf16 %v1136, %v1136
      %v1169 = vpack.c.bf16 %v1137, %v1137
      %v1170 = vpack.c.bf16 %v1138, %v1138
      %v1171 = vpack.c.bf16 %v1139, %v1139
      %v1172 = vpack.c.bf16 %v1140, %v1140
      %v1173 = vpack.c.bf16 %v1141, %v1141
      %v1174 = vpack.c.bf16 %v1142, %v1142
      %v1175 = vpack.c.bf16 %v1143, %v1143
      %v1176 = vpack.c.bf16 %v1144, %v1144
      %v1177 = vpack.c.bf16 %v1145, %v1145
      %v1178 = vpack.c.bf16 %v1146, %v1146
      %1211 = vrot.lane.b32.xlu0 %v1147, 12
      %v1212 = vpop.permute.xlu0 %1211
      %1213 = vrot.lane.b32.xlu0 %v1148, 12
      %v1214 = vpop.permute.xlu0 %1213
      %1215 = vrot.lane.b32.xlu0 %v1149, 12
      %v1216 = vpop.permute.xlu0 %1215
      %1217 = vrot.lane.b32.xlu0 %v1150, 12
      %v1218 = vpop.permute.xlu0 %1217
      %1219 = vrot.lane.b32.xlu0 %v1151, 12
      %v1220 = vpop.permute.xlu0 %1219
      %1221 = vrot.lane.b32.xlu0 %v1152, 12
      %v1222 = vpop.permute.xlu0 %1221
      %1223 = vrot.lane.b32.xlu0 %v1153, 12
      %v1224 = vpop.permute.xlu0 %1223
      %1225 = vrot.lane.b32.xlu0 %v1154, 12
      %v1226 = vpop.permute.xlu0 %1225
      %1227 = vrot.lane.b32.xlu0 %v1155, 12
      %v1228 = vpop.permute.xlu0 %1227
      %1229 = vrot.lane.b32.xlu0 %v1156, 12
      %v1230 = vpop.permute.xlu0 %1229
      %1231 = vrot.lane.b32.xlu0 %v1157, 12
      %v1232 = vpop.permute.xlu0 %1231
      %1233 = vrot.lane.b32.xlu0 %v1158, 12
      %v1234 = vpop.permute.xlu0 %1233
      %1235 = vrot.lane.b32.xlu0 %v1159, 12
      %v1236 = vpop.permute.xlu0 %1235
      %1237 = vrot.lane.b32.xlu0 %v1160, 12
      %v1238 = vpop.permute.xlu0 %1237
      %1239 = vrot.lane.b32.xlu0 %v1161, 12
      %v1240 = vpop.permute.xlu0 %1239
      %1241 = vrot.lane.b32.xlu0 %v1162, 12
      %v1242 = vpop.permute.xlu0 %1241
      %1243 = vrot.lane.b32.xlu0 %v1163, 12
      %v1244 = vpop.permute.xlu0 %1243
      %1245 = vrot.lane.b32.xlu0 %v1164, 12
      %v1246 = vpop.permute.xlu0 %1245
      %1247 = vrot.lane.b32.xlu0 %v1165, 12
      %v1248 = vpop.permute.xlu0 %1247
      %1249 = vrot.lane.b32.xlu0 %v1166, 12
      %v1250 = vpop.permute.xlu0 %1249
      %1251 = vrot.lane.b32.xlu0 %v1167, 12
      %v1252 = vpop.permute.xlu0 %1251
      %1253 = vrot.lane.b32.xlu0 %v1168, 12
      %v1254 = vpop.permute.xlu0 %1253
      %1255 = vrot.lane.b32.xlu0 %v1169, 12
      %v1256 = vpop.permute.xlu0 %1255
      %1257 = vrot.lane.b32.xlu0 %v1170, 12
      %v1258 = vpop.permute.xlu0 %1257
      %1259 = vrot.lane.b32.xlu0 %v1171, 12
      %v1260 = vpop.permute.xlu0 %1259
      %1261 = vrot.lane.b32.xlu0 %v1172, 12
      %v1262 = vpop.permute.xlu0 %1261
      %1263 = vrot.lane.b32.xlu0 %v1173, 12
      %v1264 = vpop.permute.xlu0 %1263
      %1265 = vrot.lane.b32.xlu0 %v1174, 12
      %v1266 = vpop.permute.xlu0 %1265
      %1267 = vrot.lane.b32.xlu0 %v1175, 12
      %v1268 = vpop.permute.xlu0 %1267
      %1269 = vrot.lane.b32.xlu0 %v1176, 12
      %v1270 = vpop.permute.xlu0 %1269
      %1271 = vrot.lane.b32.xlu0 %v1177, 12
      %v1272 = vpop.permute.xlu0 %1271
      %1273 = vrot.lane.b32.xlu0 %v1178, 12
      %v1274 = vpop.permute.xlu0 %1273
      %vm1307 = vcmask 126048
      %1308 = vst.msk [vmem:[#allocation3] sm:$0xf] %vm1307, %v1212
      %1309 = vst.msk [vmem:[#allocation3 + $0x4] sm:$0xf] %vm1307, %v1214
      %1310 = vst.msk [vmem:[#allocation3 + $0x8] sm:$0xf] %vm1307, %v1216
      %1311 = vst.msk [vmem:[#allocation3 + $0xc] sm:$0xf] %vm1307, %v1218
      %1312 = vst.msk [vmem:[#allocation3 + $0x10] sm:$0xf] %vm1307, %v1220
      %1313 = vst.msk [vmem:[#allocation3 + $0x14] sm:$0xf] %vm1307, %v1222
      %1314 = vst.msk [vmem:[#allocation3 + $0x18] sm:$0xf] %vm1307, %v1224
      %1315 = vst.msk [vmem:[#allocation3 + $0x1c] sm:$0xf] %vm1307, %v1226
      %1316 = vst.msk [vmem:[#allocation3 + $0x20] sm:$0xf] %vm1307, %v1228
      %1317 = vst.msk [vmem:[#allocation3 + $0x24] sm:$0xf] %vm1307, %v1230
      %1318 = vst.msk [vmem:[#allocation3 + $0x28] sm:$0xf] %vm1307, %v1232
      %1319 = vst.msk [vmem:[#allocation3 + $0x2c] sm:$0xf] %vm1307, %v1234
      %1320 = vst.msk [vmem:[#allocation3 + $0x30] sm:$0xf] %vm1307, %v1236
      %1321 = vst.msk [vmem:[#allocation3 + $0x34] sm:$0xf] %vm1307, %v1238
      %1322 = vst.msk [vmem:[#allocation3 + $0x38] sm:$0xf] %vm1307, %v1240
      %1323 = vst.msk [vmem:[#allocation3 + $0x3c] sm:$0xf] %vm1307, %v1242
      %1324 = vst.msk [vmem:[#allocation3 + $0x40] sm:$0xf] %vm1307, %v1244
      %1325 = vst.msk [vmem:[#allocation3 + $0x44] sm:$0xf] %vm1307, %v1246
      %1326 = vst.msk [vmem:[#allocation3 + $0x48] sm:$0xf] %vm1307, %v1248
      %1327 = vst.msk [vmem:[#allocation3 + $0x4c] sm:$0xf] %vm1307, %v1250
      %1328 = vst.msk [vmem:[#allocation3 + $0x50] sm:$0xf] %vm1307, %v1252
      %1329 = vst.msk [vmem:[#allocation3 + $0x54] sm:$0xf] %vm1307, %v1254
      %1330 = vst.msk [vmem:[#allocation3 + $0x58] sm:$0xf] %vm1307, %v1256
      %1331 = vst.msk [vmem:[#allocation3 + $0x5c] sm:$0xf] %vm1307, %v1258
      %1332 = vst.msk [vmem:[#allocation3 + $0x60] sm:$0xf] %vm1307, %v1260
      %1333 = vst.msk [vmem:[#allocation3 + $0x64] sm:$0xf] %vm1307, %v1262
      %1334 = vst.msk [vmem:[#allocation3 + $0x68] sm:$0xf] %vm1307, %v1264
      %1335 = vst.msk [vmem:[#allocation3 + $0x6c] sm:$0xf] %vm1307, %v1266
      %1336 = vst.msk [vmem:[#allocation3 + $0x70] sm:$0xf] %vm1307, %v1268
      %1337 = vst.msk [vmem:[#allocation3 + $0x74] sm:$0xf] %vm1307, %v1270
      %1338 = vst.msk [vmem:[#allocation3 + $0x78] sm:$0xf] %vm1307, %v1272
      %1339 = vst.msk [vmem:[#allocation3 + $0x7c] sm:$0xf] %vm1307, %v1274
      %v1340 = vld [vmem:[%s535 + $0x1] sm:$0xff]
      %v1341 = vld [vmem:[%s535 + $0x9] sm:$0xff]
      %v1342 = vld [vmem:[%s535 + $0x19] sm:$0xff]
      %v1343 = vld [vmem:[%s535 + $0x21] sm:$0xff]
      %v1344 = vld [vmem:[%s535 + $0x31] sm:$0xff]
      %v1345 = vld [vmem:[%s535 + $0x39] sm:$0xff]
      %v1346 = vld [vmem:[%s535 + $0x49] sm:$0xff]
      %v1347 = vld [vmem:[%s535 + $0x51] sm:$0xff]
      %v1348 = vld [vmem:[%s535 + $0x61] sm:$0xff]
      %v1349 = vld [vmem:[%s535 + $0x69] sm:$0xff]
      %v1350 = vld [vmem:[%s535 + $0x79] sm:$0xff]
      %v1351 = vld [vmem:[%s535 + $0x81] sm:$0xff]
      %v1352 = vld [vmem:[%s535 + $0x91] sm:$0xff]
      %v1353 = vld [vmem:[%s535 + $0x99] sm:$0xff]
      %v1354 = vld [vmem:[%s535 + $0xa9] sm:$0xff]
      %v1355 = vld [vmem:[%s535 + $0xb1] sm:$0xff]
      %v1356 = vld [vmem:[%s535 + $0xc1] sm:$0xff]
      %v1357 = vld [vmem:[%s535 + $0xc9] sm:$0xff]
      %v1358 = vld [vmem:[%s535 + $0xd9] sm:$0xff]
      %v1359 = vld [vmem:[%s535 + $0xe1] sm:$0xff]
      %v1360 = vld [vmem:[%s535 + $0xf1] sm:$0xff]
      %v1361 = vld [vmem:[%s535 + $0xf9] sm:$0xff]
      %v1362 = vld [vmem:[%s535 + $0x109] sm:$0xff]
      %v1363 = vld [vmem:[%s535 + $0x111] sm:$0xff]
      %v1364 = vld [vmem:[%s535 + $0x121] sm:$0xff]
      %v1365 = vld [vmem:[%s535 + $0x129] sm:$0xff]
      %v1366 = vld [vmem:[%s535 + $0x139] sm:$0xff]
      %v1367 = vld [vmem:[%s535 + $0x141] sm:$0xff]
      %v1368 = vld [vmem:[%s535 + $0x151] sm:$0xff]
      %v1369 = vld [vmem:[%s535 + $0x159] sm:$0xff]
      %v1370 = vld [vmem:[%s535 + $0x169] sm:$0xff]
      %v1371 = vld [vmem:[%s535 + $0x171] sm:$0xff]
      %v1372 = vpack.c.bf16 %v1340, %v1340
      %v1373 = vpack.c.bf16 %v1341, %v1341
      %v1374 = vpack.c.bf16 %v1342, %v1342
      %v1375 = vpack.c.bf16 %v1343, %v1343
      %v1376 = vpack.c.bf16 %v1344, %v1344
      %v1377 = vpack.c.bf16 %v1345, %v1345
      %v1378 = vpack.c.bf16 %v1346, %v1346
      %v1379 = vpack.c.bf16 %v1347, %v1347
      %v1380 = vpack.c.bf16 %v1348, %v1348
      %v1381 = vpack.c.bf16 %v1349, %v1349
      %v1382 = vpack.c.bf16 %v1350, %v1350
      %v1383 = vpack.c.bf16 %v1351, %v1351
      %v1384 = vpack.c.bf16 %v1352, %v1352
      %v1385 = vpack.c.bf16 %v1353, %v1353
      %v1386 = vpack.c.bf16 %v1354, %v1354
      %v1387 = vpack.c.bf16 %v1355, %v1355
      %v1388 = vpack.c.bf16 %v1356, %v1356
      %v1389 = vpack.c.bf16 %v1357, %v1357
      %v1390 = vpack.c.bf16 %v1358, %v1358
      %v1391 = vpack.c.bf16 %v1359, %v1359
      %v1392 = vpack.c.bf16 %v1360, %v1360
      %v1393 = vpack.c.bf16 %v1361, %v1361
      %v1394 = vpack.c.bf16 %v1362, %v1362
      %v1395 = vpack.c.bf16 %v1363, %v1363
      %v1396 = vpack.c.bf16 %v1364, %v1364
      %v1397 = vpack.c.bf16 %v1365, %v1365
      %v1398 = vpack.c.bf16 %v1366, %v1366
      %v1399 = vpack.c.bf16 %v1367, %v1367
      %v1400 = vpack.c.bf16 %v1368, %v1368
      %v1401 = vpack.c.bf16 %v1369, %v1369
      %v1402 = vpack.c.bf16 %v1370, %v1370
      %v1403 = vpack.c.bf16 %v1371, %v1371
      %1436 = vrot.lane.b32.xlu0 %v1372, 16
      %v1437 = vpop.permute.xlu0 %1436
      %1438 = vrot.lane.b32.xlu0 %v1373, 16
      %v1439 = vpop.permute.xlu0 %1438
      %1440 = vrot.lane.b32.xlu0 %v1374, 16
      %v1441 = vpop.permute.xlu0 %1440
      %1442 = vrot.lane.b32.xlu0 %v1375, 16
      %v1443 = vpop.permute.xlu0 %1442
      %1444 = vrot.lane.b32.xlu0 %v1376, 16
      %v1445 = vpop.permute.xlu0 %1444
      %1446 = vrot.lane.b32.xlu0 %v1377, 16
      %v1447 = vpop.permute.xlu0 %1446
      %1448 = vrot.lane.b32.xlu0 %v1378, 16
      %v1449 = vpop.permute.xlu0 %1448
      %1450 = vrot.lane.b32.xlu0 %v1379, 16
      %v1451 = vpop.permute.xlu0 %1450
      %1452 = vrot.lane.b32.xlu0 %v1380, 16
      %v1453 = vpop.permute.xlu0 %1452
      %1454 = vrot.lane.b32.xlu0 %v1381, 16
      %v1455 = vpop.permute.xlu0 %1454
      %1456 = vrot.lane.b32.xlu0 %v1382, 16
      %v1457 = vpop.permute.xlu0 %1456
      %1458 = vrot.lane.b32.xlu0 %v1383, 16
      %v1459 = vpop.permute.xlu0 %1458
      %1460 = vrot.lane.b32.xlu0 %v1384, 16
      %v1461 = vpop.permute.xlu0 %1460
      %1462 = vrot.lane.b32.xlu0 %v1385, 16
      %v1463 = vpop.permute.xlu0 %1462
      %1464 = vrot.lane.b32.xlu0 %v1386, 16
      %v1465 = vpop.permute.xlu0 %1464
      %1466 = vrot.lane.b32.xlu0 %v1387, 16
      %v1467 = vpop.permute.xlu0 %1466
      %1468 = vrot.lane.b32.xlu0 %v1388, 16
      %v1469 = vpop.permute.xlu0 %1468
      %1470 = vrot.lane.b32.xlu0 %v1389, 16
      %v1471 = vpop.permute.xlu0 %1470
      %1472 = vrot.lane.b32.xlu0 %v1390, 16
      %v1473 = vpop.permute.xlu0 %1472
      %1474 = vrot.lane.b32.xlu0 %v1391, 16
      %v1475 = vpop.permute.xlu0 %1474
      %1476 = vrot.lane.b32.xlu0 %v1392, 16
      %v1477 = vpop.permute.xlu0 %1476
      %1478 = vrot.lane.b32.xlu0 %v1393, 16
      %v1479 = vpop.permute.xlu0 %1478
      %1480 = vrot.lane.b32.xlu0 %v1394, 16
      %v1481 = vpop.permute.xlu0 %1480
      %1482 = vrot.lane.b32.xlu0 %v1395, 16
      %v1483 = vpop.permute.xlu0 %1482
      %1484 = vrot.lane.b32.xlu0 %v1396, 16
      %v1485 = vpop.permute.xlu0 %1484
      %1486 = vrot.lane.b32.xlu0 %v1397, 16
      %v1487 = vpop.permute.xlu0 %1486
      %1488 = vrot.lane.b32.xlu0 %v1398, 16
      %v1489 = vpop.permute.xlu0 %1488
      %1490 = vrot.lane.b32.xlu0 %v1399, 16
      %v1491 = vpop.permute.xlu0 %1490
      %1492 = vrot.lane.b32.xlu0 %v1400, 16
      %v1493 = vpop.permute.xlu0 %1492
      %1494 = vrot.lane.b32.xlu0 %v1401, 16
      %v1495 = vpop.permute.xlu0 %1494
      %1496 = vrot.lane.b32.xlu0 %v1402, 16
      %v1497 = vpop.permute.xlu0 %1496
      %1498 = vrot.lane.b32.xlu0 %v1403, 16
      %v1499 = vpop.permute.xlu0 %1498
      %vm1532 = vcmask 158848
      %1533 = vst.msk [vmem:[#allocation3] sm:$0xf] %vm1532, %v1437
      %1534 = vst.msk [vmem:[#allocation3 + $0x4] sm:$0xf] %vm1532, %v1439
      %1535 = vst.msk [vmem:[#allocation3 + $0x8] sm:$0xf] %vm1532, %v1441
      %1536 = vst.msk [vmem:[#allocation3 + $0xc] sm:$0xf] %vm1532, %v1443
      %1537 = vst.msk [vmem:[#allocation3 + $0x10] sm:$0xf] %vm1532, %v1445
      %1538 = vst.msk [vmem:[#allocation3 + $0x14] sm:$0xf] %vm1532, %v1447
      %1539 = vst.msk [vmem:[#allocation3 + $0x18] sm:$0xf] %vm1532, %v1449
      %1540 = vst.msk [vmem:[#allocation3 + $0x1c] sm:$0xf] %vm1532, %v1451
      %1541 = vst.msk [vmem:[#allocation3 + $0x20] sm:$0xf] %vm1532, %v1453
      %1542 = vst.msk [vmem:[#allocation3 + $0x24] sm:$0xf] %vm1532, %v1455
      %1543 = vst.msk [vmem:[#allocation3 + $0x28] sm:$0xf] %vm1532, %v1457
      %1544 = vst.msk [vmem:[#allocation3 + $0x2c] sm:$0xf] %vm1532, %v1459
      %1545 = vst.msk [vmem:[#allocation3 + $0x30] sm:$0xf] %vm1532, %v1461
      %1546 = vst.msk [vmem:[#allocation3 + $0x34] sm:$0xf] %vm1532, %v1463
      %1547 = vst.msk [vmem:[#allocation3 + $0x38] sm:$0xf] %vm1532, %v1465
      %1548 = vst.msk [vmem:[#allocation3 + $0x3c] sm:$0xf] %vm1532, %v1467
      %1549 = vst.msk [vmem:[#allocation3 + $0x40] sm:$0xf] %vm1532, %v1469
      %1550 = vst.msk [vmem:[#allocation3 + $0x44] sm:$0xf] %vm1532, %v1471
      %1551 = vst.msk [vmem:[#allocation3 + $0x48] sm:$0xf] %vm1532, %v1473
      %1552 = vst.msk [vmem:[#allocation3 + $0x4c] sm:$0xf] %vm1532, %v1475
      %1553 = vst.msk [vmem:[#allocation3 + $0x50] sm:$0xf] %vm1532, %v1477
      %1554 = vst.msk [vmem:[#allocation3 + $0x54] sm:$0xf] %vm1532, %v1479
      %1555 = vst.msk [vmem:[#allocation3 + $0x58] sm:$0xf] %vm1532, %v1481
      %1556 = vst.msk [vmem:[#allocation3 + $0x5c] sm:$0xf] %vm1532, %v1483
      %1557 = vst.msk [vmem:[#allocation3 + $0x60] sm:$0xf] %vm1532, %v1485
      %1558 = vst.msk [vmem:[#allocation3 + $0x64] sm:$0xf] %vm1532, %v1487
      %1559 = vst.msk [vmem:[#allocation3 + $0x68] sm:$0xf] %vm1532, %v1489
      %1560 = vst.msk [vmem:[#allocation3 + $0x6c] sm:$0xf] %vm1532, %v1491
      %1561 = vst.msk [vmem:[#allocation3 + $0x70] sm:$0xf] %vm1532, %v1493
      %1562 = vst.msk [vmem:[#allocation3 + $0x74] sm:$0xf] %vm1532, %v1495
      %1563 = vst.msk [vmem:[#allocation3 + $0x78] sm:$0xf] %vm1532, %v1497
      %1564 = vst.msk [vmem:[#allocation3 + $0x7c] sm:$0xf] %vm1532, %v1499
      %v1565 = vld [vmem:[%s535 + $0x2] sm:$0xff]
      %v1566 = vld [vmem:[%s535 + $0xa] sm:$0xff]
      %v1567 = vld [vmem:[%s535 + $0x1a] sm:$0xff]
      %v1568 = vld [vmem:[%s535 + $0x22] sm:$0xff]
      %v1569 = vld [vmem:[%s535 + $0x32] sm:$0xff]
      %v1570 = vld [vmem:[%s535 + $0x3a] sm:$0xff]
      %v1571 = vld [vmem:[%s535 + $0x4a] sm:$0xff]
      %v1572 = vld [vmem:[%s535 + $0x52] sm:$0xff]
      %v1573 = vld [vmem:[%s535 + $0x62] sm:$0xff]
      %v1574 = vld [vmem:[%s535 + $0x6a] sm:$0xff]
      %v1575 = vld [vmem:[%s535 + $0x7a] sm:$0xff]
      %v1576 = vld [vmem:[%s535 + $0x82] sm:$0xff]
      %v1577 = vld [vmem:[%s535 + $0x92] sm:$0xff]
      %v1578 = vld [vmem:[%s535 + $0x9a] sm:$0xff]
      %v1579 = vld [vmem:[%s535 + $0xaa] sm:$0xff]
      %v1580 = vld [vmem:[%s535 + $0xb2] sm:$0xff]
      %v1581 = vld [vmem:[%s535 + $0xc2] sm:$0xff]
      %v1582 = vld [vmem:[%s535 + $0xca] sm:$0xff]
      %v1583 = vld [vmem:[%s535 + $0xda] sm:$0xff]
      %v1584 = vld [vmem:[%s535 + $0xe2] sm:$0xff]
      %v1585 = vld [vmem:[%s535 + $0xf2] sm:$0xff]
      %v1586 = vld [vmem:[%s535 + $0xfa] sm:$0xff]
      %v1587 = vld [vmem:[%s535 + $0x10a] sm:$0xff]
      %v1588 = vld [vmem:[%s535 + $0x112] sm:$0xff]
      %v1589 = vld [vmem:[%s535 + $0x122] sm:$0xff]
      %v1590 = vld [vmem:[%s535 + $0x12a] sm:$0xff]
      %v1591 = vld [vmem:[%s535 + $0x13a] sm:$0xff]
      %v1592 = vld [vmem:[%s535 + $0x142] sm:$0xff]
      %v1593 = vld [vmem:[%s535 + $0x152] sm:$0xff]
      %v1594 = vld [vmem:[%s535 + $0x15a] sm:$0xff]
      %v1595 = vld [vmem:[%s535 + $0x16a] sm:$0xff]
      %v1596 = vld [vmem:[%s535 + $0x172] sm:$0xff]
      %v1597 = vpack.c.bf16 %v1565, %v1565
      %v1598 = vpack.c.bf16 %v1566, %v1566
      %v1599 = vpack.c.bf16 %v1567, %v1567
      %v1600 = vpack.c.bf16 %v1568, %v1568
      %v1601 = vpack.c.bf16 %v1569, %v1569
      %v1602 = vpack.c.bf16 %v1570, %v1570
      %v1603 = vpack.c.bf16 %v1571, %v1571
      %v1604 = vpack.c.bf16 %v1572, %v1572
      %v1605 = vpack.c.bf16 %v1573, %v1573
      %v1606 = vpack.c.bf16 %v1574, %v1574
      %v1607 = vpack.c.bf16 %v1575, %v1575
      %v1608 = vpack.c.bf16 %v1576, %v1576
      %v1609 = vpack.c.bf16 %v1577, %v1577
      %v1610 = vpack.c.bf16 %v1578, %v1578
      %v1611 = vpack.c.bf16 %v1579, %v1579
      %v1612 = vpack.c.bf16 %v1580, %v1580
      %v1613 = vpack.c.bf16 %v1581, %v1581
      %v1614 = vpack.c.bf16 %v1582, %v1582
      %v1615 = vpack.c.bf16 %v1583, %v1583
      %v1616 = vpack.c.bf16 %v1584, %v1584
      %v1617 = vpack.c.bf16 %v1585, %v1585
      %v1618 = vpack.c.bf16 %v1586, %v1586
      %v1619 = vpack.c.bf16 %v1587, %v1587
      %v1620 = vpack.c.bf16 %v1588, %v1588
      %v1621 = vpack.c.bf16 %v1589, %v1589
      %v1622 = vpack.c.bf16 %v1590, %v1590
      %v1623 = vpack.c.bf16 %v1591, %v1591
      %v1624 = vpack.c.bf16 %v1592, %v1592
      %v1625 = vpack.c.bf16 %v1593, %v1593
      %v1626 = vpack.c.bf16 %v1594, %v1594
      %v1627 = vpack.c.bf16 %v1595, %v1595
      %v1628 = vpack.c.bf16 %v1596, %v1596
      %1661 = vrot.lane.b32.xlu0 %v1597, 20
      %v1662 = vpop.permute.xlu0 %1661
      %1663 = vrot.lane.b32.xlu0 %v1598, 20
      %v1664 = vpop.permute.xlu0 %1663
      %1665 = vrot.lane.b32.xlu0 %v1599, 20
      %v1666 = vpop.permute.xlu0 %1665
      %1667 = vrot.lane.b32.xlu0 %v1600, 20
      %v1668 = vpop.permute.xlu0 %1667
      %1669 = vrot.lane.b32.xlu0 %v1601, 20
      %v1670 = vpop.permute.xlu0 %1669
      %1671 = vrot.lane.b32.xlu0 %v1602, 20
      %v1672 = vpop.permute.xlu0 %1671
      %1673 = vrot.lane.b32.xlu0 %v1603, 20
      %v1674 = vpop.permute.xlu0 %1673
      %1675 = vrot.lane.b32.xlu0 %v1604, 20
      %v1676 = vpop.permute.xlu0 %1675
      %1677 = vrot.lane.b32.xlu0 %v1605, 20
      %v1678 = vpop.permute.xlu0 %1677
      %1679 = vrot.lane.b32.xlu0 %v1606, 20
      %v1680 = vpop.permute.xlu0 %1679
      %1681 = vrot.lane.b32.xlu0 %v1607, 20
      %v1682 = vpop.permute.xlu0 %1681
      %1683 = vrot.lane.b32.xlu0 %v1608, 20
      %v1684 = vpop.permute.xlu0 %1683
      %1685 = vrot.lane.b32.xlu0 %v1609, 20
      %v1686 = vpop.permute.xlu0 %1685
      %1687 = vrot.lane.b32.xlu0 %v1610, 20
      %v1688 = vpop.permute.xlu0 %1687
      %1689 = vrot.lane.b32.xlu0 %v1611, 20
      %v1690 = vpop.permute.xlu0 %1689
      %1691 = vrot.lane.b32.xlu0 %v1612, 20
      %v1692 = vpop.permute.xlu0 %1691
      %1693 = vrot.lane.b32.xlu0 %v1613, 20
      %v1694 = vpop.permute.xlu0 %1693
      %1695 = vrot.lane.b32.xlu0 %v1614, 20
      %v1696 = vpop.permute.xlu0 %1695
      %1697 = vrot.lane.b32.xlu0 %v1615, 20
      %v1698 = vpop.permute.xlu0 %1697
      %1699 = vrot.lane.b32.xlu0 %v1616, 20
      %v1700 = vpop.permute.xlu0 %1699
      %1701 = vrot.lane.b32.xlu0 %v1617, 20
      %v1702 = vpop.permute.xlu0 %1701
      %1703 = vrot.lane.b32.xlu0 %v1618, 20
      %v1704 = vpop.permute.xlu0 %1703
      %1705 = vrot.lane.b32.xlu0 %v1619, 20
      %v1706 = vpop.permute.xlu0 %1705
      %1707 = vrot.lane.b32.xlu0 %v1620, 20
      %v1708 = vpop.permute.xlu0 %1707
      %1709 = vrot.lane.b32.xlu0 %v1621, 20
      %v1710 = vpop.permute.xlu0 %1709
      %1711 = vrot.lane.b32.xlu0 %v1622, 20
      %v1712 = vpop.permute.xlu0 %1711
      %1713 = vrot.lane.b32.xlu0 %v1623, 20
      %v1714 = vpop.permute.xlu0 %1713
      %1715 = vrot.lane.b32.xlu0 %v1624, 20
      %v1716 = vpop.permute.xlu0 %1715
      %1717 = vrot.lane.b32.xlu0 %v1625, 20
      %v1718 = vpop.permute.xlu0 %1717
      %1719 = vrot.lane.b32.xlu0 %v1626, 20
      %v1720 = vpop.permute.xlu0 %1719
      %1721 = vrot.lane.b32.xlu0 %v1627, 20
      %v1722 = vpop.permute.xlu0 %1721
      %1723 = vrot.lane.b32.xlu0 %v1628, 20
      %v1724 = vpop.permute.xlu0 %1723
      %vm1757 = vcmask 191648
      %1758 = vst.msk [vmem:[#allocation3] sm:$0xf] %vm1757, %v1662
      %1759 = vst.msk [vmem:[#allocation3 + $0x4] sm:$0xf] %vm1757, %v1664
      %1760 = vst.msk [vmem:[#allocation3 + $0x8] sm:$0xf] %vm1757, %v1666
      %1761 = vst.msk [vmem:[#allocation3 + $0xc] sm:$0xf] %vm1757, %v1668
      %1762 = vst.msk [vmem:[#allocation3 + $0x10] sm:$0xf] %vm1757, %v1670
      %1763 = vst.msk [vmem:[#allocation3 + $0x14] sm:$0xf] %vm1757, %v1672
      %1764 = vst.msk [vmem:[#allocation3 + $0x18] sm:$0xf] %vm1757, %v1674
      %1765 = vst.msk [vmem:[#allocation3 + $0x1c] sm:$0xf] %vm1757, %v1676
      %1766 = vst.msk [vmem:[#allocation3 + $0x20] sm:$0xf] %vm1757, %v1678
      %1767 = vst.msk [vmem:[#allocation3 + $0x24] sm:$0xf] %vm1757, %v1680
      %1768 = vst.msk [vmem:[#allocation3 + $0x28] sm:$0xf] %vm1757, %v1682
      %1769 = vst.msk [vmem:[#allocation3 + $0x2c] sm:$0xf] %vm1757, %v1684
      %1770 = vst.msk [vmem:[#allocation3 + $0x30] sm:$0xf] %vm1757, %v1686
      %1771 = vst.msk [vmem:[#allocation3 + $0x34] sm:$0xf] %vm1757, %v1688
      %1772 = vst.msk [vmem:[#allocation3 + $0x38] sm:$0xf] %vm1757, %v1690
      %1773 = vst.msk [vmem:[#allocation3 + $0x3c] sm:$0xf] %vm1757, %v1692
      %1774 = vst.msk [vmem:[#allocation3 + $0x40] sm:$0xf] %vm1757, %v1694
      %1775 = vst.msk [vmem:[#allocation3 + $0x44] sm:$0xf] %vm1757, %v1696
      %1776 = vst.msk [vmem:[#allocation3 + $0x48] sm:$0xf] %vm1757, %v1698
      %1777 = vst.msk [vmem:[#allocation3 + $0x4c] sm:$0xf] %vm1757, %v1700
      %1778 = vst.msk [vmem:[#allocation3 + $0x50] sm:$0xf] %vm1757, %v1702
      %1779 = vst.msk [vmem:[#allocation3 + $0x54] sm:$0xf] %vm1757, %v1704
      %1780 = vst.msk [vmem:[#allocation3 + $0x58] sm:$0xf] %vm1757, %v1706
      %1781 = vst.msk [vmem:[#allocation3 + $0x5c] sm:$0xf] %vm1757, %v1708
      %1782 = vst.msk [vmem:[#allocation3 + $0x60] sm:$0xf] %vm1757, %v1710
      %1783 = vst.msk [vmem:[#allocation3 + $0x64] sm:$0xf] %vm1757, %v1712
      %1784 = vst.msk [vmem:[#allocation3 + $0x68] sm:$0xf] %vm1757, %v1714
      %1785 = vst.msk [vmem:[#allocation3 + $0x6c] sm:$0xf] %vm1757, %v1716
      %1786 = vst.msk [vmem:[#allocation3 + $0x70] sm:$0xf] %vm1757, %v1718
      %1787 = vst.msk [vmem:[#allocation3 + $0x74] sm:$0xf] %vm1757, %v1720
      %1788 = vst.msk [vmem:[#allocation3 + $0x78] sm:$0xf] %vm1757, %v1722
      %1789 = vst.msk [vmem:[#allocation3 + $0x7c] sm:$0xf] %vm1757, %v1724
      %s1790 = scalar_lea.vmem [#allocation2], 48
      %v1791 = vld [vmem:[%s1790] sm:$0xff]
      %v1792 = vld [vmem:[%s1790 + $0x8] sm:$0xff]
      %v1793 = vld [vmem:[%s1790 + $0x18] sm:$0xff]
      %v1794 = vld [vmem:[%s1790 + $0x20] sm:$0xff]
      %v1795 = vld [vmem:[%s1790 + $0x30] sm:$0xff]
      %v1796 = vld [vmem:[%s1790 + $0x38] sm:$0xff]
      %v1797 = vld [vmem:[%s1790 + $0x48] sm:$0xff]
      %v1798 = vld [vmem:[%s1790 + $0x50] sm:$0xff]
      %v1799 = vld [vmem:[%s1790 + $0x60] sm:$0xff]
      %v1800 = vld [vmem:[%s1790 + $0x68] sm:$0xff]
      %v1801 = vld [vmem:[%s1790 + $0x78] sm:$0xff]
      %v1802 = vld [vmem:[%s1790 + $0x80] sm:$0xff]
      %v1803 = vld [vmem:[%s1790 + $0x90] sm:$0xff]
      %v1804 = vld [vmem:[%s1790 + $0x98] sm:$0xff]
      %v1805 = vld [vmem:[%s1790 + $0xa8] sm:$0xff]
      %v1806 = vld [vmem:[%s1790 + $0xb0] sm:$0xff]
      %v1807 = vld [vmem:[%s1790 + $0xc0] sm:$0xff]
      %v1808 = vld [vmem:[%s1790 + $0xc8] sm:$0xff]
      %v1809 = vld [vmem:[%s1790 + $0xd8] sm:$0xff]
      %v1810 = vld [vmem:[%s1790 + $0xe0] sm:$0xff]
      %v1811 = vld [vmem:[%s1790 + $0xf0] sm:$0xff]
      %v1812 = vld [vmem:[%s1790 + $0xf8] sm:$0xff]
      %v1813 = vld [vmem:[%s1790 + $0x108] sm:$0xff]
      %v1814 = vld [vmem:[%s1790 + $0x110] sm:$0xff]
      %v1815 = vld [vmem:[%s1790 + $0x120] sm:$0xff]
      %v1816 = vld [vmem:[%s1790 + $0x128] sm:$0xff]
      %v1817 = vld [vmem:[%s1790 + $0x138] sm:$0xff]
      %v1818 = vld [vmem:[%s1790 + $0x140] sm:$0xff]
      %v1819 = vld [vmem:[%s1790 + $0x150] sm:$0xff]
      %v1820 = vld [vmem:[%s1790 + $0x158] sm:$0xff]
      %v1821 = vld [vmem:[%s1790 + $0x168] sm:$0xff]
      %v1822 = vld [vmem:[%s1790 + $0x170] sm:$0xff]
      %v1823 = vpack.c.bf16 %v1791, %v1791
      %v1824 = vpack.c.bf16 %v1792, %v1792
      %v1825 = vpack.c.bf16 %v1793, %v1793
      %v1826 = vpack.c.bf16 %v1794, %v1794
      %v1827 = vpack.c.bf16 %v1795, %v1795
      %v1828 = vpack.c.bf16 %v1796, %v1796
      %v1829 = vpack.c.bf16 %v1797, %v1797
      %v1830 = vpack.c.bf16 %v1798, %v1798
      %v1831 = vpack.c.bf16 %v1799, %v1799
      %v1832 = vpack.c.bf16 %v1800, %v1800
      %v1833 = vpack.c.bf16 %v1801, %v1801
      %v1834 = vpack.c.bf16 %v1802, %v1802
      %v1835 = vpack.c.bf16 %v1803, %v1803
      %v1836 = vpack.c.bf16 %v1804, %v1804
      %v1837 = vpack.c.bf16 %v1805, %v1805
      %v1838 = vpack.c.bf16 %v1806, %v1806
      %v1839 = vpack.c.bf16 %v1807, %v1807
      %v1840 = vpack.c.bf16 %v1808, %v1808
      %v1841 = vpack.c.bf16 %v1809, %v1809
      %v1842 = vpack.c.bf16 %v1810, %v1810
      %v1843 = vpack.c.bf16 %v1811, %v1811
      %v1844 = vpack.c.bf16 %v1812, %v1812
      %v1845 = vpack.c.bf16 %v1813, %v1813
      %v1846 = vpack.c.bf16 %v1814, %v1814
      %v1847 = vpack.c.bf16 %v1815, %v1815
      %v1848 = vpack.c.bf16 %v1816, %v1816
      %v1849 = vpack.c.bf16 %v1817, %v1817
      %v1850 = vpack.c.bf16 %v1818, %v1818
      %v1851 = vpack.c.bf16 %v1819, %v1819
      %v1852 = vpack.c.bf16 %v1820, %v1820
      %v1853 = vpack.c.bf16 %v1821, %v1821
      %v1854 = vpack.c.bf16 %v1822, %v1822
      %1887 = vrot.lane.b32.xlu0 %v1823, 24
      %v1888 = vpop.permute.xlu0 %1887
      %1889 = vrot.lane.b32.xlu0 %v1824, 24
      %v1890 = vpop.permute.xlu0 %1889
      %1891 = vrot.lane.b32.xlu0 %v1825, 24
      %v1892 = vpop.permute.xlu0 %1891
      %1893 = vrot.lane.b32.xlu0 %v1826, 24
      %v1894 = vpop.permute.xlu0 %1893
      %1895 = vrot.lane.b32.xlu0 %v1827, 24
      %v1896 = vpop.permute.xlu0 %1895
      %1897 = vrot.lane.b32.xlu0 %v1828, 24
      %v1898 = vpop.permute.xlu0 %1897
      %1899 = vrot.lane.b32.xlu0 %v1829, 24
      %v1900 = vpop.permute.xlu0 %1899
      %1901 = vrot.lane.b32.xlu0 %v1830, 24
      %v1902 = vpop.permute.xlu0 %1901
      %1903 = vrot.lane.b32.xlu0 %v1831, 24
      %v1904 = vpop.permute.xlu0 %1903
      %1905 = vrot.lane.b32.xlu0 %v1832, 24
      %v1906 = vpop.permute.xlu0 %1905
      %1907 = vrot.lane.b32.xlu0 %v1833, 24
      %v1908 = vpop.permute.xlu0 %1907
      %1909 = vrot.lane.b32.xlu0 %v1834, 24
      %v1910 = vpop.permute.xlu0 %1909
      %1911 = vrot.lane.b32.xlu0 %v1835, 24
      %v1912 = vpop.permute.xlu0 %1911
      %1913 = vrot.lane.b32.xlu0 %v1836, 24
      %v1914 = vpop.permute.xlu0 %1913
      %1915 = vrot.lane.b32.xlu0 %v1837, 24
      %v1916 = vpop.permute.xlu0 %1915
      %1917 = vrot.lane.b32.xlu0 %v1838, 24
      %v1918 = vpop.permute.xlu0 %1917
      %1919 = vrot.lane.b32.xlu0 %v1839, 24
      %v1920 = vpop.permute.xlu0 %1919
      %1921 = vrot.lane.b32.xlu0 %v1840, 24
      %v1922 = vpop.permute.xlu0 %1921
      %1923 = vrot.lane.b32.xlu0 %v1841, 24
      %v1924 = vpop.permute.xlu0 %1923
      %1925 = vrot.lane.b32.xlu0 %v1842, 24
      %v1926 = vpop.permute.xlu0 %1925
      %1927 = vrot.lane.b32.xlu0 %v1843, 24
      %v1928 = vpop.permute.xlu0 %1927
      %1929 = vrot.lane.b32.xlu0 %v1844, 24
      %v1930 = vpop.permute.xlu0 %1929
      %1931 = vrot.lane.b32.xlu0 %v1845, 24
      %v1932 = vpop.permute.xlu0 %1931
      %1933 = vrot.lane.b32.xlu0 %v1846, 24
      %v1934 = vpop.permute.xlu0 %1933
      %1935 = vrot.lane.b32.xlu0 %v1847, 24
      %v1936 = vpop.permute.xlu0 %1935
      %1937 = vrot.lane.b32.xlu0 %v1848, 24
      %v1938 = vpop.permute.xlu0 %1937
      %1939 = vrot.lane.b32.xlu0 %v1849, 24
      %v1940 = vpop.permute.xlu0 %1939
      %1941 = vrot.lane.b32.xlu0 %v1850, 24
      %v1942 = vpop.permute.xlu0 %1941
      %1943 = vrot.lane.b32.xlu0 %v1851, 24
      %v1944 = vpop.permute.xlu0 %1943
      %1945 = vrot.lane.b32.xlu0 %v1852, 24
      %v1946 = vpop.permute.xlu0 %1945
      %1947 = vrot.lane.b32.xlu0 %v1853, 24
      %v1948 = vpop.permute.xlu0 %1947
      %1949 = vrot.lane.b32.xlu0 %v1854, 24
      %v1950 = vpop.permute.xlu0 %1949
      %vm1983 = vcmask 224448
      %1984 = vst.msk [vmem:[#allocation3] sm:$0xf] %vm1983, %v1888
      %1985 = vst.msk [vmem:[#allocation3 + $0x4] sm:$0xf] %vm1983, %v1890
      %1986 = vst.msk [vmem:[#allocation3 + $0x8] sm:$0xf] %vm1983, %v1892
      %1987 = vst.msk [vmem:[#allocation3 + $0xc] sm:$0xf] %vm1983, %v1894
      %1988 = vst.msk [vmem:[#allocation3 + $0x10] sm:$0xf] %vm1983, %v1896
      %1989 = vst.msk [vmem:[#allocation3 + $0x14] sm:$0xf] %vm1983, %v1898
      %1990 = vst.msk [vmem:[#allocation3 + $0x18] sm:$0xf] %vm1983, %v1900
      %1991 = vst.msk [vmem:[#allocation3 + $0x1c] sm:$0xf] %vm1983, %v1902
      %1992 = vst.msk [vmem:[#allocation3 + $0x20] sm:$0xf] %vm1983, %v1904
      %1993 = vst.msk [vmem:[#allocation3 + $0x24] sm:$0xf] %vm1983, %v1906
      %1994 = vst.msk [vmem:[#allocation3 + $0x28] sm:$0xf] %vm1983, %v1908
      %1995 = vst.msk [vmem:[#allocation3 + $0x2c] sm:$0xf] %vm1983, %v1910
      %1996 = vst.msk [vmem:[#allocation3 + $0x30] sm:$0xf] %vm1983, %v1912
      %1997 = vst.msk [vmem:[#allocation3 + $0x34] sm:$0xf] %vm1983, %v1914
      %1998 = vst.msk [vmem:[#allocation3 + $0x38] sm:$0xf] %vm1983, %v1916
      %1999 = vst.msk [vmem:[#allocation3 + $0x3c] sm:$0xf] %vm1983, %v1918
      %2000 = vst.msk [vmem:[#allocation3 + $0x40] sm:$0xf] %vm1983, %v1920
      %2001 = vst.msk [vmem:[#allocation3 + $0x44] sm:$0xf] %vm1983, %v1922
      %2002 = vst.msk [vmem:[#allocation3 + $0x48] sm:$0xf] %vm1983, %v1924
      %2003 = vst.msk [vmem:[#allocation3 + $0x4c] sm:$0xf] %vm1983, %v1926
      %2004 = vst.msk [vmem:[#allocation3 + $0x50] sm:$0xf] %vm1983, %v1928
      %2005 = vst.msk [vmem:[#allocation3 + $0x54] sm:$0xf] %vm1983, %v1930
      %2006 = vst.msk [vmem:[#allocation3 + $0x58] sm:$0xf] %vm1983, %v1932
      %2007 = vst.msk [vmem:[#allocation3 + $0x5c] sm:$0xf] %vm1983, %v1934
      %2008 = vst.msk [vmem:[#allocation3 + $0x60] sm:$0xf] %vm1983, %v1936
      %2009 = vst.msk [vmem:[#allocation3 + $0x64] sm:$0xf] %vm1983, %v1938
      %2010 = vst.msk [vmem:[#allocation3 + $0x68] sm:$0xf] %vm1983, %v1940
      %2011 = vst.msk [vmem:[#allocation3 + $0x6c] sm:$0xf] %vm1983, %v1942
      %2012 = vst.msk [vmem:[#allocation3 + $0x70] sm:$0xf] %vm1983, %v1944
      %2013 = vst.msk [vmem:[#allocation3 + $0x74] sm:$0xf] %vm1983, %v1946
      %2014 = vst.msk [vmem:[#allocation3 + $0x78] sm:$0xf] %vm1983, %v1948
      %2015 = vst.msk [vmem:[#allocation3 + $0x7c] sm:$0xf] %vm1983, %v1950
      %v2016 = vld [vmem:[%s1790 + $0x1] sm:$0xff]
      %v2017 = vld [vmem:[%s1790 + $0x9] sm:$0xff]
      %v2018 = vld [vmem:[%s1790 + $0x19] sm:$0xff]
      %v2019 = vld [vmem:[%s1790 + $0x21] sm:$0xff]
      %v2020 = vld [vmem:[%s1790 + $0x31] sm:$0xff]
      %v2021 = vld [vmem:[%s1790 + $0x39] sm:$0xff]
      %v2022 = vld [vmem:[%s1790 + $0x49] sm:$0xff]
      %v2023 = vld [vmem:[%s1790 + $0x51] sm:$0xff]
      %v2024 = vld [vmem:[%s1790 + $0x61] sm:$0xff]
      %v2025 = vld [vmem:[%s1790 + $0x69] sm:$0xff]
      %v2026 = vld [vmem:[%s1790 + $0x79] sm:$0xff]
      %v2027 = vld [vmem:[%s1790 + $0x81] sm:$0xff]
      %v2028 = vld [vmem:[%s1790 + $0x91] sm:$0xff]
      %v2029 = vld [vmem:[%s1790 + $0x99] sm:$0xff]
      %v2030 = vld [vmem:[%s1790 + $0xa9] sm:$0xff]
      %v2031 = vld [vmem:[%s1790 + $0xb1] sm:$0xff]
      %v2032 = vld [vmem:[%s1790 + $0xc1] sm:$0xff]
      %v2033 = vld [vmem:[%s1790 + $0xc9] sm:$0xff]
      %v2034 = vld [vmem:[%s1790 + $0xd9] sm:$0xff]
      %v2035 = vld [vmem:[%s1790 + $0xe1] sm:$0xff]
      %v2036 = vld [vmem:[%s1790 + $0xf1] sm:$0xff]
      %v2037 = vld [vmem:[%s1790 + $0xf9] sm:$0xff]
      %v2038 = vld [vmem:[%s1790 + $0x109] sm:$0xff]
      %v2039 = vld [vmem:[%s1790 + $0x111] sm:$0xff]
      %v2040 = vld [vmem:[%s1790 + $0x121] sm:$0xff]
      %v2041 = vld [vmem:[%s1790 + $0x129] sm:$0xff]
      %v2042 = vld [vmem:[%s1790 + $0x139] sm:$0xff]
      %v2043 = vld [vmem:[%s1790 + $0x141] sm:$0xff]
      %v2044 = vld [vmem:[%s1790 + $0x151] sm:$0xff]
      %v2045 = vld [vmem:[%s1790 + $0x159] sm:$0xff]
      %v2046 = vld [vmem:[%s1790 + $0x169] sm:$0xff]
      %v2047 = vld [vmem:[%s1790 + $0x171] sm:$0xff]
      %v2048 = vpack.c.bf16 %v2016, %v2016
      %v2049 = vpack.c.bf16 %v2017, %v2017
      %v2050 = vpack.c.bf16 %v2018, %v2018
      %v2051 = vpack.c.bf16 %v2019, %v2019
      %v2052 = vpack.c.bf16 %v2020, %v2020
      %v2053 = vpack.c.bf16 %v2021, %v2021
      %v2054 = vpack.c.bf16 %v2022, %v2022
      %v2055 = vpack.c.bf16 %v2023, %v2023
      %v2056 = vpack.c.bf16 %v2024, %v2024
      %v2057 = vpack.c.bf16 %v2025, %v2025
      %v2058 = vpack.c.bf16 %v2026, %v2026
      %v2059 = vpack.c.bf16 %v2027, %v2027
      %v2060 = vpack.c.bf16 %v2028, %v2028
      %v2061 = vpack.c.bf16 %v2029, %v2029
      %v2062 = vpack.c.bf16 %v2030, %v2030
      %v2063 = vpack.c.bf16 %v2031, %v2031
      %v2064 = vpack.c.bf16 %v2032, %v2032
      %v2065 = vpack.c.bf16 %v2033, %v2033
      %v2066 = vpack.c.bf16 %v2034, %v2034
      %v2067 = vpack.c.bf16 %v2035, %v2035
      %v2068 = vpack.c.bf16 %v2036, %v2036
      %v2069 = vpack.c.bf16 %v2037, %v2037
      %v2070 = vpack.c.bf16 %v2038, %v2038
      %v2071 = vpack.c.bf16 %v2039, %v2039
      %v2072 = vpack.c.bf16 %v2040, %v2040
      %v2073 = vpack.c.bf16 %v2041, %v2041
      %v2074 = vpack.c.bf16 %v2042, %v2042
      %v2075 = vpack.c.bf16 %v2043, %v2043
      %v2076 = vpack.c.bf16 %v2044, %v2044
      %v2077 = vpack.c.bf16 %v2045, %v2045
      %v2078 = vpack.c.bf16 %v2046, %v2046
      %v2079 = vpack.c.bf16 %v2047, %v2047
      %2112 = vrot.lane.b32.xlu0 %v2048, 28
      %v2113 = vpop.permute.xlu0 %2112
      %2114 = vrot.lane.b32.xlu0 %v2049, 28
      %v2115 = vpop.permute.xlu0 %2114
      %2116 = vrot.lane.b32.xlu0 %v2050, 28
      %v2117 = vpop.permute.xlu0 %2116
      %2118 = vrot.lane.b32.xlu0 %v2051, 28
      %v2119 = vpop.permute.xlu0 %2118
      %2120 = vrot.lane.b32.xlu0 %v2052, 28
      %v2121 = vpop.permute.xlu0 %2120
      %2122 = vrot.lane.b32.xlu0 %v2053, 28
      %v2123 = vpop.permute.xlu0 %2122
      %2124 = vrot.lane.b32.xlu0 %v2054, 28
      %v2125 = vpop.permute.xlu0 %2124
      %2126 = vrot.lane.b32.xlu0 %v2055, 28
      %v2127 = vpop.permute.xlu0 %2126
      %2128 = vrot.lane.b32.xlu0 %v2056, 28
      %v2129 = vpop.permute.xlu0 %2128
      %2130 = vrot.lane.b32.xlu0 %v2057, 28
      %v2131 = vpop.permute.xlu0 %2130
      %2132 = vrot.lane.b32.xlu0 %v2058, 28
      %v2133 = vpop.permute.xlu0 %2132
      %2134 = vrot.lane.b32.xlu0 %v2059, 28
      %v2135 = vpop.permute.xlu0 %2134
      %2136 = vrot.lane.b32.xlu0 %v2060, 28
      %v2137 = vpop.permute.xlu0 %2136
      %2138 = vrot.lane.b32.xlu0 %v2061, 28
      %v2139 = vpop.permute.xlu0 %2138
      %2140 = vrot.lane.b32.xlu0 %v2062, 28
      %v2141 = vpop.permute.xlu0 %2140
      %2142 = vrot.lane.b32.xlu0 %v2063, 28
      %v2143 = vpop.permute.xlu0 %2142
      %2144 = vrot.lane.b32.xlu0 %v2064, 28
      %v2145 = vpop.permute.xlu0 %2144
      %2146 = vrot.lane.b32.xlu0 %v2065, 28
      %v2147 = vpop.permute.xlu0 %2146
      %2148 = vrot.lane.b32.xlu0 %v2066, 28
      %v2149 = vpop.permute.xlu0 %2148
      %2150 = vrot.lane.b32.xlu0 %v2067, 28
      %v2151 = vpop.permute.xlu0 %2150
      %2152 = vrot.lane.b32.xlu0 %v2068, 28
      %v2153 = vpop.permute.xlu0 %2152
      %2154 = vrot.lane.b32.xlu0 %v2069, 28
      %v2155 = vpop.permute.xlu0 %2154
      %2156 = vrot.lane.b32.xlu0 %v2070, 28
      %v2157 = vpop.permute.xlu0 %2156
      %2158 = vrot.lane.b32.xlu0 %v2071, 28
      %v2159 = vpop.permute.xlu0 %2158
      %2160 = vrot.lane.b32.xlu0 %v2072, 28
      %v2161 = vpop.permute.xlu0 %2160
      %2162 = vrot.lane.b32.xlu0 %v2073, 28
      %v2163 = vpop.permute.xlu0 %2162
      %2164 = vrot.lane.b32.xlu0 %v2074, 28
      %v2165 = vpop.permute.xlu0 %2164
      %2166 = vrot.lane.b32.xlu0 %v2075, 28
      %v2167 = vpop.permute.xlu0 %2166
      %2168 = vrot.lane.b32.xlu0 %v2076, 28
      %v2169 = vpop.permute.xlu0 %2168
      %2170 = vrot.lane.b32.xlu0 %v2077, 28
      %v2171 = vpop.permute.xlu0 %2170
      %2172 = vrot.lane.b32.xlu0 %v2078, 28
      %v2173 = vpop.permute.xlu0 %2172
      %2174 = vrot.lane.b32.xlu0 %v2079, 28
      %v2175 = vpop.permute.xlu0 %2174
      %vm2208 = vcmask 257248
      %2209 = vst.msk [vmem:[#allocation3] sm:$0xf] %vm2208, %v2113
      %2210 = vst.msk [vmem:[#allocation3 + $0x4] sm:$0xf] %vm2208, %v2115
      %2211 = vst.msk [vmem:[#allocation3 + $0x8] sm:$0xf] %vm2208, %v2117
      %2212 = vst.msk [vmem:[#allocation3 + $0xc] sm:$0xf] %vm2208, %v2119
      %2213 = vst.msk [vmem:[#allocation3 + $0x10] sm:$0xf] %vm2208, %v2121
      %2214 = vst.msk [vmem:[#allocation3 + $0x14] sm:$0xf] %vm2208, %v2123
      %2215 = vst.msk [vmem:[#allocation3 + $0x18] sm:$0xf] %vm2208, %v2125
      %2216 = vst.msk [vmem:[#allocation3 + $0x1c] sm:$0xf] %vm2208, %v2127
      %2217 = vst.msk [vmem:[#allocation3 + $0x20] sm:$0xf] %vm2208, %v2129
      %2218 = vst.msk [vmem:[#allocation3 + $0x24] sm:$0xf] %vm2208, %v2131
      %2219 = vst.msk [vmem:[#allocation3 + $0x28] sm:$0xf] %vm2208, %v2133
      %2220 = vst.msk [vmem:[#allocation3 + $0x2c] sm:$0xf] %vm2208, %v2135
      %2221 = vst.msk [vmem:[#allocation3 + $0x30] sm:$0xf] %vm2208, %v2137
      %2222 = vst.msk [vmem:[#allocation3 + $0x34] sm:$0xf] %vm2208, %v2139
      %2223 = vst.msk [vmem:[#allocation3 + $0x38] sm:$0xf] %vm2208, %v2141
      %2224 = vst.msk [vmem:[#allocation3 + $0x3c] sm:$0xf] %vm2208, %v2143
      %2225 = vst.msk [vmem:[#allocation3 + $0x40] sm:$0xf] %vm2208, %v2145
      %2226 = vst.msk [vmem:[#allocation3 + $0x44] sm:$0xf] %vm2208, %v2147
      %2227 = vst.msk [vmem:[#allocation3 + $0x48] sm:$0xf] %vm2208, %v2149
      %2228 = vst.msk [vmem:[#allocation3 + $0x4c] sm:$0xf] %vm2208, %v2151
      %2229 = vst.msk [vmem:[#allocation3 + $0x50] sm:$0xf] %vm2208, %v2153
      %2230 = vst.msk [vmem:[#allocation3 + $0x54] sm:$0xf] %vm2208, %v2155
      %2231 = vst.msk [vmem:[#allocation3 + $0x58] sm:$0xf] %vm2208, %v2157
      %2232 = vst.msk [vmem:[#allocation3 + $0x5c] sm:$0xf] %vm2208, %v2159
      %2233 = vst.msk [vmem:[#allocation3 + $0x60] sm:$0xf] %vm2208, %v2161
      %2234 = vst.msk [vmem:[#allocation3 + $0x64] sm:$0xf] %vm2208, %v2163
      %2235 = vst.msk [vmem:[#allocation3 + $0x68] sm:$0xf] %vm2208, %v2165
      %2236 = vst.msk [vmem:[#allocation3 + $0x6c] sm:$0xf] %vm2208, %v2167
      %2237 = vst.msk [vmem:[#allocation3 + $0x70] sm:$0xf] %vm2208, %v2169
      %2238 = vst.msk [vmem:[#allocation3 + $0x74] sm:$0xf] %vm2208, %v2171
      %2239 = vst.msk [vmem:[#allocation3 + $0x78] sm:$0xf] %vm2208, %v2173
      %2240 = vst.msk [vmem:[#allocation3 + $0x7c] sm:$0xf] %vm2208, %v2175
      %v2241 = vld [vmem:[%s1790 + $0x2] sm:$0xff]
      %v2242 = vld [vmem:[%s1790 + $0xa] sm:$0xff]
      %v2243 = vld [vmem:[%s1790 + $0x1a] sm:$0xff]
      %v2244 = vld [vmem:[%s1790 + $0x22] sm:$0xff]
      %v2245 = vld [vmem:[%s1790 + $0x32] sm:$0xff]
      %v2246 = vld [vmem:[%s1790 + $0x3a] sm:$0xff]
      %v2247 = vld [vmem:[%s1790 + $0x4a] sm:$0xff]
      %v2248 = vld [vmem:[%s1790 + $0x52] sm:$0xff]
      %v2249 = vld [vmem:[%s1790 + $0x62] sm:$0xff]
      %v2250 = vld [vmem:[%s1790 + $0x6a] sm:$0xff]
      %v2251 = vld [vmem:[%s1790 + $0x7a] sm:$0xff]
      %v2252 = vld [vmem:[%s1790 + $0x82] sm:$0xff]
      %v2253 = vld [vmem:[%s1790 + $0x92] sm:$0xff]
      %v2254 = vld [vmem:[%s1790 + $0x9a] sm:$0xff]
      %v2255 = vld [vmem:[%s1790 + $0xaa] sm:$0xff]
      %v2256 = vld [vmem:[%s1790 + $0xb2] sm:$0xff]
      %v2257 = vld [vmem:[%s1790 + $0xc2] sm:$0xff]
      %v2258 = vld [vmem:[%s1790 + $0xca] sm:$0xff]
      %v2259 = vld [vmem:[%s1790 + $0xda] sm:$0xff]
      %v2260 = vld [vmem:[%s1790 + $0xe2] sm:$0xff]
      %v2261 = vld [vmem:[%s1790 + $0xf2] sm:$0xff]
      %v2262 = vld [vmem:[%s1790 + $0xfa] sm:$0xff]
      %v2263 = vld [vmem:[%s1790 + $0x10a] sm:$0xff]
      %v2264 = vld [vmem:[%s1790 + $0x112] sm:$0xff]
      %v2265 = vld [vmem:[%s1790 + $0x122] sm:$0xff]
      %v2266 = vld [vmem:[%s1790 + $0x12a] sm:$0xff]
      %v2267 = vld [vmem:[%s1790 + $0x13a] sm:$0xff]
      %v2268 = vld [vmem:[%s1790 + $0x142] sm:$0xff]
      %v2269 = vld [vmem:[%s1790 + $0x152] sm:$0xff]
      %v2270 = vld [vmem:[%s1790 + $0x15a] sm:$0xff]
      %v2271 = vld [vmem:[%s1790 + $0x16a] sm:$0xff]
      %v2272 = vld [vmem:[%s1790 + $0x172] sm:$0xff]
      %v2273 = vpack.c.bf16 %v2241, %v2241
      %v2274 = vpack.c.bf16 %v2242, %v2242
      %v2275 = vpack.c.bf16 %v2243, %v2243
      %v2276 = vpack.c.bf16 %v2244, %v2244
      %v2277 = vpack.c.bf16 %v2245, %v2245
      %v2278 = vpack.c.bf16 %v2246, %v2246
      %v2279 = vpack.c.bf16 %v2247, %v2247
      %v2280 = vpack.c.bf16 %v2248, %v2248
      %v2281 = vpack.c.bf16 %v2249, %v2249
      %v2282 = vpack.c.bf16 %v2250, %v2250
      %v2283 = vpack.c.bf16 %v2251, %v2251
      %v2284 = vpack.c.bf16 %v2252, %v2252
      %v2285 = vpack.c.bf16 %v2253, %v2253
      %v2286 = vpack.c.bf16 %v2254, %v2254
      %v2287 = vpack.c.bf16 %v2255, %v2255
      %v2288 = vpack.c.bf16 %v2256, %v2256
      %v2289 = vpack.c.bf16 %v2257, %v2257
      %v2290 = vpack.c.bf16 %v2258, %v2258
      %v2291 = vpack.c.bf16 %v2259, %v2259
      %v2292 = vpack.c.bf16 %v2260, %v2260
      %v2293 = vpack.c.bf16 %v2261, %v2261
      %v2294 = vpack.c.bf16 %v2262, %v2262
      %v2295 = vpack.c.bf16 %v2263, %v2263
      %v2296 = vpack.c.bf16 %v2264, %v2264
      %v2297 = vpack.c.bf16 %v2265, %v2265
      %v2298 = vpack.c.bf16 %v2266, %v2266
      %v2299 = vpack.c.bf16 %v2267, %v2267
      %v2300 = vpack.c.bf16 %v2268, %v2268
      %v2301 = vpack.c.bf16 %v2269, %v2269
      %v2302 = vpack.c.bf16 %v2270, %v2270
      %v2303 = vpack.c.bf16 %v2271, %v2271
      %v2304 = vpack.c.bf16 %v2272, %v2272
      %2337 = vrot.lane.b32.xlu0 %v2273, 32
      %v2338 = vpop.permute.xlu0 %2337
      %2339 = vrot.lane.b32.xlu0 %v2274, 32
      %v2340 = vpop.permute.xlu0 %2339
      %2341 = vrot.lane.b32.xlu0 %v2275, 32
      %v2342 = vpop.permute.xlu0 %2341
      %2343 = vrot.lane.b32.xlu0 %v2276, 32
      %v2344 = vpop.permute.xlu0 %2343
      %2345 = vrot.lane.b32.xlu0 %v2277, 32
      %v2346 = vpop.permute.xlu0 %2345
      %2347 = vrot.lane.b32.xlu0 %v2278, 32
      %v2348 = vpop.permute.xlu0 %2347
      %2349 = vrot.lane.b32.xlu0 %v2279, 32
      %v2350 = vpop.permute.xlu0 %2349
      %2351 = vrot.lane.b32.xlu0 %v2280, 32
      %v2352 = vpop.permute.xlu0 %2351
      %2353 = vrot.lane.b32.xlu0 %v2281, 32
      %v2354 = vpop.permute.xlu0 %2353
      %2355 = vrot.lane.b32.xlu0 %v2282, 32
      %v2356 = vpop.permute.xlu0 %2355
      %2357 = vrot.lane.b32.xlu0 %v2283, 32
      %v2358 = vpop.permute.xlu0 %2357
      %2359 = vrot.lane.b32.xlu0 %v2284, 32
      %v2360 = vpop.permute.xlu0 %2359
      %2361 = vrot.lane.b32.xlu0 %v2285, 32
      %v2362 = vpop.permute.xlu0 %2361
      %2363 = vrot.lane.b32.xlu0 %v2286, 32
      %v2364 = vpop.permute.xlu0 %2363
      %2365 = vrot.lane.b32.xlu0 %v2287, 32
      %v2366 = vpop.permute.xlu0 %2365
      %2367 = vrot.lane.b32.xlu0 %v2288, 32
      %v2368 = vpop.permute.xlu0 %2367
      %2369 = vrot.lane.b32.xlu0 %v2289, 32
      %v2370 = vpop.permute.xlu0 %2369
      %2371 = vrot.lane.b32.xlu0 %v2290, 32
      %v2372 = vpop.permute.xlu0 %2371
      %2373 = vrot.lane.b32.xlu0 %v2291, 32
      %v2374 = vpop.permute.xlu0 %2373
      %2375 = vrot.lane.b32.xlu0 %v2292, 32
      %v2376 = vpop.permute.xlu0 %2375
      %2377 = vrot.lane.b32.xlu0 %v2293, 32
      %v2378 = vpop.permute.xlu0 %2377
      %2379 = vrot.lane.b32.xlu0 %v2294, 32
      %v2380 = vpop.permute.xlu0 %2379
      %2381 = vrot.lane.b32.xlu0 %v2295, 32
      %v2382 = vpop.permute.xlu0 %2381
      %2383 = vrot.lane.b32.xlu0 %v2296, 32
      %v2384 = vpop.permute.xlu0 %2383
      %2385 = vrot.lane.b32.xlu0 %v2297, 32
      %v2386 = vpop.permute.xlu0 %2385
      %2387 = vrot.lane.b32.xlu0 %v2298, 32
      %v2388 = vpop.permute.xlu0 %2387
      %2389 = vrot.lane.b32.xlu0 %v2299, 32
      %v2390 = vpop.permute.xlu0 %2389
      %2391 = vrot.lane.b32.xlu0 %v2300, 32
      %v2392 = vpop.permute.xlu0 %2391
      %2393 = vrot.lane.b32.xlu0 %v2301, 32
      %v2394 = vpop.permute.xlu0 %2393
      %2395 = vrot.lane.b32.xlu0 %v2302, 32
      %v2396 = vpop.permute.xlu0 %2395
      %2397 = vrot.lane.b32.xlu0 %v2303, 32
      %v2398 = vpop.permute.xlu0 %2397
      %2399 = vrot.lane.b32.xlu0 %v2304, 32
      %v2400 = vpop.permute.xlu0 %2399
      %vm2433 = vcmask 290048
      %2434 = vst.msk [vmem:[#allocation3] sm:$0xf] %vm2433, %v2338
      %2435 = vst.msk [vmem:[#allocation3 + $0x4] sm:$0xf] %vm2433, %v2340
      %2436 = vst.msk [vmem:[#allocation3 + $0x8] sm:$0xf] %vm2433, %v2342
      %2437 = vst.msk [vmem:[#allocation3 + $0xc] sm:$0xf] %vm2433, %v2344
      %2438 = vst.msk [vmem:[#allocation3 + $0x10] sm:$0xf] %vm2433, %v2346
      %2439 = vst.msk [vmem:[#allocation3 + $0x14] sm:$0xf] %vm2433, %v2348
      %2440 = vst.msk [vmem:[#allocation3 + $0x18] sm:$0xf] %vm2433, %v2350
      %2441 = vst.msk [vmem:[#allocation3 + $0x1c] sm:$0xf] %vm2433, %v2352
      %2442 = vst.msk [vmem:[#allocation3 + $0x20] sm:$0xf] %vm2433, %v2354
      %2443 = vst.msk [vmem:[#allocation3 + $0x24] sm:$0xf] %vm2433, %v2356
      %2444 = vst.msk [vmem:[#allocation3 + $0x28] sm:$0xf] %vm2433, %v2358
      %2445 = vst.msk [vmem:[#allocation3 + $0x2c] sm:$0xf] %vm2433, %v2360
      %2446 = vst.msk [vmem:[#allocation3 + $0x30] sm:$0xf] %vm2433, %v2362
      %2447 = vst.msk [vmem:[#allocation3 + $0x34] sm:$0xf] %vm2433, %v2364
      %2448 = vst.msk [vmem:[#allocation3 + $0x38] sm:$0xf] %vm2433, %v2366
      %2449 = vst.msk [vmem:[#allocation3 + $0x3c] sm:$0xf] %vm2433, %v2368
      %2450 = vst.msk [vmem:[#allocation3 + $0x40] sm:$0xf] %vm2433, %v2370
      %2451 = vst.msk [vmem:[#allocation3 + $0x44] sm:$0xf] %vm2433, %v2372
      %2452 = vst.msk [vmem:[#allocation3 + $0x48] sm:$0xf] %vm2433, %v2374
      %2453 = vst.msk [vmem:[#allocation3 + $0x4c] sm:$0xf] %vm2433, %v2376
      %2454 = vst.msk [vmem:[#allocation3 + $0x50] sm:$0xf] %vm2433, %v2378
      %2455 = vst.msk [vmem:[#allocation3 + $0x54] sm:$0xf] %vm2433, %v2380
      %2456 = vst.msk [vmem:[#allocation3 + $0x58] sm:$0xf] %vm2433, %v2382
      %2457 = vst.msk [vmem:[#allocation3 + $0x5c] sm:$0xf] %vm2433, %v2384
      %2458 = vst.msk [vmem:[#allocation3 + $0x60] sm:$0xf] %vm2433, %v2386
      %2459 = vst.msk [vmem:[#allocation3 + $0x64] sm:$0xf] %vm2433, %v2388
      %2460 = vst.msk [vmem:[#allocation3 + $0x68] sm:$0xf] %vm2433, %v2390
      %2461 = vst.msk [vmem:[#allocation3 + $0x6c] sm:$0xf] %vm2433, %v2392
      %2462 = vst.msk [vmem:[#allocation3 + $0x70] sm:$0xf] %vm2433, %v2394
      %2463 = vst.msk [vmem:[#allocation3 + $0x74] sm:$0xf] %vm2433, %v2396
      %2464 = vst.msk [vmem:[#allocation3 + $0x78] sm:$0xf] %vm2433, %v2398
      %2465 = vst.msk [vmem:[#allocation3 + $0x7c] sm:$0xf] %vm2433, %v2400
      %v2466 = vld [vmem:[#allocation3] sm:$0xf]
      %v2467 = vld [vmem:[#allocation3 + $0x4] sm:$0xf]
      %v2468 = vld [vmem:[#allocation3 + $0x8] sm:$0xf]
      %v2469 = vld [vmem:[#allocation3 + $0xc] sm:$0xf]
      %v2470 = vld [vmem:[#allocation3 + $0x10] sm:$0xf]
      %v2471 = vld [vmem:[#allocation3 + $0x14] sm:$0xf]
      %v2472 = vld [vmem:[#allocation3 + $0x18] sm:$0xf]
      %v2473 = vld [vmem:[#allocation3 + $0x1c] sm:$0xf]
      %v2474 = vld [vmem:[#allocation3 + $0x20] sm:$0xf]
      %v2475 = vld [vmem:[#allocation3 + $0x24] sm:$0xf]
      %v2476 = vld [vmem:[#allocation3 + $0x28] sm:$0xf]
      %v2477 = vld [vmem:[#allocation3 + $0x2c] sm:$0xf]
      %v2478 = vld [vmem:[#allocation3 + $0x30] sm:$0xf]
      %v2479 = vld [vmem:[#allocation3 + $0x34] sm:$0xf]
      %v2480 = vld [vmem:[#allocation3 + $0x38] sm:$0xf]
      %v2481 = vld [vmem:[#allocation3 + $0x3c] sm:$0xf]
      %v2482 = vld [vmem:[#allocation3 + $0x40] sm:$0xf]
      %v2483 = vld [vmem:[#allocation3 + $0x44] sm:$0xf]
      %v2484 = vld [vmem:[#allocation3 + $0x48] sm:$0xf]
      %v2485 = vld [vmem:[#allocation3 + $0x4c] sm:$0xf]
      %v2486 = vld [vmem:[#allocation3 + $0x50] sm:$0xf]
      %v2487 = vld [vmem:[#allocation3 + $0x54] sm:$0xf]
      %v2488 = vld [vmem:[#allocation3 + $0x58] sm:$0xf]
      %v2489 = vld [vmem:[#allocation3 + $0x5c] sm:$0xf]
      %v2490 = vld [vmem:[#allocation3 + $0x60] sm:$0xf]
      %v2491 = vld [vmem:[#allocation3 + $0x64] sm:$0xf]
      %v2492 = vld [vmem:[#allocation3 + $0x68] sm:$0xf]
      %v2493 = vld [vmem:[#allocation3 + $0x6c] sm:$0xf]
      %v2494 = vld [vmem:[#allocation3 + $0x70] sm:$0xf]
      %v2495 = vld [vmem:[#allocation3 + $0x74] sm:$0xf]
      %v2496 = vld [vmem:[#allocation3 + $0x78] sm:$0xf]
      %v2497 = vld [vmem:[#allocation3 + $0x7c] sm:$0xf]
      %v2498 = vld [vmem:[%s3] sm:$0xf]
      %v2499 = vld [vmem:[%s3 + $0x4] sm:$0xf]
      %v2500 = vld [vmem:[%s3 + $0x8] sm:$0xf]
      %v2501 = vld [vmem:[%s3 + $0xc] sm:$0xf]
      %v2502 = vld [vmem:[%s3 + $0x10] sm:$0x3]
      %v2535 = vunpack.c.l.b16 %v2466
      %v2536 = vunpack.c.l.b16 %v2467
      %v2537 = vunpack.c.l.b16 %v2468
      %v2538 = vunpack.c.l.b16 %v2469
      %v2539 = vunpack.c.l.b16 %v2470
      %v2540 = vunpack.c.l.b16 %v2471
      %v2541 = vunpack.c.l.b16 %v2472
      %v2542 = vunpack.c.l.b16 %v2473
      %v2543 = vunpack.c.l.b16 %v2474
      %v2544 = vunpack.c.l.b16 %v2475
      %v2545 = vunpack.c.l.b16 %v2476
      %v2546 = vunpack.c.l.b16 %v2477
      %v2547 = vunpack.c.l.b16 %v2478
      %v2548 = vunpack.c.l.b16 %v2479
      %v2549 = vunpack.c.l.b16 %v2480
      %v2550 = vunpack.c.l.b16 %v2481
      %v2551 = vunpack.c.l.b16 %v2482
      %v2552 = vunpack.c.l.b16 %v2483
      %v2553 = vunpack.c.l.b16 %v2484
      %v2554 = vunpack.c.l.b16 %v2485
      %v2555 = vunpack.c.l.b16 %v2486
      %v2556 = vunpack.c.l.b16 %v2487
      %v2557 = vunpack.c.l.b16 %v2488
      %v2558 = vunpack.c.l.b16 %v2489
      %v2559 = vunpack.c.l.b16 %v2490
      %v2560 = vunpack.c.l.b16 %v2491
      %v2561 = vunpack.c.l.b16 %v2492
      %v2562 = vunpack.c.l.b16 %v2493
      %v2563 = vunpack.c.l.b16 %v2494
      %v2564 = vunpack.c.l.b16 %v2495
      %v2565 = vunpack.c.l.b16 %v2496
      %v2566 = vunpack.c.l.b16 %v2497
      %v2567 = vpack.c.b16 %v2536, %v2535
      %v2568 = vpack.c.b16 %v2538, %v2537
      %v2569 = vpack.c.b16 %v2540, %v2539
      %v2570 = vpack.c.b16 %v2542, %v2541
      %v2571 = vpack.c.b16 %v2544, %v2543
      %v2572 = vpack.c.b16 %v2546, %v2545
      %v2573 = vpack.c.b16 %v2548, %v2547
      %v2574 = vpack.c.b16 %v2550, %v2549
      %v2575 = vpack.c.b16 %v2552, %v2551
      %v2576 = vpack.c.b16 %v2554, %v2553
      %v2577 = vpack.c.b16 %v2556, %v2555
      %v2578 = vpack.c.b16 %v2558, %v2557
      %v2579 = vpack.c.b16 %v2560, %v2559
      %v2580 = vpack.c.b16 %v2562, %v2561
      %v2581 = vpack.c.b16 %v2564, %v2563
      %v2582 = vpack.c.b16 %v2566, %v2565
      %v2588 = vunpack.c.l.b16 %v2498
      %v2589 = vunpack.c.l.b16 %v2499
      %v2590 = vunpack.c.l.b16 %v2500
      %v2591 = vunpack.c.l.b16 %v2501
      %v2592 = vunpack.c.l.b16 %v2502
      %v2593 = vpack.c.b16 %v2589, %v2588
      %v2594 = vpack.c.b16 %v2591, %v2590
      %v2595 = vpack.c.b16 %v2592, %v2592
      %vm2598 = vcmask 293888
      %v2600 = vsel %vm2598, %v2567, 0
      %v2603 = vsel %vm2598, %v2568, 0
      %v2606 = vsel %vm2598, %v2569, 0
      %v2609 = vsel %vm2598, %v2570, 0
      %v2612 = vsel %vm2598, %v2571, 0
      %v2615 = vsel %vm2598, %v2572, 0
      %v2618 = vsel %vm2598, %v2573, 0
      %v2621 = vsel %vm2598, %v2574, 0
      %v2624 = vsel %vm2598, %v2575, 0
      %v2627 = vsel %vm2598, %v2576, 0
      %v2630 = vsel %vm2598, %v2577, 0
      %v2633 = vsel %vm2598, %v2578, 0
      %v2636 = vsel %vm2598, %v2579, 0
      %v2639 = vsel %vm2598, %v2580, 0
      %v2642 = vsel %vm2598, %v2581, 0
      %v2645 = vsel %vm2598, %v2582, 0
      %vm2647 = vcmask 1041408
      %v2649 = vsel %vm2647, %v2595, 0
      %2651 = vmatpush.bf16.msra.mxu0 0
      %2652 = vmatpush.bf16.msra.mxu0 0
      %2653 = vmatpush.bf16.msra.mxu0 0
      %2654 = vmatpush.bf16.msra.mxu0 0
      %2655 = vmatpush.bf16.msra.mxu0 0
      %2656 = vmatpush.bf16.msra.mxu0 %v2649
      %2657 = vmatpush.bf16.msra.mxu0 %v2594
      %2658 = vmatpush.bf16.msra.mxu0 %v2593
      %2659 = vmatmul.bf16.gmra.mxu0 %v2600
      %v2660 = vpop.f32.mrf.mxu0
      %v2661 = vadd.f32 0.0, %v2660
      %v2662 = vpop.f32.mrf.mxu0
      %v2663 = vadd.f32 0.0, %v2662
      %2664 = vmatmul.bf16.gmra.mxu0 %v2603
      %v2665 = vpop.f32.mrf.mxu0
      %v2666 = vadd.f32 0.0, %v2665
      %v2667 = vpop.f32.mrf.mxu0
      %v2668 = vadd.f32 0.0, %v2667
      %2669 = vmatmul.bf16.gmra.mxu0 %v2606
      %v2670 = vpop.f32.mrf.mxu0
      %v2671 = vadd.f32 0.0, %v2670
      %v2672 = vpop.f32.mrf.mxu0
      %v2673 = vadd.f32 0.0, %v2672
      %2674 = vmatmul.bf16.gmra.mxu0 %v2609
      %v2675 = vpop.f32.mrf.mxu0
      %v2676 = vadd.f32 0.0, %v2675
      %v2677 = vpop.f32.mrf.mxu0
      %v2678 = vadd.f32 0.0, %v2677
      %2679 = vmatmul.bf16.gmra.mxu0 %v2612
      %v2680 = vpop.f32.mrf.mxu0
      %v2681 = vadd.f32 0.0, %v2680
      %v2682 = vpop.f32.mrf.mxu0
      %v2683 = vadd.f32 0.0, %v2682
      %2684 = vmatmul.bf16.gmra.mxu0 %v2615
      %v2685 = vpop.f32.mrf.mxu0
      %v2686 = vadd.f32 0.0, %v2685
      %v2687 = vpop.f32.mrf.mxu0
      %v2688 = vadd.f32 0.0, %v2687
      %2689 = vmatmul.bf16.gmra.mxu0 %v2618
      %v2690 = vpop.f32.mrf.mxu0
      %v2691 = vadd.f32 0.0, %v2690
      %v2692 = vpop.f32.mrf.mxu0
      %v2693 = vadd.f32 0.0, %v2692
      %2694 = vmatmul.bf16.gmra.mxu0 %v2621
      %v2695 = vpop.f32.mrf.mxu0
      %v2696 = vadd.f32 0.0, %v2695
      %v2697 = vpop.f32.mrf.mxu0
      %v2698 = vadd.f32 0.0, %v2697
      %2699 = vmatmul.bf16.gmra.mxu0 %v2624
      %v2700 = vpop.f32.mrf.mxu0
      %v2701 = vadd.f32 0.0, %v2700
      %v2702 = vpop.f32.mrf.mxu0
      %v2703 = vadd.f32 0.0, %v2702
      %2704 = vmatmul.bf16.gmra.mxu0 %v2627
      %v2705 = vpop.f32.mrf.mxu0
      %v2706 = vadd.f32 0.0, %v2705
      %v2707 = vpop.f32.mrf.mxu0
      %v2708 = vadd.f32 0.0, %v2707
      %2709 = vmatmul.bf16.gmra.mxu0 %v2630
      %v2710 = vpop.f32.mrf.mxu0
      %v2711 = vadd.f32 0.0, %v2710
      %v2712 = vpop.f32.mrf.mxu0
      %v2713 = vadd.f32 0.0, %v2712
      %2714 = vmatmul.bf16.gmra.mxu0 %v2633
      %v2715 = vpop.f32.mrf.mxu0
      %v2716 = vadd.f32 0.0, %v2715
      %v2717 = vpop.f32.mrf.mxu0
      %v2718 = vadd.f32 0.0, %v2717
      %2719 = vmatmul.bf16.gmra.mxu0 %v2636
      %v2720 = vpop.f32.mrf.mxu0
      %v2721 = vadd.f32 0.0, %v2720
      %v2722 = vpop.f32.mrf.mxu0
      %v2723 = vadd.f32 0.0, %v2722
      %2724 = vmatmul.bf16.gmra.mxu0 %v2639
      %v2725 = vpop.f32.mrf.mxu0
      %v2726 = vadd.f32 0.0, %v2725
      %v2727 = vpop.f32.mrf.mxu0
      %v2728 = vadd.f32 0.0, %v2727
      %2729 = vmatmul.bf16.gmra.mxu0 %v2642
      %v2730 = vpop.f32.mrf.mxu0
      %v2731 = vadd.f32 0.0, %v2730
      %v2732 = vpop.f32.mrf.mxu0
      %v2733 = vadd.f32 0.0, %v2732
      %2734 = vmatmul.bf16.gmra.mxu0 %v2645
      %v2735 = vpop.f32.mrf.mxu0
      %v2736 = vadd.f32 0.0, %v2735
      %v2737 = vpop.f32.mrf.mxu0
      %v2738 = vadd.f32 0.0, %v2737
      %2739 = vdwg.mxu0
      %v2740 = vld [vmem:[%s4] sm:$0x1]
      %v2742 = vperm.slane %v2740, 0
      %v2744 = vmul.f32 %v2661, %v2742
      %v2745 = vmul.f32 %v2663, %v2742
      %v2746 = vmul.f32 %v2666, %v2742
      %v2747 = vmul.f32 %v2668, %v2742
      %v2748 = vmul.f32 %v2671, %v2742
      %v2749 = vmul.f32 %v2673, %v2742
      %v2750 = vmul.f32 %v2676, %v2742
      %v2751 = vmul.f32 %v2678, %v2742
      %v2752 = vmul.f32 %v2681, %v2742
      %v2753 = vmul.f32 %v2683, %v2742
      %v2754 = vmul.f32 %v2686, %v2742
      %v2755 = vmul.f32 %v2688, %v2742
      %v2756 = vmul.f32 %v2691, %v2742
      %v2757 = vmul.f32 %v2693, %v2742
      %v2758 = vmul.f32 %v2696, %v2742
      %v2759 = vmul.f32 %v2698, %v2742
      %v2760 = vmul.f32 %v2701, %v2742
      %v2761 = vmul.f32 %v2703, %v2742
      %v2762 = vmul.f32 %v2706, %v2742
      %v2763 = vmul.f32 %v2708, %v2742
      %v2764 = vmul.f32 %v2711, %v2742
      %v2765 = vmul.f32 %v2713, %v2742
      %v2766 = vmul.f32 %v2716, %v2742
      %v2767 = vmul.f32 %v2718, %v2742
      %v2768 = vmul.f32 %v2721, %v2742
      %v2769 = vmul.f32 %v2723, %v2742
      %v2770 = vmul.f32 %v2726, %v2742
      %v2771 = vmul.f32 %v2728, %v2742
      %v2772 = vmul.f32 %v2731, %v2742
      %v2773 = vmul.f32 %v2733, %v2742
      %v2774 = vmul.f32 %v2736, %v2742
      %v2775 = vmul.f32 %v2738, %v2742
      %v2776 = vld [vmem:[%s5] sm:$0x1]
      %v2778 = vperm.slane %v2776, 0
      %v2780 = vadd.f32 %v2744, %v2778
      %v2781 = vadd.f32 %v2745, %v2778
      %v2782 = vadd.f32 %v2746, %v2778
      %v2783 = vadd.f32 %v2747, %v2778
      %v2784 = vadd.f32 %v2748, %v2778
      %v2785 = vadd.f32 %v2749, %v2778
      %v2786 = vadd.f32 %v2750, %v2778
      %v2787 = vadd.f32 %v2751, %v2778
      %v2788 = vadd.f32 %v2752, %v2778
      %v2789 = vadd.f32 %v2753, %v2778
      %v2790 = vadd.f32 %v2754, %v2778
      %v2791 = vadd.f32 %v2755, %v2778
      %v2792 = vadd.f32 %v2756, %v2778
      %v2793 = vadd.f32 %v2757, %v2778
      %v2794 = vadd.f32 %v2758, %v2778
      %v2795 = vadd.f32 %v2759, %v2778
      %v2796 = vadd.f32 %v2760, %v2778
      %v2797 = vadd.f32 %v2761, %v2778
      %v2798 = vadd.f32 %v2762, %v2778
      %v2799 = vadd.f32 %v2763, %v2778
      %v2800 = vadd.f32 %v2764, %v2778
      %v2801 = vadd.f32 %v2765, %v2778
      %v2802 = vadd.f32 %v2766, %v2778
      %v2803 = vadd.f32 %v2767, %v2778
      %v2804 = vadd.f32 %v2768, %v2778
      %v2805 = vadd.f32 %v2769, %v2778
      %v2806 = vadd.f32 %v2770, %v2778
      %v2807 = vadd.f32 %v2771, %v2778
      %v2808 = vadd.f32 %v2772, %v2778
      %v2809 = vadd.f32 %v2773, %v2778
      %v2810 = vadd.f32 %v2774, %v2778
      %v2811 = vadd.f32 %v2775, %v2778
      %v2812 = vmax.f32 %v2780, 0.0
      %v2813 = vmax.f32 %v2781, 0.0
      %v2814 = vmax.f32 %v2782, 0.0
      %v2815 = vmax.f32 %v2783, 0.0
      %v2816 = vmax.f32 %v2784, 0.0
      %v2817 = vmax.f32 %v2785, 0.0
      %v2818 = vmax.f32 %v2786, 0.0
      %v2819 = vmax.f32 %v2787, 0.0
      %v2820 = vmax.f32 %v2788, 0.0
      %v2821 = vmax.f32 %v2789, 0.0
      %v2822 = vmax.f32 %v2790, 0.0
      %v2823 = vmax.f32 %v2791, 0.0
      %v2824 = vmax.f32 %v2792, 0.0
      %v2825 = vmax.f32 %v2793, 0.0
      %v2826 = vmax.f32 %v2794, 0.0
      %v2827 = vmax.f32 %v2795, 0.0
      %v2828 = vmax.f32 %v2796, 0.0
      %v2829 = vmax.f32 %v2797, 0.0
      %v2830 = vmax.f32 %v2798, 0.0
      %v2831 = vmax.f32 %v2799, 0.0
      %v2832 = vmax.f32 %v2800, 0.0
      %v2833 = vmax.f32 %v2801, 0.0
      %v2834 = vmax.f32 %v2802, 0.0
      %v2835 = vmax.f32 %v2803, 0.0
      %v2836 = vmax.f32 %v2804, 0.0
      %v2837 = vmax.f32 %v2805, 0.0
      %v2838 = vmax.f32 %v2806, 0.0
      %v2839 = vmax.f32 %v2807, 0.0
      %v2840 = vmax.f32 %v2808, 0.0
      %v2841 = vmax.f32 %v2809, 0.0
      %v2842 = vmax.f32 %v2810, 0.0
      %v2843 = vmax.f32 %v2811, 0.0
      %s2844 = scalar_lea.vmem [#allocation4], 24
      %2845 = vst.msk [vmem:[%s2844 + $0x1] sm:$0xff] %vm353, %v2812
      %2846 = vst.msk [vmem:[%s2844 + $0x9] sm:$0xff] %vm353, %v2813
      %2847 = vst.msk [vmem:[%s2844 + $0x19] sm:$0xff] %vm353, %v2814
      %2848 = vst.msk [vmem:[%s2844 + $0x21] sm:$0xff] %vm353, %v2815
      %2849 = vst.msk [vmem:[%s2844 + $0x31] sm:$0xff] %vm353, %v2816
      %2850 = vst.msk [vmem:[%s2844 + $0x39] sm:$0xff] %vm353, %v2817
      %2851 = vst.msk [vmem:[%s2844 + $0x49] sm:$0xff] %vm353, %v2818
      %2852 = vst.msk [vmem:[%s2844 + $0x51] sm:$0xff] %vm353, %v2819
      %2853 = vst.msk [vmem:[%s2844 + $0x61] sm:$0xff] %vm353, %v2820
      %2854 = vst.msk [vmem:[%s2844 + $0x69] sm:$0xff] %vm353, %v2821
      %2855 = vst.msk [vmem:[%s2844 + $0x79] sm:$0xff] %vm353, %v2822
      %2856 = vst.msk [vmem:[%s2844 + $0x81] sm:$0xff] %vm353, %v2823
      %2857 = vst.msk [vmem:[%s2844 + $0x91] sm:$0xff] %vm353, %v2824
      %2858 = vst.msk [vmem:[%s2844 + $0x99] sm:$0xff] %vm353, %v2825
      %2859 = vst.msk [vmem:[%s2844 + $0xa9] sm:$0xff] %vm353, %v2826
      %2860 = vst.msk [vmem:[%s2844 + $0xb1] sm:$0xff] %vm353, %v2827
      %2861 = vst.msk [vmem:[%s2844 + $0xc1] sm:$0xff] %vm353, %v2828
      %2862 = vst.msk [vmem:[%s2844 + $0xc9] sm:$0xff] %vm353, %v2829
      %2863 = vst.msk [vmem:[%s2844 + $0xd9] sm:$0xff] %vm353, %v2830
      %2864 = vst.msk [vmem:[%s2844 + $0xe1] sm:$0xff] %vm353, %v2831
      %2865 = vst.msk [vmem:[%s2844 + $0xf1] sm:$0xff] %vm353, %v2832
      %2866 = vst.msk [vmem:[%s2844 + $0xf9] sm:$0xff] %vm353, %v2833
      %2867 = vst.msk [vmem:[%s2844 + $0x109] sm:$0xff] %vm353, %v2834
      %2868 = vst.msk [vmem:[%s2844 + $0x111] sm:$0xff] %vm353, %v2835
      %2869 = vst.msk [vmem:[%s2844 + $0x121] sm:$0xff] %vm353, %v2836
      %2870 = vst.msk [vmem:[%s2844 + $0x129] sm:$0xff] %vm353, %v2837
      %2871 = vst.msk [vmem:[%s2844 + $0x139] sm:$0xff] %vm353, %v2838
      %2872 = vst.msk [vmem:[%s2844 + $0x141] sm:$0xff] %vm353, %v2839
      %2873 = vst.msk [vmem:[%s2844 + $0x151] sm:$0xff] %vm353, %v2840
      %2874 = vst.msk [vmem:[%s2844 + $0x159] sm:$0xff] %vm353, %v2841
      %2875 = vst.msk [vmem:[%s2844 + $0x169] sm:$0xff] %vm353, %v2842
      %2876 = vst.msk [vmem:[%s2844 + $0x171] sm:$0xff] %vm353, %v2843
      %v2877 = vld [vmem:[#allocation4] sm:$0xff]
      %v2878 = vld [vmem:[#allocation4 + $0x8] sm:$0xff]
      %v2879 = vld [vmem:[#allocation4 + $0x18] sm:$0xff]
      %v2880 = vld [vmem:[#allocation4 + $0x20] sm:$0xff]
      %v2881 = vld [vmem:[#allocation4 + $0x30] sm:$0xff]
      %v2882 = vld [vmem:[#allocation4 + $0x38] sm:$0xff]
      %v2883 = vld [vmem:[#allocation4 + $0x48] sm:$0xff]
      %v2884 = vld [vmem:[#allocation4 + $0x50] sm:$0xff]
      %v2885 = vld [vmem:[#allocation4 + $0x60] sm:$0xff]
      %v2886 = vld [vmem:[#allocation4 + $0x68] sm:$0xff]
      %v2887 = vld [vmem:[#allocation4 + $0x78] sm:$0xff]
      %v2888 = vld [vmem:[#allocation4 + $0x80] sm:$0xff]
      %v2889 = vld [vmem:[#allocation4 + $0x90] sm:$0xff]
      %v2890 = vld [vmem:[#allocation4 + $0x98] sm:$0xff]
      %v2891 = vld [vmem:[#allocation4 + $0xa8] sm:$0xff]
      %v2892 = vld [vmem:[#allocation4 + $0xb0] sm:$0xff]
      %v2893 = vld [vmem:[#allocation4 + $0xc0] sm:$0xff]
      %v2894 = vld [vmem:[#allocation4 + $0xc8] sm:$0xff]
      %v2895 = vld [vmem:[#allocation4 + $0xd8] sm:$0xff]
      %v2896 = vld [vmem:[#allocation4 + $0xe0] sm:$0xff]
      %v2897 = vld [vmem:[#allocation4 + $0xf0] sm:$0xff]
      %v2898 = vld [vmem:[#allocation4 + $0xf8] sm:$0xff]
      %v2899 = vld [vmem:[#allocation4 + $0x108] sm:$0xff]
      %v2900 = vld [vmem:[#allocation4 + $0x110] sm:$0xff]
      %v2901 = vld [vmem:[#allocation4 + $0x120] sm:$0xff]
      %v2902 = vld [vmem:[#allocation4 + $0x128] sm:$0xff]
      %v2903 = vld [vmem:[#allocation4 + $0x138] sm:$0xff]
      %v2904 = vld [vmem:[#allocation4 + $0x140] sm:$0xff]
      %v2905 = vld [vmem:[#allocation4 + $0x150] sm:$0xff]
      %v2906 = vld [vmem:[#allocation4 + $0x158] sm:$0xff]
      %v2907 = vld [vmem:[#allocation4 + $0x168] sm:$0xff]
      %v2908 = vld [vmem:[#allocation4 + $0x170] sm:$0xff]
      %v2909 = vpack.c.bf16 %v2877, %v2877
      %v2910 = vpack.c.bf16 %v2878, %v2878
      %v2911 = vpack.c.bf16 %v2879, %v2879
      %v2912 = vpack.c.bf16 %v2880, %v2880
      %v2913 = vpack.c.bf16 %v2881, %v2881
      %v2914 = vpack.c.bf16 %v2882, %v2882
      %v2915 = vpack.c.bf16 %v2883, %v2883
      %v2916 = vpack.c.bf16 %v2884, %v2884
      %v2917 = vpack.c.bf16 %v2885, %v2885
      %v2918 = vpack.c.bf16 %v2886, %v2886
      %v2919 = vpack.c.bf16 %v2887, %v2887
      %v2920 = vpack.c.bf16 %v2888, %v2888
      %v2921 = vpack.c.bf16 %v2889, %v2889
      %v2922 = vpack.c.bf16 %v2890, %v2890
      %v2923 = vpack.c.bf16 %v2891, %v2891
      %v2924 = vpack.c.bf16 %v2892, %v2892
      %v2925 = vpack.c.bf16 %v2893, %v2893
      %v2926 = vpack.c.bf16 %v2894, %v2894
      %v2927 = vpack.c.bf16 %v2895, %v2895
      %v2928 = vpack.c.bf16 %v2896, %v2896
      %v2929 = vpack.c.bf16 %v2897, %v2897
      %v2930 = vpack.c.bf16 %v2898, %v2898
      %v2931 = vpack.c.bf16 %v2899, %v2899
      %v2932 = vpack.c.bf16 %v2900, %v2900
      %v2933 = vpack.c.bf16 %v2901, %v2901
      %v2934 = vpack.c.bf16 %v2902, %v2902
      %v2935 = vpack.c.bf16 %v2903, %v2903
      %v2936 = vpack.c.bf16 %v2904, %v2904
      %v2937 = vpack.c.bf16 %v2905, %v2905
      %v2938 = vpack.c.bf16 %v2906, %v2906
      %v2939 = vpack.c.bf16 %v2907, %v2907
      %v2940 = vpack.c.bf16 %v2908, %v2908
      %vm2941 = vcmask 60416
      %2942 = vst.msk [vmem:[#allocation5] sm:$0xf] %vm2941, %v2909
      %2943 = vst.msk [vmem:[#allocation5 + $0x4] sm:$0xf] %vm2941, %v2910
      %2944 = vst.msk [vmem:[#allocation5 + $0x8] sm:$0xf] %vm2941, %v2911
      %2945 = vst.msk [vmem:[#allocation5 + $0xc] sm:$0xf] %vm2941, %v2912
      %2946 = vst.msk [vmem:[#allocation5 + $0x10] sm:$0xf] %vm2941, %v2913
      %2947 = vst.msk [vmem:[#allocation5 + $0x14] sm:$0xf] %vm2941, %v2914
      %2948 = vst.msk [vmem:[#allocation5 + $0x18] sm:$0xf] %vm2941, %v2915
      %2949 = vst.msk [vmem:[#allocation5 + $0x1c] sm:$0xf] %vm2941, %v2916
      %2950 = vst.msk [vmem:[#allocation5 + $0x20] sm:$0xf] %vm2941, %v2917
      %2951 = vst.msk [vmem:[#allocation5 + $0x24] sm:$0xf] %vm2941, %v2918
      %2952 = vst.msk [vmem:[#allocation5 + $0x28] sm:$0xf] %vm2941, %v2919
      %2953 = vst.msk [vmem:[#allocation5 + $0x2c] sm:$0xf] %vm2941, %v2920
      %2954 = vst.msk [vmem:[#allocation5 + $0x30] sm:$0xf] %vm2941, %v2921
      %2955 = vst.msk [vmem:[#allocation5 + $0x34] sm:$0xf] %vm2941, %v2922
      %2956 = vst.msk [vmem:[#allocation5 + $0x38] sm:$0xf] %vm2941, %v2923
      %2957 = vst.msk [vmem:[#allocation5 + $0x3c] sm:$0xf] %vm2941, %v2924
      %2958 = vst.msk [vmem:[#allocation5 + $0x40] sm:$0xf] %vm2941, %v2925
      %2959 = vst.msk [vmem:[#allocation5 + $0x44] sm:$0xf] %vm2941, %v2926
      %2960 = vst.msk [vmem:[#allocation5 + $0x48] sm:$0xf] %vm2941, %v2927
      %2961 = vst.msk [vmem:[#allocation5 + $0x4c] sm:$0xf] %vm2941, %v2928
      %2962 = vst.msk [vmem:[#allocation5 + $0x50] sm:$0xf] %vm2941, %v2929
      %2963 = vst.msk [vmem:[#allocation5 + $0x54] sm:$0xf] %vm2941, %v2930
      %2964 = vst.msk [vmem:[#allocation5 + $0x58] sm:$0xf] %vm2941, %v2931
      %2965 = vst.msk [vmem:[#allocation5 + $0x5c] sm:$0xf] %vm2941, %v2932
      %2966 = vst.msk [vmem:[#allocation5 + $0x60] sm:$0xf] %vm2941, %v2933
      %2967 = vst.msk [vmem:[#allocation5 + $0x64] sm:$0xf] %vm2941, %v2934
      %2968 = vst.msk [vmem:[#allocation5 + $0x68] sm:$0xf] %vm2941, %v2935
      %2969 = vst.msk [vmem:[#allocation5 + $0x6c] sm:$0xf] %vm2941, %v2936
      %2970 = vst.msk [vmem:[#allocation5 + $0x70] sm:$0xf] %vm2941, %v2937
      %2971 = vst.msk [vmem:[#allocation5 + $0x74] sm:$0xf] %vm2941, %v2938
      %2972 = vst.msk [vmem:[#allocation5 + $0x78] sm:$0xf] %vm2941, %v2939
      %2973 = vst.msk [vmem:[#allocation5 + $0x7c] sm:$0xf] %vm2941, %v2940
      %v2974 = vld [vmem:[#allocation4 + $0x1] sm:$0xff]
      %v2975 = vld [vmem:[#allocation4 + $0x9] sm:$0xff]
      %v2976 = vld [vmem:[#allocation4 + $0x19] sm:$0xff]
      %v2977 = vld [vmem:[#allocation4 + $0x21] sm:$0xff]
      %v2978 = vld [vmem:[#allocation4 + $0x31] sm:$0xff]
      %v2979 = vld [vmem:[#allocation4 + $0x39] sm:$0xff]
      %v2980 = vld [vmem:[#allocation4 + $0x49] sm:$0xff]
      %v2981 = vld [vmem:[#allocation4 + $0x51] sm:$0xff]
      %v2982 = vld [vmem:[#allocation4 + $0x61] sm:$0xff]
      %v2983 = vld [vmem:[#allocation4 + $0x69] sm:$0xff]
      %v2984 = vld [vmem:[#allocation4 + $0x79] sm:$0xff]
      %v2985 = vld [vmem:[#allocation4 + $0x81] sm:$0xff]
      %v2986 = vld [vmem:[#allocation4 + $0x91] sm:$0xff]
      %v2987 = vld [vmem:[#allocation4 + $0x99] sm:$0xff]
      %v2988 = vld [vmem:[#allocation4 + $0xa9] sm:$0xff]
      %v2989 = vld [vmem:[#allocation4 + $0xb1] sm:$0xff]
      %v2990 = vld [vmem:[#allocation4 + $0xc1] sm:$0xff]
      %v2991 = vld [vmem:[#allocation4 + $0xc9] sm:$0xff]
      %v2992 = vld [vmem:[#allocation4 + $0xd9] sm:$0xff]
      %v2993 = vld [vmem:[#allocation4 + $0xe1] sm:$0xff]
      %v2994 = vld [vmem:[#allocation4 + $0xf1] sm:$0xff]
      %v2995 = vld [vmem:[#allocation4 + $0xf9] sm:$0xff]
      %v2996 = vld [vmem:[#allocation4 + $0x109] sm:$0xff]
      %v2997 = vld [vmem:[#allocation4 + $0x111] sm:$0xff]
      %v2998 = vld [vmem:[#allocation4 + $0x121] sm:$0xff]
      %v2999 = vld [vmem:[#allocation4 + $0x129] sm:$0xff]
      %v3000 = vld [vmem:[#allocation4 + $0x139] sm:$0xff]
      %v3001 = vld [vmem:[#allocation4 + $0x141] sm:$0xff]
      %v3002 = vld [vmem:[#allocation4 + $0x151] sm:$0xff]
      %v3003 = vld [vmem:[#allocation4 + $0x159] sm:$0xff]
      %v3004 = vld [vmem:[#allocation4 + $0x169] sm:$0xff]
      %v3005 = vld [vmem:[#allocation4 + $0x171] sm:$0xff]
      %v3006 = vpack.c.bf16 %v2974, %v2974
      %v3007 = vpack.c.bf16 %v2975, %v2975
      %v3008 = vpack.c.bf16 %v2976, %v2976
      %v3009 = vpack.c.bf16 %v2977, %v2977
      %v3010 = vpack.c.bf16 %v2978, %v2978
      %v3011 = vpack.c.bf16 %v2979, %v2979
      %v3012 = vpack.c.bf16 %v2980, %v2980
      %v3013 = vpack.c.bf16 %v2981, %v2981
      %v3014 = vpack.c.bf16 %v2982, %v2982
      %v3015 = vpack.c.bf16 %v2983, %v2983
      %v3016 = vpack.c.bf16 %v2984, %v2984
      %v3017 = vpack.c.bf16 %v2985, %v2985
      %v3018 = vpack.c.bf16 %v2986, %v2986
      %v3019 = vpack.c.bf16 %v2987, %v2987
      %v3020 = vpack.c.bf16 %v2988, %v2988
      %v3021 = vpack.c.bf16 %v2989, %v2989
      %v3022 = vpack.c.bf16 %v2990, %v2990
      %v3023 = vpack.c.bf16 %v2991, %v2991
      %v3024 = vpack.c.bf16 %v2992, %v2992
      %v3025 = vpack.c.bf16 %v2993, %v2993
      %v3026 = vpack.c.bf16 %v2994, %v2994
      %v3027 = vpack.c.bf16 %v2995, %v2995
      %v3028 = vpack.c.bf16 %v2996, %v2996
      %v3029 = vpack.c.bf16 %v2997, %v2997
      %v3030 = vpack.c.bf16 %v2998, %v2998
      %v3031 = vpack.c.bf16 %v2999, %v2999
      %v3032 = vpack.c.bf16 %v3000, %v3000
      %v3033 = vpack.c.bf16 %v3001, %v3001
      %v3034 = vpack.c.bf16 %v3002, %v3002
      %v3035 = vpack.c.bf16 %v3003, %v3003
      %v3036 = vpack.c.bf16 %v3004, %v3004
      %v3037 = vpack.c.bf16 %v3005, %v3005
      %3070 = vrot.lane.b32.xlu0 %v3006, 8
      %v3071 = vpop.permute.xlu0 %3070
      %3072 = vrot.lane.b32.xlu0 %v3007, 8
      %v3073 = vpop.permute.xlu0 %3072
      %3074 = vrot.lane.b32.xlu0 %v3008, 8
      %v3075 = vpop.permute.xlu0 %3074
      %3076 = vrot.lane.b32.xlu0 %v3009, 8
      %v3077 = vpop.permute.xlu0 %3076
      %3078 = vrot.lane.b32.xlu0 %v3010, 8
      %v3079 = vpop.permute.xlu0 %3078
      %3080 = vrot.lane.b32.xlu0 %v3011, 8
      %v3081 = vpop.permute.xlu0 %3080
      %3082 = vrot.lane.b32.xlu0 %v3012, 8
      %v3083 = vpop.permute.xlu0 %3082
      %3084 = vrot.lane.b32.xlu0 %v3013, 8
      %v3085 = vpop.permute.xlu0 %3084
      %3086 = vrot.lane.b32.xlu0 %v3014, 8
      %v3087 = vpop.permute.xlu0 %3086
      %3088 = vrot.lane.b32.xlu0 %v3015, 8
      %v3089 = vpop.permute.xlu0 %3088
      %3090 = vrot.lane.b32.xlu0 %v3016, 8
      %v3091 = vpop.permute.xlu0 %3090
      %3092 = vrot.lane.b32.xlu0 %v3017, 8
      %v3093 = vpop.permute.xlu0 %3092
      %3094 = vrot.lane.b32.xlu0 %v3018, 8
      %v3095 = vpop.permute.xlu0 %3094
      %3096 = vrot.lane.b32.xlu0 %v3019, 8
      %v3097 = vpop.permute.xlu0 %3096
      %3098 = vrot.lane.b32.xlu0 %v3020, 8
      %v3099 = vpop.permute.xlu0 %3098
      %3100 = vrot.lane.b32.xlu0 %v3021, 8
      %v3101 = vpop.permute.xlu0 %3100
      %3102 = vrot.lane.b32.xlu0 %v3022, 8
      %v3103 = vpop.permute.xlu0 %3102
      %3104 = vrot.lane.b32.xlu0 %v3023, 8
      %v3105 = vpop.permute.xlu0 %3104
      %3106 = vrot.lane.b32.xlu0 %v3024, 8
      %v3107 = vpop.permute.xlu0 %3106
      %3108 = vrot.lane.b32.xlu0 %v3025, 8
      %v3109 = vpop.permute.xlu0 %3108
      %3110 = vrot.lane.b32.xlu0 %v3026, 8
      %v3111 = vpop.permute.xlu0 %3110
      %3112 = vrot.lane.b32.xlu0 %v3027, 8
      %v3113 = vpop.permute.xlu0 %3112
      %3114 = vrot.lane.b32.xlu0 %v3028, 8
      %v3115 = vpop.permute.xlu0 %3114
      %3116 = vrot.lane.b32.xlu0 %v3029, 8
      %v3117 = vpop.permute.xlu0 %3116
      %3118 = vrot.lane.b32.xlu0 %v3030, 8
      %v3119 = vpop.permute.xlu0 %3118
      %3120 = vrot.lane.b32.xlu0 %v3031, 8
      %v3121 = vpop.permute.xlu0 %3120
      %3122 = vrot.lane.b32.xlu0 %v3032, 8
      %v3123 = vpop.permute.xlu0 %3122
      %3124 = vrot.lane.b32.xlu0 %v3033, 8
      %v3125 = vpop.permute.xlu0 %3124
      %3126 = vrot.lane.b32.xlu0 %v3034, 8
      %v3127 = vpop.permute.xlu0 %3126
      %3128 = vrot.lane.b32.xlu0 %v3035, 8
      %v3129 = vpop.permute.xlu0 %3128
      %3130 = vrot.lane.b32.xlu0 %v3036, 8
      %v3131 = vpop.permute.xlu0 %3130
      %3132 = vrot.lane.b32.xlu0 %v3037, 8
      %v3133 = vpop.permute.xlu0 %3132
      %vm3166 = vcmask 126016
      %3167 = vst.msk [vmem:[#allocation5] sm:$0xf] %vm3166, %v3071
      %3168 = vst.msk [vmem:[#allocation5 + $0x4] sm:$0xf] %vm3166, %v3073
      %3169 = vst.msk [vmem:[#allocation5 + $0x8] sm:$0xf] %vm3166, %v3075
      %3170 = vst.msk [vmem:[#allocation5 + $0xc] sm:$0xf] %vm3166, %v3077
      %3171 = vst.msk [vmem:[#allocation5 + $0x10] sm:$0xf] %vm3166, %v3079
      %3172 = vst.msk [vmem:[#allocation5 + $0x14] sm:$0xf] %vm3166, %v3081
      %3173 = vst.msk [vmem:[#allocation5 + $0x18] sm:$0xf] %vm3166, %v3083
      %3174 = vst.msk [vmem:[#allocation5 + $0x1c] sm:$0xf] %vm3166, %v3085
      %3175 = vst.msk [vmem:[#allocation5 + $0x20] sm:$0xf] %vm3166, %v3087
      %3176 = vst.msk [vmem:[#allocation5 + $0x24] sm:$0xf] %vm3166, %v3089
      %3177 = vst.msk [vmem:[#allocation5 + $0x28] sm:$0xf] %vm3166, %v3091
      %3178 = vst.msk [vmem:[#allocation5 + $0x2c] sm:$0xf] %vm3166, %v3093
      %3179 = vst.msk [vmem:[#allocation5 + $0x30] sm:$0xf] %vm3166, %v3095
      %3180 = vst.msk [vmem:[#allocation5 + $0x34] sm:$0xf] %vm3166, %v3097
      %3181 = vst.msk [vmem:[#allocation5 + $0x38] sm:$0xf] %vm3166, %v3099
      %3182 = vst.msk [vmem:[#allocation5 + $0x3c] sm:$0xf] %vm3166, %v3101
      %3183 = vst.msk [vmem:[#allocation5 + $0x40] sm:$0xf] %vm3166, %v3103
      %3184 = vst.msk [vmem:[#allocation5 + $0x44] sm:$0xf] %vm3166, %v3105
      %3185 = vst.msk [vmem:[#allocation5 + $0x48] sm:$0xf] %vm3166, %v3107
      %3186 = vst.msk [vmem:[#allocation5 + $0x4c] sm:$0xf] %vm3166, %v3109
      %3187 = vst.msk [vmem:[#allocation5 + $0x50] sm:$0xf] %vm3166, %v3111
      %3188 = vst.msk [vmem:[#allocation5 + $0x54] sm:$0xf] %vm3166, %v3113
      %3189 = vst.msk [vmem:[#allocation5 + $0x58] sm:$0xf] %vm3166, %v3115
      %3190 = vst.msk [vmem:[#allocation5 + $0x5c] sm:$0xf] %vm3166, %v3117
      %3191 = vst.msk [vmem:[#allocation5 + $0x60] sm:$0xf] %vm3166, %v3119
      %3192 = vst.msk [vmem:[#allocation5 + $0x64] sm:$0xf] %vm3166, %v3121
      %3193 = vst.msk [vmem:[#allocation5 + $0x68] sm:$0xf] %vm3166, %v3123
      %3194 = vst.msk [vmem:[#allocation5 + $0x6c] sm:$0xf] %vm3166, %v3125
      %3195 = vst.msk [vmem:[#allocation5 + $0x70] sm:$0xf] %vm3166, %v3127
      %3196 = vst.msk [vmem:[#allocation5 + $0x74] sm:$0xf] %vm3166, %v3129
      %3197 = vst.msk [vmem:[#allocation5 + $0x78] sm:$0xf] %vm3166, %v3131
      %3198 = vst.msk [vmem:[#allocation5 + $0x7c] sm:$0xf] %vm3166, %v3133
      %v3199 = vld [vmem:[#allocation4 + $0x2] sm:$0xff]
      %v3200 = vld [vmem:[#allocation4 + $0xa] sm:$0xff]
      %v3201 = vld [vmem:[#allocation4 + $0x1a] sm:$0xff]
      %v3202 = vld [vmem:[#allocation4 + $0x22] sm:$0xff]
      %v3203 = vld [vmem:[#allocation4 + $0x32] sm:$0xff]
      %v3204 = vld [vmem:[#allocation4 + $0x3a] sm:$0xff]
      %v3205 = vld [vmem:[#allocation4 + $0x4a] sm:$0xff]
      %v3206 = vld [vmem:[#allocation4 + $0x52] sm:$0xff]
      %v3207 = vld [vmem:[#allocation4 + $0x62] sm:$0xff]
      %v3208 = vld [vmem:[#allocation4 + $0x6a] sm:$0xff]
      %v3209 = vld [vmem:[#allocation4 + $0x7a] sm:$0xff]
      %v3210 = vld [vmem:[#allocation4 + $0x82] sm:$0xff]
      %v3211 = vld [vmem:[#allocation4 + $0x92] sm:$0xff]
      %v3212 = vld [vmem:[#allocation4 + $0x9a] sm:$0xff]
      %v3213 = vld [vmem:[#allocation4 + $0xaa] sm:$0xff]
      %v3214 = vld [vmem:[#allocation4 + $0xb2] sm:$0xff]
      %v3215 = vld [vmem:[#allocation4 + $0xc2] sm:$0xff]
      %v3216 = vld [vmem:[#allocation4 + $0xca] sm:$0xff]
      %v3217 = vld [vmem:[#allocation4 + $0xda] sm:$0xff]
      %v3218 = vld [vmem:[#allocation4 + $0xe2] sm:$0xff]
      %v3219 = vld [vmem:[#allocation4 + $0xf2] sm:$0xff]
      %v3220 = vld [vmem:[#allocation4 + $0xfa] sm:$0xff]
      %v3221 = vld [vmem:[#allocation4 + $0x10a] sm:$0xff]
      %v3222 = vld [vmem:[#allocation4 + $0x112] sm:$0xff]
      %v3223 = vld [vmem:[#allocation4 + $0x122] sm:$0xff]
      %v3224 = vld [vmem:[#allocation4 + $0x12a] sm:$0xff]
      %v3225 = vld [vmem:[#allocation4 + $0x13a] sm:$0xff]
      %v3226 = vld [vmem:[#allocation4 + $0x142] sm:$0xff]
      %v3227 = vld [vmem:[#allocation4 + $0x152] sm:$0xff]
      %v3228 = vld [vmem:[#allocation4 + $0x15a] sm:$0xff]
      %v3229 = vld [vmem:[#allocation4 + $0x16a] sm:$0xff]
      %v3230 = vld [vmem:[#allocation4 + $0x172] sm:$0xff]
      %v3231 = vpack.c.bf16 %v3199, %v3199
      %v3232 = vpack.c.bf16 %v3200, %v3200
      %v3233 = vpack.c.bf16 %v3201, %v3201
      %v3234 = vpack.c.bf16 %v3202, %v3202
      %v3235 = vpack.c.bf16 %v3203, %v3203
      %v3236 = vpack.c.bf16 %v3204, %v3204
      %v3237 = vpack.c.bf16 %v3205, %v3205
      %v3238 = vpack.c.bf16 %v3206, %v3206
      %v3239 = vpack.c.bf16 %v3207, %v3207
      %v3240 = vpack.c.bf16 %v3208, %v3208
      %v3241 = vpack.c.bf16 %v3209, %v3209
      %v3242 = vpack.c.bf16 %v3210, %v3210
      %v3243 = vpack.c.bf16 %v3211, %v3211
      %v3244 = vpack.c.bf16 %v3212, %v3212
      %v3245 = vpack.c.bf16 %v3213, %v3213
      %v3246 = vpack.c.bf16 %v3214, %v3214
      %v3247 = vpack.c.bf16 %v3215, %v3215
      %v3248 = vpack.c.bf16 %v3216, %v3216
      %v3249 = vpack.c.bf16 %v3217, %v3217
      %v3250 = vpack.c.bf16 %v3218, %v3218
      %v3251 = vpack.c.bf16 %v3219, %v3219
      %v3252 = vpack.c.bf16 %v3220, %v3220
      %v3253 = vpack.c.bf16 %v3221, %v3221
      %v3254 = vpack.c.bf16 %v3222, %v3222
      %v3255 = vpack.c.bf16 %v3223, %v3223
      %v3256 = vpack.c.bf16 %v3224, %v3224
      %v3257 = vpack.c.bf16 %v3225, %v3225
      %v3258 = vpack.c.bf16 %v3226, %v3226
      %v3259 = vpack.c.bf16 %v3227, %v3227
      %v3260 = vpack.c.bf16 %v3228, %v3228
      %v3261 = vpack.c.bf16 %v3229, %v3229
      %v3262 = vpack.c.bf16 %v3230, %v3230
      %3295 = vrot.lane.b32.xlu0 %v3231, 16
      %v3296 = vpop.permute.xlu0 %3295
      %3297 = vrot.lane.b32.xlu0 %v3232, 16
      %v3298 = vpop.permute.xlu0 %3297
      %3299 = vrot.lane.b32.xlu0 %v3233, 16
      %v3300 = vpop.permute.xlu0 %3299
      %3301 = vrot.lane.b32.xlu0 %v3234, 16
      %v3302 = vpop.permute.xlu0 %3301
      %3303 = vrot.lane.b32.xlu0 %v3235, 16
      %v3304 = vpop.permute.xlu0 %3303
      %3305 = vrot.lane.b32.xlu0 %v3236, 16
      %v3306 = vpop.permute.xlu0 %3305
      %3307 = vrot.lane.b32.xlu0 %v3237, 16
      %v3308 = vpop.permute.xlu0 %3307
      %3309 = vrot.lane.b32.xlu0 %v3238, 16
      %v3310 = vpop.permute.xlu0 %3309
      %3311 = vrot.lane.b32.xlu0 %v3239, 16
      %v3312 = vpop.permute.xlu0 %3311
      %3313 = vrot.lane.b32.xlu0 %v3240, 16
      %v3314 = vpop.permute.xlu0 %3313
      %3315 = vrot.lane.b32.xlu0 %v3241, 16
      %v3316 = vpop.permute.xlu0 %3315
      %3317 = vrot.lane.b32.xlu0 %v3242, 16
      %v3318 = vpop.permute.xlu0 %3317
      %3319 = vrot.lane.b32.xlu0 %v3243, 16
      %v3320 = vpop.permute.xlu0 %3319
      %3321 = vrot.lane.b32.xlu0 %v3244, 16
      %v3322 = vpop.permute.xlu0 %3321
      %3323 = vrot.lane.b32.xlu0 %v3245, 16
      %v3324 = vpop.permute.xlu0 %3323
      %3325 = vrot.lane.b32.xlu0 %v3246, 16
      %v3326 = vpop.permute.xlu0 %3325
      %3327 = vrot.lane.b32.xlu0 %v3247, 16
      %v3328 = vpop.permute.xlu0 %3327
      %3329 = vrot.lane.b32.xlu0 %v3248, 16
      %v3330 = vpop.permute.xlu0 %3329
      %3331 = vrot.lane.b32.xlu0 %v3249, 16
      %v3332 = vpop.permute.xlu0 %3331
      %3333 = vrot.lane.b32.xlu0 %v3250, 16
      %v3334 = vpop.permute.xlu0 %3333
      %3335 = vrot.lane.b32.xlu0 %v3251, 16
      %v3336 = vpop.permute.xlu0 %3335
      %3337 = vrot.lane.b32.xlu0 %v3252, 16
      %v3338 = vpop.permute.xlu0 %3337
      %3339 = vrot.lane.b32.xlu0 %v3253, 16
      %v3340 = vpop.permute.xlu0 %3339
      %3341 = vrot.lane.b32.xlu0 %v3254, 16
      %v3342 = vpop.permute.xlu0 %3341
      %3343 = vrot.lane.b32.xlu0 %v3255, 16
      %v3344 = vpop.permute.xlu0 %3343
      %3345 = vrot.lane.b32.xlu0 %v3256, 16
      %v3346 = vpop.permute.xlu0 %3345
      %3347 = vrot.lane.b32.xlu0 %v3257, 16
      %v3348 = vpop.permute.xlu0 %3347
      %3349 = vrot.lane.b32.xlu0 %v3258, 16
      %v3350 = vpop.permute.xlu0 %3349
      %3351 = vrot.lane.b32.xlu0 %v3259, 16
      %v3352 = vpop.permute.xlu0 %3351
      %3353 = vrot.lane.b32.xlu0 %v3260, 16
      %v3354 = vpop.permute.xlu0 %3353
      %3355 = vrot.lane.b32.xlu0 %v3261, 16
      %v3356 = vpop.permute.xlu0 %3355
      %3357 = vrot.lane.b32.xlu0 %v3262, 16
      %v3358 = vpop.permute.xlu0 %3357
      %vm3391 = vcmask 191616
      %3392 = vst.msk [vmem:[#allocation5] sm:$0xf] %vm3391, %v3296
      %3393 = vst.msk [vmem:[#allocation5 + $0x4] sm:$0xf] %vm3391, %v3298
      %3394 = vst.msk [vmem:[#allocation5 + $0x8] sm:$0xf] %vm3391, %v3300
      %3395 = vst.msk [vmem:[#allocation5 + $0xc] sm:$0xf] %vm3391, %v3302
      %3396 = vst.msk [vmem:[#allocation5 + $0x10] sm:$0xf] %vm3391, %v3304
      %3397 = vst.msk [vmem:[#allocation5 + $0x14] sm:$0xf] %vm3391, %v3306
      %3398 = vst.msk [vmem:[#allocation5 + $0x18] sm:$0xf] %vm3391, %v3308
      %3399 = vst.msk [vmem:[#allocation5 + $0x1c] sm:$0xf] %vm3391, %v3310
      %3400 = vst.msk [vmem:[#allocation5 + $0x20] sm:$0xf] %vm3391, %v3312
      %3401 = vst.msk [vmem:[#allocation5 + $0x24] sm:$0xf] %vm3391, %v3314
      %3402 = vst.msk [vmem:[#allocation5 + $0x28] sm:$0xf] %vm3391, %v3316
      %3403 = vst.msk [vmem:[#allocation5 + $0x2c] sm:$0xf] %vm3391, %v3318
      %3404 = vst.msk [vmem:[#allocation5 + $0x30] sm:$0xf] %vm3391, %v3320
      %3405 = vst.msk [vmem:[#allocation5 + $0x34] sm:$0xf] %vm3391, %v3322
      %3406 = vst.msk [vmem:[#allocation5 + $0x38] sm:$0xf] %vm3391, %v3324
      %3407 = vst.msk [vmem:[#allocation5 + $0x3c] sm:$0xf] %vm3391, %v3326
      %3408 = vst.msk [vmem:[#allocation5 + $0x40] sm:$0xf] %vm3391, %v3328
      %3409 = vst.msk [vmem:[#allocation5 + $0x44] sm:$0xf] %vm3391, %v3330
      %3410 = vst.msk [vmem:[#allocation5 + $0x48] sm:$0xf] %vm3391, %v3332
      %3411 = vst.msk [vmem:[#allocation5 + $0x4c] sm:$0xf] %vm3391, %v3334
      %3412 = vst.msk [vmem:[#allocation5 + $0x50] sm:$0xf] %vm3391, %v3336
      %3413 = vst.msk [vmem:[#allocation5 + $0x54] sm:$0xf] %vm3391, %v3338
      %3414 = vst.msk [vmem:[#allocation5 + $0x58] sm:$0xf] %vm3391, %v3340
      %3415 = vst.msk [vmem:[#allocation5 + $0x5c] sm:$0xf] %vm3391, %v3342
      %3416 = vst.msk [vmem:[#allocation5 + $0x60] sm:$0xf] %vm3391, %v3344
      %3417 = vst.msk [vmem:[#allocation5 + $0x64] sm:$0xf] %vm3391, %v3346
      %3418 = vst.msk [vmem:[#allocation5 + $0x68] sm:$0xf] %vm3391, %v3348
      %3419 = vst.msk [vmem:[#allocation5 + $0x6c] sm:$0xf] %vm3391, %v3350
      %3420 = vst.msk [vmem:[#allocation5 + $0x70] sm:$0xf] %vm3391, %v3352
      %3421 = vst.msk [vmem:[#allocation5 + $0x74] sm:$0xf] %vm3391, %v3354
      %3422 = vst.msk [vmem:[#allocation5 + $0x78] sm:$0xf] %vm3391, %v3356
      %3423 = vst.msk [vmem:[#allocation5 + $0x7c] sm:$0xf] %vm3391, %v3358
      %v3424 = vld [vmem:[%s2844] sm:$0xff]
      %v3425 = vld [vmem:[%s2844 + $0x8] sm:$0xff]
      %v3426 = vld [vmem:[%s2844 + $0x18] sm:$0xff]
      %v3427 = vld [vmem:[%s2844 + $0x20] sm:$0xff]
      %v3428 = vld [vmem:[%s2844 + $0x30] sm:$0xff]
      %v3429 = vld [vmem:[%s2844 + $0x38] sm:$0xff]
      %v3430 = vld [vmem:[%s2844 + $0x48] sm:$0xff]
      %v3431 = vld [vmem:[%s2844 + $0x50] sm:$0xff]
      %v3432 = vld [vmem:[%s2844 + $0x60] sm:$0xff]
      %v3433 = vld [vmem:[%s2844 + $0x68] sm:$0xff]
      %v3434 = vld [vmem:[%s2844 + $0x78] sm:$0xff]
      %v3435 = vld [vmem:[%s2844 + $0x80] sm:$0xff]
      %v3436 = vld [vmem:[%s2844 + $0x90] sm:$0xff]
      %v3437 = vld [vmem:[%s2844 + $0x98] sm:$0xff]
      %v3438 = vld [vmem:[%s2844 + $0xa8] sm:$0xff]
      %v3439 = vld [vmem:[%s2844 + $0xb0] sm:$0xff]
      %v3440 = vld [vmem:[%s2844 + $0xc0] sm:$0xff]
      %v3441 = vld [vmem:[%s2844 + $0xc8] sm:$0xff]
      %v3442 = vld [vmem:[%s2844 + $0xd8] sm:$0xff]
      %v3443 = vld [vmem:[%s2844 + $0xe0] sm:$0xff]
      %v3444 = vld [vmem:[%s2844 + $0xf0] sm:$0xff]
      %v3445 = vld [vmem:[%s2844 + $0xf8] sm:$0xff]
      %v3446 = vld [vmem:[%s2844 + $0x108] sm:$0xff]
      %v3447 = vld [vmem:[%s2844 + $0x110] sm:$0xff]
      %v3448 = vld [vmem:[%s2844 + $0x120] sm:$0xff]
      %v3449 = vld [vmem:[%s2844 + $0x128] sm:$0xff]
      %v3450 = vld [vmem:[%s2844 + $0x138] sm:$0xff]
      %v3451 = vld [vmem:[%s2844 + $0x140] sm:$0xff]
      %v3452 = vld [vmem:[%s2844 + $0x150] sm:$0xff]
      %v3453 = vld [vmem:[%s2844 + $0x158] sm:$0xff]
      %v3454 = vld [vmem:[%s2844 + $0x168] sm:$0xff]
      %v3455 = vld [vmem:[%s2844 + $0x170] sm:$0xff]
      %v3456 = vpack.c.bf16 %v3424, %v3424
      %v3457 = vpack.c.bf16 %v3425, %v3425
      %v3458 = vpack.c.bf16 %v3426, %v3426
      %v3459 = vpack.c.bf16 %v3427, %v3427
      %v3460 = vpack.c.bf16 %v3428, %v3428
      %v3461 = vpack.c.bf16 %v3429, %v3429
      %v3462 = vpack.c.bf16 %v3430, %v3430
      %v3463 = vpack.c.bf16 %v3431, %v3431
      %v3464 = vpack.c.bf16 %v3432, %v3432
      %v3465 = vpack.c.bf16 %v3433, %v3433
      %v3466 = vpack.c.bf16 %v3434, %v3434
      %v3467 = vpack.c.bf16 %v3435, %v3435
      %v3468 = vpack.c.bf16 %v3436, %v3436
      %v3469 = vpack.c.bf16 %v3437, %v3437
      %v3470 = vpack.c.bf16 %v3438, %v3438
      %v3471 = vpack.c.bf16 %v3439, %v3439
      %v3472 = vpack.c.bf16 %v3440, %v3440
      %v3473 = vpack.c.bf16 %v3441, %v3441
      %v3474 = vpack.c.bf16 %v3442, %v3442
      %v3475 = vpack.c.bf16 %v3443, %v3443
      %v3476 = vpack.c.bf16 %v3444, %v3444
      %v3477 = vpack.c.bf16 %v3445, %v3445
      %v3478 = vpack.c.bf16 %v3446, %v3446
      %v3479 = vpack.c.bf16 %v3447, %v3447
      %v3480 = vpack.c.bf16 %v3448, %v3448
      %v3481 = vpack.c.bf16 %v3449, %v3449
      %v3482 = vpack.c.bf16 %v3450, %v3450
      %v3483 = vpack.c.bf16 %v3451, %v3451
      %v3484 = vpack.c.bf16 %v3452, %v3452
      %v3485 = vpack.c.bf16 %v3453, %v3453
      %v3486 = vpack.c.bf16 %v3454, %v3454
      %v3487 = vpack.c.bf16 %v3455, %v3455
      %3520 = vrot.lane.b32.xlu0 %v3456, 24
      %v3521 = vpop.permute.xlu0 %3520
      %3522 = vrot.lane.b32.xlu0 %v3457, 24
      %v3523 = vpop.permute.xlu0 %3522
      %3524 = vrot.lane.b32.xlu0 %v3458, 24
      %v3525 = vpop.permute.xlu0 %3524
      %3526 = vrot.lane.b32.xlu0 %v3459, 24
      %v3527 = vpop.permute.xlu0 %3526
      %3528 = vrot.lane.b32.xlu0 %v3460, 24
      %v3529 = vpop.permute.xlu0 %3528
      %3530 = vrot.lane.b32.xlu0 %v3461, 24
      %v3531 = vpop.permute.xlu0 %3530
      %3532 = vrot.lane.b32.xlu0 %v3462, 24
      %v3533 = vpop.permute.xlu0 %3532
      %3534 = vrot.lane.b32.xlu0 %v3463, 24
      %v3535 = vpop.permute.xlu0 %3534
      %3536 = vrot.lane.b32.xlu0 %v3464, 24
      %v3537 = vpop.permute.xlu0 %3536
      %3538 = vrot.lane.b32.xlu0 %v3465, 24
      %v3539 = vpop.permute.xlu0 %3538
      %3540 = vrot.lane.b32.xlu0 %v3466, 24
      %v3541 = vpop.permute.xlu0 %3540
      %3542 = vrot.lane.b32.xlu0 %v3467, 24
      %v3543 = vpop.permute.xlu0 %3542
      %3544 = vrot.lane.b32.xlu0 %v3468, 24
      %v3545 = vpop.permute.xlu0 %3544
      %3546 = vrot.lane.b32.xlu0 %v3469, 24
      %v3547 = vpop.permute.xlu0 %3546
      %3548 = vrot.lane.b32.xlu0 %v3470, 24
      %v3549 = vpop.permute.xlu0 %3548
      %3550 = vrot.lane.b32.xlu0 %v3471, 24
      %v3551 = vpop.permute.xlu0 %3550
      %3552 = vrot.lane.b32.xlu0 %v3472, 24
      %v3553 = vpop.permute.xlu0 %3552
      %3554 = vrot.lane.b32.xlu0 %v3473, 24
      %v3555 = vpop.permute.xlu0 %3554
      %3556 = vrot.lane.b32.xlu0 %v3474, 24
      %v3557 = vpop.permute.xlu0 %3556
      %3558 = vrot.lane.b32.xlu0 %v3475, 24
      %v3559 = vpop.permute.xlu0 %3558
      %3560 = vrot.lane.b32.xlu0 %v3476, 24
      %v3561 = vpop.permute.xlu0 %3560
      %3562 = vrot.lane.b32.xlu0 %v3477, 24
      %v3563 = vpop.permute.xlu0 %3562
      %3564 = vrot.lane.b32.xlu0 %v3478, 24
      %v3565 = vpop.permute.xlu0 %3564
      %3566 = vrot.lane.b32.xlu0 %v3479, 24
      %v3567 = vpop.permute.xlu0 %3566
      %3568 = vrot.lane.b32.xlu0 %v3480, 24
      %v3569 = vpop.permute.xlu0 %3568
      %3570 = vrot.lane.b32.xlu0 %v3481, 24
      %v3571 = vpop.permute.xlu0 %3570
      %3572 = vrot.lane.b32.xlu0 %v3482, 24
      %v3573 = vpop.permute.xlu0 %3572
      %3574 = vrot.lane.b32.xlu0 %v3483, 24
      %v3575 = vpop.permute.xlu0 %3574
      %3576 = vrot.lane.b32.xlu0 %v3484, 24
      %v3577 = vpop.permute.xlu0 %3576
      %3578 = vrot.lane.b32.xlu0 %v3485, 24
      %v3579 = vpop.permute.xlu0 %3578
      %3580 = vrot.lane.b32.xlu0 %v3486, 24
      %v3581 = vpop.permute.xlu0 %3580
      %3582 = vrot.lane.b32.xlu0 %v3487, 24
      %v3583 = vpop.permute.xlu0 %3582
      %vm3616 = vcmask 257216
      %3617 = vst.msk [vmem:[#allocation5] sm:$0xf] %vm3616, %v3521
      %3618 = vst.msk [vmem:[#allocation5 + $0x4] sm:$0xf] %vm3616, %v3523
      %3619 = vst.msk [vmem:[#allocation5 + $0x8] sm:$0xf] %vm3616, %v3525
      %3620 = vst.msk [vmem:[#allocation5 + $0xc] sm:$0xf] %vm3616, %v3527
      %3621 = vst.msk [vmem:[#allocation5 + $0x10] sm:$0xf] %vm3616, %v3529
      %3622 = vst.msk [vmem:[#allocation5 + $0x14] sm:$0xf] %vm3616, %v3531
      %3623 = vst.msk [vmem:[#allocation5 + $0x18] sm:$0xf] %vm3616, %v3533
      %3624 = vst.msk [vmem:[#allocation5 + $0x1c] sm:$0xf] %vm3616, %v3535
      %3625 = vst.msk [vmem:[#allocation5 + $0x20] sm:$0xf] %vm3616, %v3537
      %3626 = vst.msk [vmem:[#allocation5 + $0x24] sm:$0xf] %vm3616, %v3539
      %3627 = vst.msk [vmem:[#allocation5 + $0x28] sm:$0xf] %vm3616, %v3541
      %3628 = vst.msk [vmem:[#allocation5 + $0x2c] sm:$0xf] %vm3616, %v3543
      %3629 = vst.msk [vmem:[#allocation5 + $0x30] sm:$0xf] %vm3616, %v3545
      %3630 = vst.msk [vmem:[#allocation5 + $0x34] sm:$0xf] %vm3616, %v3547
      %3631 = vst.msk [vmem:[#allocation5 + $0x38] sm:$0xf] %vm3616, %v3549
      %3632 = vst.msk [vmem:[#allocation5 + $0x3c] sm:$0xf] %vm3616, %v3551
      %3633 = vst.msk [vmem:[#allocation5 + $0x40] sm:$0xf] %vm3616, %v3553
      %3634 = vst.msk [vmem:[#allocation5 + $0x44] sm:$0xf] %vm3616, %v3555
      %3635 = vst.msk [vmem:[#allocation5 + $0x48] sm:$0xf] %vm3616, %v3557
      %3636 = vst.msk [vmem:[#allocation5 + $0x4c] sm:$0xf] %vm3616, %v3559
      %3637 = vst.msk [vmem:[#allocation5 + $0x50] sm:$0xf] %vm3616, %v3561
      %3638 = vst.msk [vmem:[#allocation5 + $0x54] sm:$0xf] %vm3616, %v3563
      %3639 = vst.msk [vmem:[#allocation5 + $0x58] sm:$0xf] %vm3616, %v3565
      %3640 = vst.msk [vmem:[#allocation5 + $0x5c] sm:$0xf] %vm3616, %v3567
      %3641 = vst.msk [vmem:[#allocation5 + $0x60] sm:$0xf] %vm3616, %v3569
      %3642 = vst.msk [vmem:[#allocation5 + $0x64] sm:$0xf] %vm3616, %v3571
      %3643 = vst.msk [vmem:[#allocation5 + $0x68] sm:$0xf] %vm3616, %v3573
      %3644 = vst.msk [vmem:[#allocation5 + $0x6c] sm:$0xf] %vm3616, %v3575
      %3645 = vst.msk [vmem:[#allocation5 + $0x70] sm:$0xf] %vm3616, %v3577
      %3646 = vst.msk [vmem:[#allocation5 + $0x74] sm:$0xf] %vm3616, %v3579
      %3647 = vst.msk [vmem:[#allocation5 + $0x78] sm:$0xf] %vm3616, %v3581
      %3648 = vst.msk [vmem:[#allocation5 + $0x7c] sm:$0xf] %vm3616, %v3583
      %v3649 = vld [vmem:[%s2844 + $0x1] sm:$0xff]
      %v3650 = vld [vmem:[%s2844 + $0x9] sm:$0xff]
      %v3651 = vld [vmem:[%s2844 + $0x19] sm:$0xff]
      %v3652 = vld [vmem:[%s2844 + $0x21] sm:$0xff]
      %v3653 = vld [vmem:[%s2844 + $0x31] sm:$0xff]
      %v3654 = vld [vmem:[%s2844 + $0x39] sm:$0xff]
      %v3655 = vld [vmem:[%s2844 + $0x49] sm:$0xff]
      %v3656 = vld [vmem:[%s2844 + $0x51] sm:$0xff]
      %v3657 = vld [vmem:[%s2844 + $0x61] sm:$0xff]
      %v3658 = vld [vmem:[%s2844 + $0x69] sm:$0xff]
      %v3659 = vld [vmem:[%s2844 + $0x79] sm:$0xff]
      %v3660 = vld [vmem:[%s2844 + $0x81] sm:$0xff]
      %v3661 = vld [vmem:[%s2844 + $0x91] sm:$0xff]
      %v3662 = vld [vmem:[%s2844 + $0x99] sm:$0xff]
      %v3663 = vld [vmem:[%s2844 + $0xa9] sm:$0xff]
      %v3664 = vld [vmem:[%s2844 + $0xb1] sm:$0xff]
      %v3665 = vld [vmem:[%s2844 + $0xc1] sm:$0xff]
      %v3666 = vld [vmem:[%s2844 + $0xc9] sm:$0xff]
      %v3667 = vld [vmem:[%s2844 + $0xd9] sm:$0xff]
      %v3668 = vld [vmem:[%s2844 + $0xe1] sm:$0xff]
      %v3669 = vld [vmem:[%s2844 + $0xf1] sm:$0xff]
      %v3670 = vld [vmem:[%s2844 + $0xf9] sm:$0xff]
      %v3671 = vld [vmem:[%s2844 + $0x109] sm:$0xff]
      %v3672 = vld [vmem:[%s2844 + $0x111] sm:$0xff]
      %v3673 = vld [vmem:[%s2844 + $0x121] sm:$0xff]
      %v3674 = vld [vmem:[%s2844 + $0x129] sm:$0xff]
      %v3675 = vld [vmem:[%s2844 + $0x139] sm:$0xff]
      %v3676 = vld [vmem:[%s2844 + $0x141] sm:$0xff]
      %v3677 = vld [vmem:[%s2844 + $0x151] sm:$0xff]
      %v3678 = vld [vmem:[%s2844 + $0x159] sm:$0xff]
      %v3679 = vld [vmem:[%s2844 + $0x169] sm:$0xff]
      %v3680 = vld [vmem:[%s2844 + $0x171] sm:$0xff]
      %v3681 = vpack.c.bf16 %v3649, %v3649
      %v3682 = vpack.c.bf16 %v3650, %v3650
      %v3683 = vpack.c.bf16 %v3651, %v3651
      %v3684 = vpack.c.bf16 %v3652, %v3652
      %v3685 = vpack.c.bf16 %v3653, %v3653
      %v3686 = vpack.c.bf16 %v3654, %v3654
      %v3687 = vpack.c.bf16 %v3655, %v3655
      %v3688 = vpack.c.bf16 %v3656, %v3656
      %v3689 = vpack.c.bf16 %v3657, %v3657
      %v3690 = vpack.c.bf16 %v3658, %v3658
      %v3691 = vpack.c.bf16 %v3659, %v3659
      %v3692 = vpack.c.bf16 %v3660, %v3660
      %v3693 = vpack.c.bf16 %v3661, %v3661
      %v3694 = vpack.c.bf16 %v3662, %v3662
      %v3695 = vpack.c.bf16 %v3663, %v3663
      %v3696 = vpack.c.bf16 %v3664, %v3664
      %v3697 = vpack.c.bf16 %v3665, %v3665
      %v3698 = vpack.c.bf16 %v3666, %v3666
      %v3699 = vpack.c.bf16 %v3667, %v3667
      %v3700 = vpack.c.bf16 %v3668, %v3668
      %v3701 = vpack.c.bf16 %v3669, %v3669
      %v3702 = vpack.c.bf16 %v3670, %v3670
      %v3703 = vpack.c.bf16 %v3671, %v3671
      %v3704 = vpack.c.bf16 %v3672, %v3672
      %v3705 = vpack.c.bf16 %v3673, %v3673
      %v3706 = vpack.c.bf16 %v3674, %v3674
      %v3707 = vpack.c.bf16 %v3675, %v3675
      %v3708 = vpack.c.bf16 %v3676, %v3676
      %v3709 = vpack.c.bf16 %v3677, %v3677
      %v3710 = vpack.c.bf16 %v3678, %v3678
      %v3711 = vpack.c.bf16 %v3679, %v3679
      %v3712 = vpack.c.bf16 %v3680, %v3680
      %3745 = vrot.lane.b32.xlu0 %v3681, 32
      %v3746 = vpop.permute.xlu0 %3745
      %3747 = vrot.lane.b32.xlu0 %v3682, 32
      %v3748 = vpop.permute.xlu0 %3747
      %3749 = vrot.lane.b32.xlu0 %v3683, 32
      %v3750 = vpop.permute.xlu0 %3749
      %3751 = vrot.lane.b32.xlu0 %v3684, 32
      %v3752 = vpop.permute.xlu0 %3751
      %3753 = vrot.lane.b32.xlu0 %v3685, 32
      %v3754 = vpop.permute.xlu0 %3753
      %3755 = vrot.lane.b32.xlu0 %v3686, 32
      %v3756 = vpop.permute.xlu0 %3755
      %3757 = vrot.lane.b32.xlu0 %v3687, 32
      %v3758 = vpop.permute.xlu0 %3757
      %3759 = vrot.lane.b32.xlu0 %v3688, 32
      %v3760 = vpop.permute.xlu0 %3759
      %3761 = vrot.lane.b32.xlu0 %v3689, 32
      %v3762 = vpop.permute.xlu0 %3761
      %3763 = vrot.lane.b32.xlu0 %v3690, 32
      %v3764 = vpop.permute.xlu0 %3763
      %3765 = vrot.lane.b32.xlu0 %v3691, 32
      %v3766 = vpop.permute.xlu0 %3765
      %3767 = vrot.lane.b32.xlu0 %v3692, 32
      %v3768 = vpop.permute.xlu0 %3767
      %3769 = vrot.lane.b32.xlu0 %v3693, 32
      %v3770 = vpop.permute.xlu0 %3769
      %3771 = vrot.lane.b32.xlu0 %v3694, 32
      %v3772 = vpop.permute.xlu0 %3771
      %3773 = vrot.lane.b32.xlu0 %v3695, 32
      %v3774 = vpop.permute.xlu0 %3773
      %3775 = vrot.lane.b32.xlu0 %v3696, 32
      %v3776 = vpop.permute.xlu0 %3775
      %3777 = vrot.lane.b32.xlu0 %v3697, 32
      %v3778 = vpop.permute.xlu0 %3777
      %3779 = vrot.lane.b32.xlu0 %v3698, 32
      %v3780 = vpop.permute.xlu0 %3779
      %3781 = vrot.lane.b32.xlu0 %v3699, 32
      %v3782 = vpop.permute.xlu0 %3781
      %3783 = vrot.lane.b32.xlu0 %v3700, 32
      %v3784 = vpop.permute.xlu0 %3783
      %3785 = vrot.lane.b32.xlu0 %v3701, 32
      %v3786 = vpop.permute.xlu0 %3785
      %3787 = vrot.lane.b32.xlu0 %v3702, 32
      %v3788 = vpop.permute.xlu0 %3787
      %3789 = vrot.lane.b32.xlu0 %v3703, 32
      %v3790 = vpop.permute.xlu0 %3789
      %3791 = vrot.lane.b32.xlu0 %v3704, 32
      %v3792 = vpop.permute.xlu0 %3791
      %3793 = vrot.lane.b32.xlu0 %v3705, 32
      %v3794 = vpop.permute.xlu0 %3793
      %3795 = vrot.lane.b32.xlu0 %v3706, 32
      %v3796 = vpop.permute.xlu0 %3795
      %3797 = vrot.lane.b32.xlu0 %v3707, 32
      %v3798 = vpop.permute.xlu0 %3797
      %3799 = vrot.lane.b32.xlu0 %v3708, 32
      %v3800 = vpop.permute.xlu0 %3799
      %3801 = vrot.lane.b32.xlu0 %v3709, 32
      %v3802 = vpop.permute.xlu0 %3801
      %3803 = vrot.lane.b32.xlu0 %v3710, 32
      %v3804 = vpop.permute.xlu0 %3803
      %3805 = vrot.lane.b32.xlu0 %v3711, 32
      %v3806 = vpop.permute.xlu0 %3805
      %3807 = vrot.lane.b32.xlu0 %v3712, 32
      %v3808 = vpop.permute.xlu0 %3807
      %vm3841 = vcmask 322816
      %3842 = vst.msk [vmem:[#allocation5] sm:$0xf] %vm3841, %v3746
      %3843 = vst.msk [vmem:[#allocation5 + $0x4] sm:$0xf] %vm3841, %v3748
      %3844 = vst.msk [vmem:[#allocation5 + $0x8] sm:$0xf] %vm3841, %v3750
      %3845 = vst.msk [vmem:[#allocation5 + $0xc] sm:$0xf] %vm3841, %v3752
      %3846 = vst.msk [vmem:[#allocation5 + $0x10] sm:$0xf] %vm3841, %v3754
      %3847 = vst.msk [vmem:[#allocation5 + $0x14] sm:$0xf] %vm3841, %v3756
      %3848 = vst.msk [vmem:[#allocation5 + $0x18] sm:$0xf] %vm3841, %v3758
      %3849 = vst.msk [vmem:[#allocation5 + $0x1c] sm:$0xf] %vm3841, %v3760
      %3850 = vst.msk [vmem:[#allocation5 + $0x20] sm:$0xf] %vm3841, %v3762
      %3851 = vst.msk [vmem:[#allocation5 + $0x24] sm:$0xf] %vm3841, %v3764
      %3852 = vst.msk [vmem:[#allocation5 + $0x28] sm:$0xf] %vm3841, %v3766
      %3853 = vst.msk [vmem:[#allocation5 + $0x2c] sm:$0xf] %vm3841, %v3768
      %3854 = vst.msk [vmem:[#allocation5 + $0x30] sm:$0xf] %vm3841, %v3770
      %3855 = vst.msk [vmem:[#allocation5 + $0x34] sm:$0xf] %vm3841, %v3772
      %3856 = vst.msk [vmem:[#allocation5 + $0x38] sm:$0xf] %vm3841, %v3774
      %3857 = vst.msk [vmem:[#allocation5 + $0x3c] sm:$0xf] %vm3841, %v3776
      %3858 = vst.msk [vmem:[#allocation5 + $0x40] sm:$0xf] %vm3841, %v3778
      %3859 = vst.msk [vmem:[#allocation5 + $0x44] sm:$0xf] %vm3841, %v3780
      %3860 = vst.msk [vmem:[#allocation5 + $0x48] sm:$0xf] %vm3841, %v3782
      %3861 = vst.msk [vmem:[#allocation5 + $0x4c] sm:$0xf] %vm3841, %v3784
      %3862 = vst.msk [vmem:[#allocation5 + $0x50] sm:$0xf] %vm3841, %v3786
      %3863 = vst.msk [vmem:[#allocation5 + $0x54] sm:$0xf] %vm3841, %v3788
      %3864 = vst.msk [vmem:[#allocation5 + $0x58] sm:$0xf] %vm3841, %v3790
      %3865 = vst.msk [vmem:[#allocation5 + $0x5c] sm:$0xf] %vm3841, %v3792
      %3866 = vst.msk [vmem:[#allocation5 + $0x60] sm:$0xf] %vm3841, %v3794
      %3867 = vst.msk [vmem:[#allocation5 + $0x64] sm:$0xf] %vm3841, %v3796
      %3868 = vst.msk [vmem:[#allocation5 + $0x68] sm:$0xf] %vm3841, %v3798
      %3869 = vst.msk [vmem:[#allocation5 + $0x6c] sm:$0xf] %vm3841, %v3800
      %3870 = vst.msk [vmem:[#allocation5 + $0x70] sm:$0xf] %vm3841, %v3802
      %3871 = vst.msk [vmem:[#allocation5 + $0x74] sm:$0xf] %vm3841, %v3804
      %3872 = vst.msk [vmem:[#allocation5 + $0x78] sm:$0xf] %vm3841, %v3806
      %3873 = vst.msk [vmem:[#allocation5 + $0x7c] sm:$0xf] %vm3841, %v3808
      %v3874 = vld [vmem:[%s2844 + $0x2] sm:$0xff]
      %v3875 = vld [vmem:[%s2844 + $0xa] sm:$0xff]
      %v3876 = vld [vmem:[%s2844 + $0x1a] sm:$0xff]
      %v3877 = vld [vmem:[%s2844 + $0x22] sm:$0xff]
      %v3878 = vld [vmem:[%s2844 + $0x32] sm:$0xff]
      %v3879 = vld [vmem:[%s2844 + $0x3a] sm:$0xff]
      %v3880 = vld [vmem:[%s2844 + $0x4a] sm:$0xff]
      %v3881 = vld [vmem:[%s2844 + $0x52] sm:$0xff]
      %v3882 = vld [vmem:[%s2844 + $0x62] sm:$0xff]
      %v3883 = vld [vmem:[%s2844 + $0x6a] sm:$0xff]
      %v3884 = vld [vmem:[%s2844 + $0x7a] sm:$0xff]
      %v3885 = vld [vmem:[%s2844 + $0x82] sm:$0xff]
      %v3886 = vld [vmem:[%s2844 + $0x92] sm:$0xff]
      %v3887 = vld [vmem:[%s2844 + $0x9a] sm:$0xff]
      %v3888 = vld [vmem:[%s2844 + $0xaa] sm:$0xff]
      %v3889 = vld [vmem:[%s2844 + $0xb2] sm:$0xff]
      %v3890 = vld [vmem:[%s2844 + $0xc2] sm:$0xff]
      %v3891 = vld [vmem:[%s2844 + $0xca] sm:$0xff]
      %v3892 = vld [vmem:[%s2844 + $0xda] sm:$0xff]
      %v3893 = vld [vmem:[%s2844 + $0xe2] sm:$0xff]
      %v3894 = vld [vmem:[%s2844 + $0xf2] sm:$0xff]
      %v3895 = vld [vmem:[%s2844 + $0xfa] sm:$0xff]
      %v3896 = vld [vmem:[%s2844 + $0x10a] sm:$0xff]
      %v3897 = vld [vmem:[%s2844 + $0x112] sm:$0xff]
      %v3898 = vld [vmem:[%s2844 + $0x122] sm:$0xff]
      %v3899 = vld [vmem:[%s2844 + $0x12a] sm:$0xff]
      %v3900 = vld [vmem:[%s2844 + $0x13a] sm:$0xff]
      %v3901 = vld [vmem:[%s2844 + $0x142] sm:$0xff]
      %v3902 = vld [vmem:[%s2844 + $0x152] sm:$0xff]
      %v3903 = vld [vmem:[%s2844 + $0x15a] sm:$0xff]
      %v3904 = vld [vmem:[%s2844 + $0x16a] sm:$0xff]
      %v3905 = vld [vmem:[%s2844 + $0x172] sm:$0xff]
      %v3906 = vpack.c.bf16 %v3874, %v3874
      %v3907 = vpack.c.bf16 %v3875, %v3875
      %v3908 = vpack.c.bf16 %v3876, %v3876
      %v3909 = vpack.c.bf16 %v3877, %v3877
      %v3910 = vpack.c.bf16 %v3878, %v3878
      %v3911 = vpack.c.bf16 %v3879, %v3879
      %v3912 = vpack.c.bf16 %v3880, %v3880
      %v3913 = vpack.c.bf16 %v3881, %v3881
      %v3914 = vpack.c.bf16 %v3882, %v3882
      %v3915 = vpack.c.bf16 %v3883, %v3883
      %v3916 = vpack.c.bf16 %v3884, %v3884
      %v3917 = vpack.c.bf16 %v3885, %v3885
      %v3918 = vpack.c.bf16 %v3886, %v3886
      %v3919 = vpack.c.bf16 %v3887, %v3887
      %v3920 = vpack.c.bf16 %v3888, %v3888
      %v3921 = vpack.c.bf16 %v3889, %v3889
      %v3922 = vpack.c.bf16 %v3890, %v3890
      %v3923 = vpack.c.bf16 %v3891, %v3891
      %v3924 = vpack.c.bf16 %v3892, %v3892
      %v3925 = vpack.c.bf16 %v3893, %v3893
      %v3926 = vpack.c.bf16 %v3894, %v3894
      %v3927 = vpack.c.bf16 %v3895, %v3895
      %v3928 = vpack.c.bf16 %v3896, %v3896
      %v3929 = vpack.c.bf16 %v3897, %v3897
      %v3930 = vpack.c.bf16 %v3898, %v3898
      %v3931 = vpack.c.bf16 %v3899, %v3899
      %v3932 = vpack.c.bf16 %v3900, %v3900
      %v3933 = vpack.c.bf16 %v3901, %v3901
      %v3934 = vpack.c.bf16 %v3902, %v3902
      %v3935 = vpack.c.bf16 %v3903, %v3903
      %v3936 = vpack.c.bf16 %v3904, %v3904
      %v3937 = vpack.c.bf16 %v3905, %v3905
      %3970 = vrot.lane.b32.xlu0 %v3906, 40
      %v3971 = vpop.permute.xlu0 %3970
      %3972 = vrot.lane.b32.xlu0 %v3907, 40
      %v3973 = vpop.permute.xlu0 %3972
      %3974 = vrot.lane.b32.xlu0 %v3908, 40
      %v3975 = vpop.permute.xlu0 %3974
      %3976 = vrot.lane.b32.xlu0 %v3909, 40
      %v3977 = vpop.permute.xlu0 %3976
      %3978 = vrot.lane.b32.xlu0 %v3910, 40
      %v3979 = vpop.permute.xlu0 %3978
      %3980 = vrot.lane.b32.xlu0 %v3911, 40
      %v3981 = vpop.permute.xlu0 %3980
      %3982 = vrot.lane.b32.xlu0 %v3912, 40
      %v3983 = vpop.permute.xlu0 %3982
      %3984 = vrot.lane.b32.xlu0 %v3913, 40
      %v3985 = vpop.permute.xlu0 %3984
      %3986 = vrot.lane.b32.xlu0 %v3914, 40
      %v3987 = vpop.permute.xlu0 %3986
      %3988 = vrot.lane.b32.xlu0 %v3915, 40
      %v3989 = vpop.permute.xlu0 %3988
      %3990 = vrot.lane.b32.xlu0 %v3916, 40
      %v3991 = vpop.permute.xlu0 %3990
      %3992 = vrot.lane.b32.xlu0 %v3917, 40
      %v3993 = vpop.permute.xlu0 %3992
      %3994 = vrot.lane.b32.xlu0 %v3918, 40
      %v3995 = vpop.permute.xlu0 %3994
      %3996 = vrot.lane.b32.xlu0 %v3919, 40
      %v3997 = vpop.permute.xlu0 %3996
      %3998 = vrot.lane.b32.xlu0 %v3920, 40
      %v3999 = vpop.permute.xlu0 %3998
      %4000 = vrot.lane.b32.xlu0 %v3921, 40
      %v4001 = vpop.permute.xlu0 %4000
      %4002 = vrot.lane.b32.xlu0 %v3922, 40
      %v4003 = vpop.permute.xlu0 %4002
      %4004 = vrot.lane.b32.xlu0 %v3923, 40
      %v4005 = vpop.permute.xlu0 %4004
      %4006 = vrot.lane.b32.xlu0 %v3924, 40
      %v4007 = vpop.permute.xlu0 %4006
      %4008 = vrot.lane.b32.xlu0 %v3925, 40
      %v4009 = vpop.permute.xlu0 %4008
      %4010 = vrot.lane.b32.xlu0 %v3926, 40
      %v4011 = vpop.permute.xlu0 %4010
      %4012 = vrot.lane.b32.xlu0 %v3927, 40
      %v4013 = vpop.permute.xlu0 %4012
      %4014 = vrot.lane.b32.xlu0 %v3928, 40
      %v4015 = vpop.permute.xlu0 %4014
      %4016 = vrot.lane.b32.xlu0 %v3929, 40
      %v4017 = vpop.permute.xlu0 %4016
      %4018 = vrot.lane.b32.xlu0 %v3930, 40
      %v4019 = vpop.permute.xlu0 %4018
      %4020 = vrot.lane.b32.xlu0 %v3931, 40
      %v4021 = vpop.permute.xlu0 %4020
      %4022 = vrot.lane.b32.xlu0 %v3932, 40
      %v4023 = vpop.permute.xlu0 %4022
      %4024 = vrot.lane.b32.xlu0 %v3933, 40
      %v4025 = vpop.permute.xlu0 %4024
      %4026 = vrot.lane.b32.xlu0 %v3934, 40
      %v4027 = vpop.permute.xlu0 %4026
      %4028 = vrot.lane.b32.xlu0 %v3935, 40
      %v4029 = vpop.permute.xlu0 %4028
      %4030 = vrot.lane.b32.xlu0 %v3936, 40
      %v4031 = vpop.permute.xlu0 %4030
      %4032 = vrot.lane.b32.xlu0 %v3937, 40
      %v4033 = vpop.permute.xlu0 %4032
      %vm4066 = vcmask 388416
      %4067 = vst.msk [vmem:[#allocation5] sm:$0xf] %vm4066, %v3971
      %4068 = vst.msk [vmem:[#allocation5 + $0x4] sm:$0xf] %vm4066, %v3973
      %4069 = vst.msk [vmem:[#allocation5 + $0x8] sm:$0xf] %vm4066, %v3975
      %4070 = vst.msk [vmem:[#allocation5 + $0xc] sm:$0xf] %vm4066, %v3977
      %4071 = vst.msk [vmem:[#allocation5 + $0x10] sm:$0xf] %vm4066, %v3979
      %4072 = vst.msk [vmem:[#allocation5 + $0x14] sm:$0xf] %vm4066, %v3981
      %4073 = vst.msk [vmem:[#allocation5 + $0x18] sm:$0xf] %vm4066, %v3983
      %4074 = vst.msk [vmem:[#allocation5 + $0x1c] sm:$0xf] %vm4066, %v3985
      %4075 = vst.msk [vmem:[#allocation5 + $0x20] sm:$0xf] %vm4066, %v3987
      %4076 = vst.msk [vmem:[#allocation5 + $0x24] sm:$0xf] %vm4066, %v3989
      %4077 = vst.msk [vmem:[#allocation5 + $0x28] sm:$0xf] %vm4066, %v3991
      %4078 = vst.msk [vmem:[#allocation5 + $0x2c] sm:$0xf] %vm4066, %v3993
      %4079 = vst.msk [vmem:[#allocation5 + $0x30] sm:$0xf] %vm4066, %v3995
      %4080 = vst.msk [vmem:[#allocation5 + $0x34] sm:$0xf] %vm4066, %v3997
      %4081 = vst.msk [vmem:[#allocation5 + $0x38] sm:$0xf] %vm4066, %v3999
      %4082 = vst.msk [vmem:[#allocation5 + $0x3c] sm:$0xf] %vm4066, %v4001
      %4083 = vst.msk [vmem:[#allocation5 + $0x40] sm:$0xf] %vm4066, %v4003
      %4084 = vst.msk [vmem:[#allocation5 + $0x44] sm:$0xf] %vm4066, %v4005
      %4085 = vst.msk [vmem:[#allocation5 + $0x48] sm:$0xf] %vm4066, %v4007
      %4086 = vst.msk [vmem:[#allocation5 + $0x4c] sm:$0xf] %vm4066, %v4009
      %4087 = vst.msk [vmem:[#allocation5 + $0x50] sm:$0xf] %vm4066, %v4011
      %4088 = vst.msk [vmem:[#allocation5 + $0x54] sm:$0xf] %vm4066, %v4013
      %4089 = vst.msk [vmem:[#allocation5 + $0x58] sm:$0xf] %vm4066, %v4015
      %4090 = vst.msk [vmem:[#allocation5 + $0x5c] sm:$0xf] %vm4066, %v4017
      %4091 = vst.msk [vmem:[#allocation5 + $0x60] sm:$0xf] %vm4066, %v4019
      %4092 = vst.msk [vmem:[#allocation5 + $0x64] sm:$0xf] %vm4066, %v4021
      %4093 = vst.msk [vmem:[#allocation5 + $0x68] sm:$0xf] %vm4066, %v4023
      %4094 = vst.msk [vmem:[#allocation5 + $0x6c] sm:$0xf] %vm4066, %v4025
      %4095 = vst.msk [vmem:[#allocation5 + $0x70] sm:$0xf] %vm4066, %v4027
      %4096 = vst.msk [vmem:[#allocation5 + $0x74] sm:$0xf] %vm4066, %v4029
      %4097 = vst.msk [vmem:[#allocation5 + $0x78] sm:$0xf] %vm4066, %v4031
      %4098 = vst.msk [vmem:[#allocation5 + $0x7c] sm:$0xf] %vm4066, %v4033
      %s4099 = scalar_lea.vmem [#allocation4], 48
      %v4100 = vld [vmem:[%s4099] sm:$0xff]
      %v4101 = vld [vmem:[%s4099 + $0x8] sm:$0xff]
      %v4102 = vld [vmem:[%s4099 + $0x18] sm:$0xff]
      %v4103 = vld [vmem:[%s4099 + $0x20] sm:$0xff]
      %v4104 = vld [vmem:[%s4099 + $0x30] sm:$0xff]
      %v4105 = vld [vmem:[%s4099 + $0x38] sm:$0xff]
      %v4106 = vld [vmem:[%s4099 + $0x48] sm:$0xff]
      %v4107 = vld [vmem:[%s4099 + $0x50] sm:$0xff]
      %v4108 = vld [vmem:[%s4099 + $0x60] sm:$0xff]
      %v4109 = vld [vmem:[%s4099 + $0x68] sm:$0xff]
      %v4110 = vld [vmem:[%s4099 + $0x78] sm:$0xff]
      %v4111 = vld [vmem:[%s4099 + $0x80] sm:$0xff]
      %v4112 = vld [vmem:[%s4099 + $0x90] sm:$0xff]
      %v4113 = vld [vmem:[%s4099 + $0x98] sm:$0xff]
      %v4114 = vld [vmem:[%s4099 + $0xa8] sm:$0xff]
      %v4115 = vld [vmem:[%s4099 + $0xb0] sm:$0xff]
      %v4116 = vld [vmem:[%s4099 + $0xc0] sm:$0xff]
      %v4117 = vld [vmem:[%s4099 + $0xc8] sm:$0xff]
      %v4118 = vld [vmem:[%s4099 + $0xd8] sm:$0xff]
      %v4119 = vld [vmem:[%s4099 + $0xe0] sm:$0xff]
      %v4120 = vld [vmem:[%s4099 + $0xf0] sm:$0xff]
      %v4121 = vld [vmem:[%s4099 + $0xf8] sm:$0xff]
      %v4122 = vld [vmem:[%s4099 + $0x108] sm:$0xff]
      %v4123 = vld [vmem:[%s4099 + $0x110] sm:$0xff]
      %v4124 = vld [vmem:[%s4099 + $0x120] sm:$0xff]
      %v4125 = vld [vmem:[%s4099 + $0x128] sm:$0xff]
      %v4126 = vld [vmem:[%s4099 + $0x138] sm:$0xff]
      %v4127 = vld [vmem:[%s4099 + $0x140] sm:$0xff]
      %v4128 = vld [vmem:[%s4099 + $0x150] sm:$0xff]
      %v4129 = vld [vmem:[%s4099 + $0x158] sm:$0xff]
      %v4130 = vld [vmem:[%s4099 + $0x168] sm:$0xff]
      %v4131 = vld [vmem:[%s4099 + $0x170] sm:$0xff]
      %v4132 = vpack.c.bf16 %v4100, %v4100
      %v4133 = vpack.c.bf16 %v4101, %v4101
      %v4134 = vpack.c.bf16 %v4102, %v4102
      %v4135 = vpack.c.bf16 %v4103, %v4103
      %v4136 = vpack.c.bf16 %v4104, %v4104
      %v4137 = vpack.c.bf16 %v4105, %v4105
      %v4138 = vpack.c.bf16 %v4106, %v4106
      %v4139 = vpack.c.bf16 %v4107, %v4107
      %v4140 = vpack.c.bf16 %v4108, %v4108
      %v4141 = vpack.c.bf16 %v4109, %v4109
      %v4142 = vpack.c.bf16 %v4110, %v4110
      %v4143 = vpack.c.bf16 %v4111, %v4111
      %v4144 = vpack.c.bf16 %v4112, %v4112
      %v4145 = vpack.c.bf16 %v4113, %v4113
      %v4146 = vpack.c.bf16 %v4114, %v4114
      %v4147 = vpack.c.bf16 %v4115, %v4115
      %v4148 = vpack.c.bf16 %v4116, %v4116
      %v4149 = vpack.c.bf16 %v4117, %v4117
      %v4150 = vpack.c.bf16 %v4118, %v4118
      %v4151 = vpack.c.bf16 %v4119, %v4119
      %v4152 = vpack.c.bf16 %v4120, %v4120
      %v4153 = vpack.c.bf16 %v4121, %v4121
      %v4154 = vpack.c.bf16 %v4122, %v4122
      %v4155 = vpack.c.bf16 %v4123, %v4123
      %v4156 = vpack.c.bf16 %v4124, %v4124
      %v4157 = vpack.c.bf16 %v4125, %v4125
      %v4158 = vpack.c.bf16 %v4126, %v4126
      %v4159 = vpack.c.bf16 %v4127, %v4127
      %v4160 = vpack.c.bf16 %v4128, %v4128
      %v4161 = vpack.c.bf16 %v4129, %v4129
      %v4162 = vpack.c.bf16 %v4130, %v4130
      %v4163 = vpack.c.bf16 %v4131, %v4131
      %4196 = vrot.lane.b32.xlu0 %v4132, 48
      %v4197 = vpop.permute.xlu0 %4196
      %4198 = vrot.lane.b32.xlu0 %v4133, 48
      %v4199 = vpop.permute.xlu0 %4198
      %4200 = vrot.lane.b32.xlu0 %v4134, 48
      %v4201 = vpop.permute.xlu0 %4200
      %4202 = vrot.lane.b32.xlu0 %v4135, 48
      %v4203 = vpop.permute.xlu0 %4202
      %4204 = vrot.lane.b32.xlu0 %v4136, 48
      %v4205 = vpop.permute.xlu0 %4204
      %4206 = vrot.lane.b32.xlu0 %v4137, 48
      %v4207 = vpop.permute.xlu0 %4206
      %4208 = vrot.lane.b32.xlu0 %v4138, 48
      %v4209 = vpop.permute.xlu0 %4208
      %4210 = vrot.lane.b32.xlu0 %v4139, 48
      %v4211 = vpop.permute.xlu0 %4210
      %4212 = vrot.lane.b32.xlu0 %v4140, 48
      %v4213 = vpop.permute.xlu0 %4212
      %4214 = vrot.lane.b32.xlu0 %v4141, 48
      %v4215 = vpop.permute.xlu0 %4214
      %4216 = vrot.lane.b32.xlu0 %v4142, 48
      %v4217 = vpop.permute.xlu0 %4216
      %4218 = vrot.lane.b32.xlu0 %v4143, 48
      %v4219 = vpop.permute.xlu0 %4218
      %4220 = vrot.lane.b32.xlu0 %v4144, 48
      %v4221 = vpop.permute.xlu0 %4220
      %4222 = vrot.lane.b32.xlu0 %v4145, 48
      %v4223 = vpop.permute.xlu0 %4222
      %4224 = vrot.lane.b32.xlu0 %v4146, 48
      %v4225 = vpop.permute.xlu0 %4224
      %4226 = vrot.lane.b32.xlu0 %v4147, 48
      %v4227 = vpop.permute.xlu0 %4226
      %4228 = vrot.lane.b32.xlu0 %v4148, 48
      %v4229 = vpop.permute.xlu0 %4228
      %4230 = vrot.lane.b32.xlu0 %v4149, 48
      %v4231 = vpop.permute.xlu0 %4230
      %4232 = vrot.lane.b32.xlu0 %v4150, 48
      %v4233 = vpop.permute.xlu0 %4232
      %4234 = vrot.lane.b32.xlu0 %v4151, 48
      %v4235 = vpop.permute.xlu0 %4234
      %4236 = vrot.lane.b32.xlu0 %v4152, 48
      %v4237 = vpop.permute.xlu0 %4236
      %4238 = vrot.lane.b32.xlu0 %v4153, 48
      %v4239 = vpop.permute.xlu0 %4238
      %4240 = vrot.lane.b32.xlu0 %v4154, 48
      %v4241 = vpop.permute.xlu0 %4240
      %4242 = vrot.lane.b32.xlu0 %v4155, 48
      %v4243 = vpop.permute.xlu0 %4242
      %4244 = vrot.lane.b32.xlu0 %v4156, 48
      %v4245 = vpop.permute.xlu0 %4244
      %4246 = vrot.lane.b32.xlu0 %v4157, 48
      %v4247 = vpop.permute.xlu0 %4246
      %4248 = vrot.lane.b32.xlu0 %v4158, 48
      %v4249 = vpop.permute.xlu0 %4248
      %4250 = vrot.lane.b32.xlu0 %v4159, 48
      %v4251 = vpop.permute.xlu0 %4250
      %4252 = vrot.lane.b32.xlu0 %v4160, 48
      %v4253 = vpop.permute.xlu0 %4252
      %4254 = vrot.lane.b32.xlu0 %v4161, 48
      %v4255 = vpop.permute.xlu0 %4254
      %4256 = vrot.lane.b32.xlu0 %v4162, 48
      %v4257 = vpop.permute.xlu0 %4256
      %4258 = vrot.lane.b32.xlu0 %v4163, 48
      %v4259 = vpop.permute.xlu0 %4258
      %vm4292 = vcmask 454016
      %4293 = vst.msk [vmem:[#allocation5] sm:$0xf] %vm4292, %v4197
      %4294 = vst.msk [vmem:[#allocation5 + $0x4] sm:$0xf] %vm4292, %v4199
      %4295 = vst.msk [vmem:[#allocation5 + $0x8] sm:$0xf] %vm4292, %v4201
      %4296 = vst.msk [vmem:[#allocation5 + $0xc] sm:$0xf] %vm4292, %v4203
      %4297 = vst.msk [vmem:[#allocation5 + $0x10] sm:$0xf] %vm4292, %v4205
      %4298 = vst.msk [vmem:[#allocation5 + $0x14] sm:$0xf] %vm4292, %v4207
      %4299 = vst.msk [vmem:[#allocation5 + $0x18] sm:$0xf] %vm4292, %v4209
      %4300 = vst.msk [vmem:[#allocation5 + $0x1c] sm:$0xf] %vm4292, %v4211
      %4301 = vst.msk [vmem:[#allocation5 + $0x20] sm:$0xf] %vm4292, %v4213
      %4302 = vst.msk [vmem:[#allocation5 + $0x24] sm:$0xf] %vm4292, %v4215
      %4303 = vst.msk [vmem:[#allocation5 + $0x28] sm:$0xf] %vm4292, %v4217
      %4304 = vst.msk [vmem:[#allocation5 + $0x2c] sm:$0xf] %vm4292, %v4219
      %4305 = vst.msk [vmem:[#allocation5 + $0x30] sm:$0xf] %vm4292, %v4221
      %4306 = vst.msk [vmem:[#allocation5 + $0x34] sm:$0xf] %vm4292, %v4223
      %4307 = vst.msk [vmem:[#allocation5 + $0x38] sm:$0xf] %vm4292, %v4225
      %4308 = vst.msk [vmem:[#allocation5 + $0x3c] sm:$0xf] %vm4292, %v4227
      %4309 = vst.msk [vmem:[#allocation5 + $0x40] sm:$0xf] %vm4292, %v4229
      %4310 = vst.msk [vmem:[#allocation5 + $0x44] sm:$0xf] %vm4292, %v4231
      %4311 = vst.msk [vmem:[#allocation5 + $0x48] sm:$0xf] %vm4292, %v4233
      %4312 = vst.msk [vmem:[#allocation5 + $0x4c] sm:$0xf] %vm4292, %v4235
      %4313 = vst.msk [vmem:[#allocation5 + $0x50] sm:$0xf] %vm4292, %v4237
      %4314 = vst.msk [vmem:[#allocation5 + $0x54] sm:$0xf] %vm4292, %v4239
      %4315 = vst.msk [vmem:[#allocation5 + $0x58] sm:$0xf] %vm4292, %v4241
      %4316 = vst.msk [vmem:[#allocation5 + $0x5c] sm:$0xf] %vm4292, %v4243
      %4317 = vst.msk [vmem:[#allocation5 + $0x60] sm:$0xf] %vm4292, %v4245
      %4318 = vst.msk [vmem:[#allocation5 + $0x64] sm:$0xf] %vm4292, %v4247
      %4319 = vst.msk [vmem:[#allocation5 + $0x68] sm:$0xf] %vm4292, %v4249
      %4320 = vst.msk [vmem:[#allocation5 + $0x6c] sm:$0xf] %vm4292, %v4251
      %4321 = vst.msk [vmem:[#allocation5 + $0x70] sm:$0xf] %vm4292, %v4253
      %4322 = vst.msk [vmem:[#allocation5 + $0x74] sm:$0xf] %vm4292, %v4255
      %4323 = vst.msk [vmem:[#allocation5 + $0x78] sm:$0xf] %vm4292, %v4257
      %4324 = vst.msk [vmem:[#allocation5 + $0x7c] sm:$0xf] %vm4292, %v4259
      %v4325 = vld [vmem:[%s4099 + $0x1] sm:$0xff]
      %v4326 = vld [vmem:[%s4099 + $0x9] sm:$0xff]
      %v4327 = vld [vmem:[%s4099 + $0x19] sm:$0xff]
      %v4328 = vld [vmem:[%s4099 + $0x21] sm:$0xff]
      %v4329 = vld [vmem:[%s4099 + $0x31] sm:$0xff]
      %v4330 = vld [vmem:[%s4099 + $0x39] sm:$0xff]
      %v4331 = vld [vmem:[%s4099 + $0x49] sm:$0xff]
      %v4332 = vld [vmem:[%s4099 + $0x51] sm:$0xff]
      %v4333 = vld [vmem:[%s4099 + $0x61] sm:$0xff]
      %v4334 = vld [vmem:[%s4099 + $0x69] sm:$0xff]
      %v4335 = vld [vmem:[%s4099 + $0x79] sm:$0xff]
      %v4336 = vld [vmem:[%s4099 + $0x81] sm:$0xff]
      %v4337 = vld [vmem:[%s4099 + $0x91] sm:$0xff]
      %v4338 = vld [vmem:[%s4099 + $0x99] sm:$0xff]
      %v4339 = vld [vmem:[%s4099 + $0xa9] sm:$0xff]
      %v4340 = vld [vmem:[%s4099 + $0xb1] sm:$0xff]
      %v4341 = vld [vmem:[%s4099 + $0xc1] sm:$0xff]
      %v4342 = vld [vmem:[%s4099 + $0xc9] sm:$0xff]
      %v4343 = vld [vmem:[%s4099 + $0xd9] sm:$0xff]
      %v4344 = vld [vmem:[%s4099 + $0xe1] sm:$0xff]
      %v4345 = vld [vmem:[%s4099 + $0xf1] sm:$0xff]
      %v4346 = vld [vmem:[%s4099 + $0xf9] sm:$0xff]
      %v4347 = vld [vmem:[%s4099 + $0x109] sm:$0xff]
      %v4348 = vld [vmem:[%s4099 + $0x111] sm:$0xff]
      %v4349 = vld [vmem:[%s4099 + $0x121] sm:$0xff]
      %v4350 = vld [vmem:[%s4099 + $0x129] sm:$0xff]
      %v4351 = vld [vmem:[%s4099 + $0x139] sm:$0xff]
      %v4352 = vld [vmem:[%s4099 + $0x141] sm:$0xff]
      %v4353 = vld [vmem:[%s4099 + $0x151] sm:$0xff]
      %v4354 = vld [vmem:[%s4099 + $0x159] sm:$0xff]
      %v4355 = vld [vmem:[%s4099 + $0x169] sm:$0xff]
      %v4356 = vld [vmem:[%s4099 + $0x171] sm:$0xff]
      %v4357 = vpack.c.bf16 %v4325, %v4325
      %v4358 = vpack.c.bf16 %v4326, %v4326
      %v4359 = vpack.c.bf16 %v4327, %v4327
      %v4360 = vpack.c.bf16 %v4328, %v4328
      %v4361 = vpack.c.bf16 %v4329, %v4329
      %v4362 = vpack.c.bf16 %v4330, %v4330
      %v4363 = vpack.c.bf16 %v4331, %v4331
      %v4364 = vpack.c.bf16 %v4332, %v4332
      %v4365 = vpack.c.bf16 %v4333, %v4333
      %v4366 = vpack.c.bf16 %v4334, %v4334
      %v4367 = vpack.c.bf16 %v4335, %v4335
      %v4368 = vpack.c.bf16 %v4336, %v4336
      %v4369 = vpack.c.bf16 %v4337, %v4337
      %v4370 = vpack.c.bf16 %v4338, %v4338
      %v4371 = vpack.c.bf16 %v4339, %v4339
      %v4372 = vpack.c.bf16 %v4340, %v4340
      %v4373 = vpack.c.bf16 %v4341, %v4341
      %v4374 = vpack.c.bf16 %v4342, %v4342
      %v4375 = vpack.c.bf16 %v4343, %v4343
      %v4376 = vpack.c.bf16 %v4344, %v4344
      %v4377 = vpack.c.bf16 %v4345, %v4345
      %v4378 = vpack.c.bf16 %v4346, %v4346
      %v4379 = vpack.c.bf16 %v4347, %v4347
      %v4380 = vpack.c.bf16 %v4348, %v4348
      %v4381 = vpack.c.bf16 %v4349, %v4349
      %v4382 = vpack.c.bf16 %v4350, %v4350
      %v4383 = vpack.c.bf16 %v4351, %v4351
      %v4384 = vpack.c.bf16 %v4352, %v4352
      %v4385 = vpack.c.bf16 %v4353, %v4353
      %v4386 = vpack.c.bf16 %v4354, %v4354
      %v4387 = vpack.c.bf16 %v4355, %v4355
      %v4388 = vpack.c.bf16 %v4356, %v4356
      %4421 = vrot.lane.b32.xlu0 %v4357, 56
      %v4422 = vpop.permute.xlu0 %4421
      %4423 = vrot.lane.b32.xlu0 %v4358, 56
      %v4424 = vpop.permute.xlu0 %4423
      %4425 = vrot.lane.b32.xlu0 %v4359, 56
      %v4426 = vpop.permute.xlu0 %4425
      %4427 = vrot.lane.b32.xlu0 %v4360, 56
      %v4428 = vpop.permute.xlu0 %4427
      %4429 = vrot.lane.b32.xlu0 %v4361, 56
      %v4430 = vpop.permute.xlu0 %4429
      %4431 = vrot.lane.b32.xlu0 %v4362, 56
      %v4432 = vpop.permute.xlu0 %4431
      %4433 = vrot.lane.b32.xlu0 %v4363, 56
      %v4434 = vpop.permute.xlu0 %4433
      %4435 = vrot.lane.b32.xlu0 %v4364, 56
      %v4436 = vpop.permute.xlu0 %4435
      %4437 = vrot.lane.b32.xlu0 %v4365, 56
      %v4438 = vpop.permute.xlu0 %4437
      %4439 = vrot.lane.b32.xlu0 %v4366, 56
      %v4440 = vpop.permute.xlu0 %4439
      %4441 = vrot.lane.b32.xlu0 %v4367, 56
      %v4442 = vpop.permute.xlu0 %4441
      %4443 = vrot.lane.b32.xlu0 %v4368, 56
      %v4444 = vpop.permute.xlu0 %4443
      %4445 = vrot.lane.b32.xlu0 %v4369, 56
      %v4446 = vpop.permute.xlu0 %4445
      %4447 = vrot.lane.b32.xlu0 %v4370, 56
      %v4448 = vpop.permute.xlu0 %4447
      %4449 = vrot.lane.b32.xlu0 %v4371, 56
      %v4450 = vpop.permute.xlu0 %4449
      %4451 = vrot.lane.b32.xlu0 %v4372, 56
      %v4452 = vpop.permute.xlu0 %4451
      %4453 = vrot.lane.b32.xlu0 %v4373, 56
      %v4454 = vpop.permute.xlu0 %4453
      %4455 = vrot.lane.b32.xlu0 %v4374, 56
      %v4456 = vpop.permute.xlu0 %4455
      %4457 = vrot.lane.b32.xlu0 %v4375, 56
      %v4458 = vpop.permute.xlu0 %4457
      %4459 = vrot.lane.b32.xlu0 %v4376, 56
      %v4460 = vpop.permute.xlu0 %4459
      %4461 = vrot.lane.b32.xlu0 %v4377, 56
      %v4462 = vpop.permute.xlu0 %4461
      %4463 = vrot.lane.b32.xlu0 %v4378, 56
      %v4464 = vpop.permute.xlu0 %4463
      %4465 = vrot.lane.b32.xlu0 %v4379, 56
      %v4466 = vpop.permute.xlu0 %4465
      %4467 = vrot.lane.b32.xlu0 %v4380, 56
      %v4468 = vpop.permute.xlu0 %4467
      %4469 = vrot.lane.b32.xlu0 %v4381, 56
      %v4470 = vpop.permute.xlu0 %4469
      %4471 = vrot.lane.b32.xlu0 %v4382, 56
      %v4472 = vpop.permute.xlu0 %4471
      %4473 = vrot.lane.b32.xlu0 %v4383, 56
      %v4474 = vpop.permute.xlu0 %4473
      %4475 = vrot.lane.b32.xlu0 %v4384, 56
      %v4476 = vpop.permute.xlu0 %4475
      %4477 = vrot.lane.b32.xlu0 %v4385, 56
      %v4478 = vpop.permute.xlu0 %4477
      %4479 = vrot.lane.b32.xlu0 %v4386, 56
      %v4480 = vpop.permute.xlu0 %4479
      %4481 = vrot.lane.b32.xlu0 %v4387, 56
      %v4482 = vpop.permute.xlu0 %4481
      %4483 = vrot.lane.b32.xlu0 %v4388, 56
      %v4484 = vpop.permute.xlu0 %4483
      %vm4517 = vcmask 519616
      %4518 = vst.msk [vmem:[#allocation5] sm:$0xf] %vm4517, %v4422
      %4519 = vst.msk [vmem:[#allocation5 + $0x4] sm:$0xf] %vm4517, %v4424
      %4520 = vst.msk [vmem:[#allocation5 + $0x8] sm:$0xf] %vm4517, %v4426
      %4521 = vst.msk [vmem:[#allocation5 + $0xc] sm:$0xf] %vm4517, %v4428
      %4522 = vst.msk [vmem:[#allocation5 + $0x10] sm:$0xf] %vm4517, %v4430
      %4523 = vst.msk [vmem:[#allocation5 + $0x14] sm:$0xf] %vm4517, %v4432
      %4524 = vst.msk [vmem:[#allocation5 + $0x18] sm:$0xf] %vm4517, %v4434
      %4525 = vst.msk [vmem:[#allocation5 + $0x1c] sm:$0xf] %vm4517, %v4436
      %4526 = vst.msk [vmem:[#allocation5 + $0x20] sm:$0xf] %vm4517, %v4438
      %4527 = vst.msk [vmem:[#allocation5 + $0x24] sm:$0xf] %vm4517, %v4440
      %4528 = vst.msk [vmem:[#allocation5 + $0x28] sm:$0xf] %vm4517, %v4442
      %4529 = vst.msk [vmem:[#allocation5 + $0x2c] sm:$0xf] %vm4517, %v4444
      %4530 = vst.msk [vmem:[#allocation5 + $0x30] sm:$0xf] %vm4517, %v4446
      %4531 = vst.msk [vmem:[#allocation5 + $0x34] sm:$0xf] %vm4517, %v4448
      %4532 = vst.msk [vmem:[#allocation5 + $0x38] sm:$0xf] %vm4517, %v4450
      %4533 = vst.msk [vmem:[#allocation5 + $0x3c] sm:$0xf] %vm4517, %v4452
      %4534 = vst.msk [vmem:[#allocation5 + $0x40] sm:$0xf] %vm4517, %v4454
      %4535 = vst.msk [vmem:[#allocation5 + $0x44] sm:$0xf] %vm4517, %v4456
      %4536 = vst.msk [vmem:[#allocation5 + $0x48] sm:$0xf] %vm4517, %v4458
      %4537 = vst.msk [vmem:[#allocation5 + $0x4c] sm:$0xf] %vm4517, %v4460
      %4538 = vst.msk [vmem:[#allocation5 + $0x50] sm:$0xf] %vm4517, %v4462
      %4539 = vst.msk [vmem:[#allocation5 + $0x54] sm:$0xf] %vm4517, %v4464
      %4540 = vst.msk [vmem:[#allocation5 + $0x58] sm:$0xf] %vm4517, %v4466
      %4541 = vst.msk [vmem:[#allocation5 + $0x5c] sm:$0xf] %vm4517, %v4468
      %4542 = vst.msk [vmem:[#allocation5 + $0x60] sm:$0xf] %vm4517, %v4470
      %4543 = vst.msk [vmem:[#allocation5 + $0x64] sm:$0xf] %vm4517, %v4472
      %4544 = vst.msk [vmem:[#allocation5 + $0x68] sm:$0xf] %vm4517, %v4474
      %4545 = vst.msk [vmem:[#allocation5 + $0x6c] sm:$0xf] %vm4517, %v4476
      %4546 = vst.msk [vmem:[#allocation5 + $0x70] sm:$0xf] %vm4517, %v4478
      %4547 = vst.msk [vmem:[#allocation5 + $0x74] sm:$0xf] %vm4517, %v4480
      %4548 = vst.msk [vmem:[#allocation5 + $0x78] sm:$0xf] %vm4517, %v4482
      %4549 = vst.msk [vmem:[#allocation5 + $0x7c] sm:$0xf] %vm4517, %v4484
      %v4550 = vld [vmem:[%s4099 + $0x2] sm:$0xff]
      %v4551 = vld [vmem:[%s4099 + $0xa] sm:$0xff]
      %v4552 = vld [vmem:[%s4099 + $0x1a] sm:$0xff]
      %v4553 = vld [vmem:[%s4099 + $0x22] sm:$0xff]
      %v4554 = vld [vmem:[%s4099 + $0x32] sm:$0xff]
      %v4555 = vld [vmem:[%s4099 + $0x3a] sm:$0xff]
      %v4556 = vld [vmem:[%s4099 + $0x4a] sm:$0xff]
      %v4557 = vld [vmem:[%s4099 + $0x52] sm:$0xff]
      %v4558 = vld [vmem:[%s4099 + $0x62] sm:$0xff]
      %v4559 = vld [vmem:[%s4099 + $0x6a] sm:$0xff]
      %v4560 = vld [vmem:[%s4099 + $0x7a] sm:$0xff]
      %v4561 = vld [vmem:[%s4099 + $0x82] sm:$0xff]
      %v4562 = vld [vmem:[%s4099 + $0x92] sm:$0xff]
      %v4563 = vld [vmem:[%s4099 + $0x9a] sm:$0xff]
      %v4564 = vld [vmem:[%s4099 + $0xaa] sm:$0xff]
      %v4565 = vld [vmem:[%s4099 + $0xb2] sm:$0xff]
      %v4566 = vld [vmem:[%s4099 + $0xc2] sm:$0xff]
      %v4567 = vld [vmem:[%s4099 + $0xca] sm:$0xff]
      %v4568 = vld [vmem:[%s4099 + $0xda] sm:$0xff]
      %v4569 = vld [vmem:[%s4099 + $0xe2] sm:$0xff]
      %v4570 = vld [vmem:[%s4099 + $0xf2] sm:$0xff]
      %v4571 = vld [vmem:[%s4099 + $0xfa] sm:$0xff]
      %v4572 = vld [vmem:[%s4099 + $0x10a] sm:$0xff]
      %v4573 = vld [vmem:[%s4099 + $0x112] sm:$0xff]
      %v4574 = vld [vmem:[%s4099 + $0x122] sm:$0xff]
      %v4575 = vld [vmem:[%s4099 + $0x12a] sm:$0xff]
      %v4576 = vld [vmem:[%s4099 + $0x13a] sm:$0xff]
      %v4577 = vld [vmem:[%s4099 + $0x142] sm:$0xff]
      %v4578 = vld [vmem:[%s4099 + $0x152] sm:$0xff]
      %v4579 = vld [vmem:[%s4099 + $0x15a] sm:$0xff]
      %v4580 = vld [vmem:[%s4099 + $0x16a] sm:$0xff]
      %v4581 = vld [vmem:[%s4099 + $0x172] sm:$0xff]
      %v4582 = vpack.c.bf16 %v4550, %v4550
      %v4583 = vpack.c.bf16 %v4551, %v4551
      %v4584 = vpack.c.bf16 %v4552, %v4552
      %v4585 = vpack.c.bf16 %v4553, %v4553
      %v4586 = vpack.c.bf16 %v4554, %v4554
      %v4587 = vpack.c.bf16 %v4555, %v4555
      %v4588 = vpack.c.bf16 %v4556, %v4556
      %v4589 = vpack.c.bf16 %v4557, %v4557
      %v4590 = vpack.c.bf16 %v4558, %v4558
      %v4591 = vpack.c.bf16 %v4559, %v4559
      %v4592 = vpack.c.bf16 %v4560, %v4560
      %v4593 = vpack.c.bf16 %v4561, %v4561
      %v4594 = vpack.c.bf16 %v4562, %v4562
      %v4595 = vpack.c.bf16 %v4563, %v4563
      %v4596 = vpack.c.bf16 %v4564, %v4564
      %v4597 = vpack.c.bf16 %v4565, %v4565
      %v4598 = vpack.c.bf16 %v4566, %v4566
      %v4599 = vpack.c.bf16 %v4567, %v4567
      %v4600 = vpack.c.bf16 %v4568, %v4568
      %v4601 = vpack.c.bf16 %v4569, %v4569
      %v4602 = vpack.c.bf16 %v4570, %v4570
      %v4603 = vpack.c.bf16 %v4571, %v4571
      %v4604 = vpack.c.bf16 %v4572, %v4572
      %v4605 = vpack.c.bf16 %v4573, %v4573
      %v4606 = vpack.c.bf16 %v4574, %v4574
      %v4607 = vpack.c.bf16 %v4575, %v4575
      %v4608 = vpack.c.bf16 %v4576, %v4576
      %v4609 = vpack.c.bf16 %v4577, %v4577
      %v4610 = vpack.c.bf16 %v4578, %v4578
      %v4611 = vpack.c.bf16 %v4579, %v4579
      %v4612 = vpack.c.bf16 %v4580, %v4580
      %v4613 = vpack.c.bf16 %v4581, %v4581
      %4646 = vrot.lane.b32.xlu0 %v4582, 64
      %v4647 = vpop.permute.xlu0 %4646
      %4648 = vrot.lane.b32.xlu0 %v4583, 64
      %v4649 = vpop.permute.xlu0 %4648
      %4650 = vrot.lane.b32.xlu0 %v4584, 64
      %v4651 = vpop.permute.xlu0 %4650
      %4652 = vrot.lane.b32.xlu0 %v4585, 64
      %v4653 = vpop.permute.xlu0 %4652
      %4654 = vrot.lane.b32.xlu0 %v4586, 64
      %v4655 = vpop.permute.xlu0 %4654
      %4656 = vrot.lane.b32.xlu0 %v4587, 64
      %v4657 = vpop.permute.xlu0 %4656
      %4658 = vrot.lane.b32.xlu0 %v4588, 64
      %v4659 = vpop.permute.xlu0 %4658
      %4660 = vrot.lane.b32.xlu0 %v4589, 64
      %v4661 = vpop.permute.xlu0 %4660
      %4662 = vrot.lane.b32.xlu0 %v4590, 64
      %v4663 = vpop.permute.xlu0 %4662
      %4664 = vrot.lane.b32.xlu0 %v4591, 64
      %v4665 = vpop.permute.xlu0 %4664
      %4666 = vrot.lane.b32.xlu0 %v4592, 64
      %v4667 = vpop.permute.xlu0 %4666
      %4668 = vrot.lane.b32.xlu0 %v4593, 64
      %v4669 = vpop.permute.xlu0 %4668
      %4670 = vrot.lane.b32.xlu0 %v4594, 64
      %v4671 = vpop.permute.xlu0 %4670
      %4672 = vrot.lane.b32.xlu0 %v4595, 64
      %v4673 = vpop.permute.xlu0 %4672
      %4674 = vrot.lane.b32.xlu0 %v4596, 64
      %v4675 = vpop.permute.xlu0 %4674
      %4676 = vrot.lane.b32.xlu0 %v4597, 64
      %v4677 = vpop.permute.xlu0 %4676
      %4678 = vrot.lane.b32.xlu0 %v4598, 64
      %v4679 = vpop.permute.xlu0 %4678
      %4680 = vrot.lane.b32.xlu0 %v4599, 64
      %v4681 = vpop.permute.xlu0 %4680
      %4682 = vrot.lane.b32.xlu0 %v4600, 64
      %v4683 = vpop.permute.xlu0 %4682
      %4684 = vrot.lane.b32.xlu0 %v4601, 64
      %v4685 = vpop.permute.xlu0 %4684
      %4686 = vrot.lane.b32.xlu0 %v4602, 64
      %v4687 = vpop.permute.xlu0 %4686
      %4688 = vrot.lane.b32.xlu0 %v4603, 64
      %v4689 = vpop.permute.xlu0 %4688
      %4690 = vrot.lane.b32.xlu0 %v4604, 64
      %v4691 = vpop.permute.xlu0 %4690
      %4692 = vrot.lane.b32.xlu0 %v4605, 64
      %v4693 = vpop.permute.xlu0 %4692
      %4694 = vrot.lane.b32.xlu0 %v4606, 64
      %v4695 = vpop.permute.xlu0 %4694
      %4696 = vrot.lane.b32.xlu0 %v4607, 64
      %v4697 = vpop.permute.xlu0 %4696
      %4698 = vrot.lane.b32.xlu0 %v4608, 64
      %v4699 = vpop.permute.xlu0 %4698
      %4700 = vrot.lane.b32.xlu0 %v4609, 64
      %v4701 = vpop.permute.xlu0 %4700
      %4702 = vrot.lane.b32.xlu0 %v4610, 64
      %v4703 = vpop.permute.xlu0 %4702
      %4704 = vrot.lane.b32.xlu0 %v4611, 64
      %v4705 = vpop.permute.xlu0 %4704
      %4706 = vrot.lane.b32.xlu0 %v4612, 64
      %v4707 = vpop.permute.xlu0 %4706
      %4708 = vrot.lane.b32.xlu0 %v4613, 64
      %v4709 = vpop.permute.xlu0 %4708
      %vm4742 = vcmask 585216
      %4743 = vst.msk [vmem:[#allocation5] sm:$0xf] %vm4742, %v4647
      %4744 = vst.msk [vmem:[#allocation5 + $0x4] sm:$0xf] %vm4742, %v4649
      %4745 = vst.msk [vmem:[#allocation5 + $0x8] sm:$0xf] %vm4742, %v4651
      %4746 = vst.msk [vmem:[#allocation5 + $0xc] sm:$0xf] %vm4742, %v4653
      %4747 = vst.msk [vmem:[#allocation5 + $0x10] sm:$0xf] %vm4742, %v4655
      %4748 = vst.msk [vmem:[#allocation5 + $0x14] sm:$0xf] %vm4742, %v4657
      %4749 = vst.msk [vmem:[#allocation5 + $0x18] sm:$0xf] %vm4742, %v4659
      %4750 = vst.msk [vmem:[#allocation5 + $0x1c] sm:$0xf] %vm4742, %v4661
      %4751 = vst.msk [vmem:[#allocation5 + $0x20] sm:$0xf] %vm4742, %v4663
      %4752 = vst.msk [vmem:[#allocation5 + $0x24] sm:$0xf] %vm4742, %v4665
      %4753 = vst.msk [vmem:[#allocation5 + $0x28] sm:$0xf] %vm4742, %v4667
      %4754 = vst.msk [vmem:[#allocation5 + $0x2c] sm:$0xf] %vm4742, %v4669
      %4755 = vst.msk [vmem:[#allocation5 + $0x30] sm:$0xf] %vm4742, %v4671
      %4756 = vst.msk [vmem:[#allocation5 + $0x34] sm:$0xf] %vm4742, %v4673
      %4757 = vst.msk [vmem:[#allocation5 + $0x38] sm:$0xf] %vm4742, %v4675
      %4758 = vst.msk [vmem:[#allocation5 + $0x3c] sm:$0xf] %vm4742, %v4677
      %4759 = vst.msk [vmem:[#allocation5 + $0x40] sm:$0xf] %vm4742, %v4679
      %4760 = vst.msk [vmem:[#allocation5 + $0x44] sm:$0xf] %vm4742, %v4681
      %4761 = vst.msk [vmem:[#allocation5 + $0x48] sm:$0xf] %vm4742, %v4683
      %4762 = vst.msk [vmem:[#allocation5 + $0x4c] sm:$0xf] %vm4742, %v4685
      %4763 = vst.msk [vmem:[#allocation5 + $0x50] sm:$0xf] %vm4742, %v4687
      %4764 = vst.msk [vmem:[#allocation5 + $0x54] sm:$0xf] %vm4742, %v4689
      %4765 = vst.msk [vmem:[#allocation5 + $0x58] sm:$0xf] %vm4742, %v4691
      %4766 = vst.msk [vmem:[#allocation5 + $0x5c] sm:$0xf] %vm4742, %v4693
      %4767 = vst.msk [vmem:[#allocation5 + $0x60] sm:$0xf] %vm4742, %v4695
      %4768 = vst.msk [vmem:[#allocation5 + $0x64] sm:$0xf] %vm4742, %v4697
      %4769 = vst.msk [vmem:[#allocation5 + $0x68] sm:$0xf] %vm4742, %v4699
      %4770 = vst.msk [vmem:[#allocation5 + $0x6c] sm:$0xf] %vm4742, %v4701
      %4771 = vst.msk [vmem:[#allocation5 + $0x70] sm:$0xf] %vm4742, %v4703
      %4772 = vst.msk [vmem:[#allocation5 + $0x74] sm:$0xf] %vm4742, %v4705
      %4773 = vst.msk [vmem:[#allocation5 + $0x78] sm:$0xf] %vm4742, %v4707
      %4774 = vst.msk [vmem:[#allocation5 + $0x7c] sm:$0xf] %vm4742, %v4709
      %v4775 = vld [vmem:[#allocation5] sm:$0xf]
      %v4776 = vld [vmem:[#allocation5 + $0x4] sm:$0xf]
      %v4777 = vld [vmem:[#allocation5 + $0x8] sm:$0xf]
      %v4778 = vld [vmem:[#allocation5 + $0xc] sm:$0xf]
      %v4779 = vld [vmem:[#allocation5 + $0x10] sm:$0xf]
      %v4780 = vld [vmem:[#allocation5 + $0x14] sm:$0xf]
      %v4781 = vld [vmem:[#allocation5 + $0x18] sm:$0xf]
      %v4782 = vld [vmem:[#allocation5 + $0x1c] sm:$0xf]
      %v4783 = vld [vmem:[#allocation5 + $0x20] sm:$0xf]
      %v4784 = vld [vmem:[#allocation5 + $0x24] sm:$0xf]
      %v4785 = vld [vmem:[#allocation5 + $0x28] sm:$0xf]
      %v4786 = vld [vmem:[#allocation5 + $0x2c] sm:$0xf]
      %v4787 = vld [vmem:[#allocation5 + $0x30] sm:$0xf]
      %v4788 = vld [vmem:[#allocation5 + $0x34] sm:$0xf]
      %v4789 = vld [vmem:[#allocation5 + $0x38] sm:$0xf]
      %v4790 = vld [vmem:[#allocation5 + $0x3c] sm:$0xf]
      %v4791 = vld [vmem:[#allocation5 + $0x40] sm:$0xf]
      %v4792 = vld [vmem:[#allocation5 + $0x44] sm:$0xf]
      %v4793 = vld [vmem:[#allocation5 + $0x48] sm:$0xf]
      %v4794 = vld [vmem:[#allocation5 + $0x4c] sm:$0xf]
      %v4795 = vld [vmem:[#allocation5 + $0x50] sm:$0xf]
      %v4796 = vld [vmem:[#allocation5 + $0x54] sm:$0xf]
      %v4797 = vld [vmem:[#allocation5 + $0x58] sm:$0xf]
      %v4798 = vld [vmem:[#allocation5 + $0x5c] sm:$0xf]
      %v4799 = vld [vmem:[#allocation5 + $0x60] sm:$0xf]
      %v4800 = vld [vmem:[#allocation5 + $0x64] sm:$0xf]
      %v4801 = vld [vmem:[#allocation5 + $0x68] sm:$0xf]
      %v4802 = vld [vmem:[#allocation5 + $0x6c] sm:$0xf]
      %v4803 = vld [vmem:[#allocation5 + $0x70] sm:$0xf]
      %v4804 = vld [vmem:[#allocation5 + $0x74] sm:$0xf]
      %v4805 = vld [vmem:[#allocation5 + $0x78] sm:$0xf]
      %v4806 = vld [vmem:[#allocation5 + $0x7c] sm:$0xf]
      %v4807 = vld [vmem:[%s6] sm:$0xf]
      %v4808 = vld [vmem:[%s6 + $0x4] sm:$0xf]
      %v4809 = vld [vmem:[%s6 + $0x8] sm:$0xf]
      %v4810 = vld [vmem:[%s6 + $0xc] sm:$0xf]
      %v4811 = vld [vmem:[%s6 + $0x10] sm:$0xf]
      %v4812 = vld [vmem:[%s6 + $0x14] sm:$0xf]
      %v4813 = vld [vmem:[%s6 + $0x18] sm:$0xf]
      %v4814 = vld [vmem:[%s6 + $0x1c] sm:$0xf]
      %v4815 = vld [vmem:[%s6 + $0x20] sm:$0xf]
      %v4816 = vld [vmem:[%s7] sm:$0x1]
      %v4818 = vperm.slane %v4816, 0
      %v4852 = vunpack.c.l.b16 %v4775
      %v4853 = vunpack.c.l.b16 %v4776
      %v4854 = vunpack.c.l.b16 %v4777
      %v4855 = vunpack.c.l.b16 %v4778
      %v4856 = vunpack.c.l.b16 %v4779
      %v4857 = vunpack.c.l.b16 %v4780
      %v4858 = vunpack.c.l.b16 %v4781
      %v4859 = vunpack.c.l.b16 %v4782
      %v4860 = vunpack.c.l.b16 %v4783
      %v4861 = vunpack.c.l.b16 %v4784
      %v4862 = vunpack.c.l.b16 %v4785
      %v4863 = vunpack.c.l.b16 %v4786
      %v4864 = vunpack.c.l.b16 %v4787
      %v4865 = vunpack.c.l.b16 %v4788
      %v4866 = vunpack.c.l.b16 %v4789
      %v4867 = vunpack.c.l.b16 %v4790
      %v4868 = vunpack.c.l.b16 %v4791
      %v4869 = vunpack.c.l.b16 %v4792
      %v4870 = vunpack.c.l.b16 %v4793
      %v4871 = vunpack.c.l.b16 %v4794
      %v4872 = vunpack.c.l.b16 %v4795
      %v4873 = vunpack.c.l.b16 %v4796
      %v4874 = vunpack.c.l.b16 %v4797
      %v4875 = vunpack.c.l.b16 %v4798
      %v4876 = vunpack.c.l.b16 %v4799
      %v4877 = vunpack.c.l.b16 %v4800
      %v4878 = vunpack.c.l.b16 %v4801
      %v4879 = vunpack.c.l.b16 %v4802
      %v4880 = vunpack.c.l.b16 %v4803
      %v4881 = vunpack.c.l.b16 %v4804
      %v4882 = vunpack.c.l.b16 %v4805
      %v4883 = vunpack.c.l.b16 %v4806
      %v4884 = vpack.c.b16 %v4853, %v4852
      %v4885 = vpack.c.b16 %v4855, %v4854
      %v4886 = vpack.c.b16 %v4857, %v4856
      %v4887 = vpack.c.b16 %v4859, %v4858
      %v4888 = vpack.c.b16 %v4861, %v4860
      %v4889 = vpack.c.b16 %v4863, %v4862
      %v4890 = vpack.c.b16 %v4865, %v4864
      %v4891 = vpack.c.b16 %v4867, %v4866
      %v4892 = vpack.c.b16 %v4869, %v4868
      %v4893 = vpack.c.b16 %v4871, %v4870
      %v4894 = vpack.c.b16 %v4873, %v4872
      %v4895 = vpack.c.b16 %v4875, %v4874
      %v4896 = vpack.c.b16 %v4877, %v4876
      %v4897 = vpack.c.b16 %v4879, %v4878
      %v4898 = vpack.c.b16 %v4881, %v4880
      %v4899 = vpack.c.b16 %v4883, %v4882
      %v4909 = vunpack.c.l.b16 %v4807
      %v4910 = vunpack.c.l.b16 %v4808
      %v4911 = vunpack.c.l.b16 %v4809
      %v4912 = vunpack.c.l.b16 %v4810
      %v4913 = vunpack.c.l.b16 %v4811
      %v4914 = vunpack.c.l.b16 %v4812
      %v4915 = vunpack.c.l.b16 %v4813
      %v4916 = vunpack.c.l.b16 %v4814
      %v4917 = vunpack.c.l.b16 %v4815
      %v4918 = vpack.c.b16 %v4910, %v4909
      %v4919 = vpack.c.b16 %v4912, %v4911
      %v4920 = vpack.c.b16 %v4914, %v4913
      %v4921 = vpack.c.b16 %v4916, %v4915
      %v4922 = vpack.c.b16 %v4917, %v4917
      %vm4927 = vcmask 588800
      %v4929 = vsel %vm4927, %v4884, 0
      %v4932 = vsel %vm4927, %v4885, 0
      %v4935 = vsel %vm4927, %v4886, 0
      %v4938 = vsel %vm4927, %v4887, 0
      %v4941 = vsel %vm4927, %v4888, 0
      %v4944 = vsel %vm4927, %v4889, 0
      %v4947 = vsel %vm4927, %v4890, 0
      %v4950 = vsel %vm4927, %v4891, 0
      %v4953 = vsel %vm4927, %v4892, 0
      %v4956 = vsel %vm4927, %v4893, 0
      %v4959 = vsel %vm4927, %v4894, 0
      %v4962 = vsel %vm4927, %v4895, 0
      %v4965 = vsel %vm4927, %v4896, 0
      %v4968 = vsel %vm4927, %v4897, 0
      %v4971 = vsel %vm4927, %v4898, 0
      %v4974 = vsel %vm4927, %v4899, 0
      %vm4976 = vcmask 1043456
      %v4978 = vsel %vm4976, %v4922, 0
      %4980 = vmatpush.bf16.msra.mxu0 0
      %4981 = vmatpush.bf16.msra.mxu0 0
      %4982 = vmatpush.bf16.msra.mxu0 0
      %4983 = vmatpush.bf16.msra.mxu0 %v4978
      %4984 = vmatpush.bf16.msra.mxu0 %v4921
      %4985 = vmatpush.bf16.msra.mxu0 %v4920
      %4986 = vmatpush.bf16.msra.mxu0 %v4919
      %4987 = vmatpush.bf16.msra.mxu0 %v4918
      %4988 = vmatmul.bf16.gmra.mxu0 %v4929
      %v4989 = vpop.f32.mrf.mxu0
      %v4990 = vadd.f32 %v4818, %v4989
      %v4991 = vpop.f32.mrf.mxu0
      %v4992 = vadd.f32 %v4818, %v4991
      %4993 = vmatmul.bf16.gmra.mxu0 %v4932
      %v4994 = vpop.f32.mrf.mxu0
      %v4995 = vadd.f32 %v4818, %v4994
      %v4996 = vpop.f32.mrf.mxu0
      %v4997 = vadd.f32 %v4818, %v4996
      %4998 = vmatmul.bf16.gmra.mxu0 %v4935
      %v4999 = vpop.f32.mrf.mxu0
      %v5000 = vadd.f32 %v4818, %v4999
      %v5001 = vpop.f32.mrf.mxu0
      %v5002 = vadd.f32 %v4818, %v5001
      %5003 = vmatmul.bf16.gmra.mxu0 %v4938
      %v5004 = vpop.f32.mrf.mxu0
      %v5005 = vadd.f32 %v4818, %v5004
      %v5006 = vpop.f32.mrf.mxu0
      %v5007 = vadd.f32 %v4818, %v5006
      %5008 = vmatmul.bf16.gmra.mxu0 %v4941
      %v5009 = vpop.f32.mrf.mxu0
      %v5010 = vadd.f32 %v4818, %v5009
      %v5011 = vpop.f32.mrf.mxu0
      %v5012 = vadd.f32 %v4818, %v5011
      %5013 = vmatmul.bf16.gmra.mxu0 %v4944
      %v5014 = vpop.f32.mrf.mxu0
      %v5015 = vadd.f32 %v4818, %v5014
      %v5016 = vpop.f32.mrf.mxu0
      %v5017 = vadd.f32 %v4818, %v5016
      %5018 = vmatmul.bf16.gmra.mxu0 %v4947
      %v5019 = vpop.f32.mrf.mxu0
      %v5020 = vadd.f32 %v4818, %v5019
      %v5021 = vpop.f32.mrf.mxu0
      %v5022 = vadd.f32 %v4818, %v5021
      %5023 = vmatmul.bf16.gmra.mxu0 %v4950
      %v5024 = vpop.f32.mrf.mxu0
      %v5025 = vadd.f32 %v4818, %v5024
      %v5026 = vpop.f32.mrf.mxu0
      %v5027 = vadd.f32 %v4818, %v5026
      %5028 = vmatmul.bf16.gmra.mxu0 %v4953
      %v5029 = vpop.f32.mrf.mxu0
      %v5030 = vadd.f32 %v4818, %v5029
      %v5031 = vpop.f32.mrf.mxu0
      %v5032 = vadd.f32 %v4818, %v5031
      %5033 = vmatmul.bf16.gmra.mxu0 %v4956
      %v5034 = vpop.f32.mrf.mxu0
      %v5035 = vadd.f32 %v4818, %v5034
      %v5036 = vpop.f32.mrf.mxu0
      %v5037 = vadd.f32 %v4818, %v5036
      %5038 = vmatmul.bf16.gmra.mxu0 %v4959
      %v5039 = vpop.f32.mrf.mxu0
      %v5040 = vadd.f32 %v4818, %v5039
      %v5041 = vpop.f32.mrf.mxu0
      %v5042 = vadd.f32 %v4818, %v5041
      %5043 = vmatmul.bf16.gmra.mxu0 %v4962
      %v5044 = vpop.f32.mrf.mxu0
      %v5045 = vadd.f32 %v4818, %v5044
      %v5046 = vpop.f32.mrf.mxu0
      %v5047 = vadd.f32 %v4818, %v5046
      %5048 = vmatmul.bf16.gmra.mxu0 %v4965
      %v5049 = vpop.f32.mrf.mxu0
      %v5050 = vadd.f32 %v4818, %v5049
      %v5051 = vpop.f32.mrf.mxu0
      %v5052 = vadd.f32 %v4818, %v5051
      %5053 = vmatmul.bf16.gmra.mxu0 %v4968
      %v5054 = vpop.f32.mrf.mxu0
      %v5055 = vadd.f32 %v4818, %v5054
      %v5056 = vpop.f32.mrf.mxu0
      %v5057 = vadd.f32 %v4818, %v5056
      %5058 = vmatmul.bf16.gmra.mxu0 %v4971
      %v5059 = vpop.f32.mrf.mxu0
      %v5060 = vadd.f32 %v4818, %v5059
      %v5061 = vpop.f32.mrf.mxu0
      %v5062 = vadd.f32 %v4818, %v5061
      %5063 = vmatmul.bf16.gmra.mxu0 %v4974
      %v5064 = vpop.f32.mrf.mxu0
      %v5065 = vadd.f32 %v4818, %v5064
      %v5066 = vpop.f32.mrf.mxu0
      %v5067 = vadd.f32 %v4818, %v5066
      %5068 = vdwg.mxu0
      %5069 = vst.msk [vmem:[%s305] sm:$0xff] %vm353, %v4990
      %5070 = vst.msk [vmem:[%s305 + $0x8] sm:$0xff] %vm353, %v4992
      %5071 = vst.msk [vmem:[%s305 + $0x10] sm:$0xff] %vm353, %v4995
      %5072 = vst.msk [vmem:[%s305 + $0x18] sm:$0xff] %vm353, %v4997
      %5073 = vst.msk [vmem:[%s305 + $0x20] sm:$0xff] %vm353, %v5000
      %5074 = vst.msk [vmem:[%s305 + $0x28] sm:$0xff] %vm353, %v5002
      %5075 = vst.msk [vmem:[%s305 + $0x30] sm:$0xff] %vm353, %v5005
      %5076 = vst.msk [vmem:[%s305 + $0x38] sm:$0xff] %vm353, %v5007
      %5077 = vst.msk [vmem:[%s305 + $0x40] sm:$0xff] %vm353, %v5010
      %5078 = vst.msk [vmem:[%s305 + $0x48] sm:$0xff] %vm353, %v5012
      %5079 = vst.msk [vmem:[%s305 + $0x50] sm:$0xff] %vm353, %v5015
      %5080 = vst.msk [vmem:[%s305 + $0x58] sm:$0xff] %vm353, %v5017
      %5081 = vst.msk [vmem:[%s305 + $0x60] sm:$0xff] %vm353, %v5020
      %5082 = vst.msk [vmem:[%s305 + $0x68] sm:$0xff] %vm353, %v5022
      %5083 = vst.msk [vmem:[%s305 + $0x70] sm:$0xff] %vm353, %v5025
      %5084 = vst.msk [vmem:[%s305 + $0x78] sm:$0xff] %vm353, %v5027
      %5085 = vst.msk [vmem:[%s305 + $0x80] sm:$0xff] %vm353, %v5030
      %5086 = vst.msk [vmem:[%s305 + $0x88] sm:$0xff] %vm353, %v5032
      %5087 = vst.msk [vmem:[%s305 + $0x90] sm:$0xff] %vm353, %v5035
      %5088 = vst.msk [vmem:[%s305 + $0x98] sm:$0xff] %vm353, %v5037
      %5089 = vst.msk [vmem:[%s305 + $0xa0] sm:$0xff] %vm353, %v5040
      %5090 = vst.msk [vmem:[%s305 + $0xa8] sm:$0xff] %vm353, %v5042
      %5091 = vst.msk [vmem:[%s305 + $0xb0] sm:$0xff] %vm353, %v5045
      %5092 = vst.msk [vmem:[%s305 + $0xb8] sm:$0xff] %vm353, %v5047
      %5093 = vst.msk [vmem:[%s305 + $0xc0] sm:$0xff] %vm353, %v5050
      %5094 = vst.msk [vmem:[%s305 + $0xc8] sm:$0xff] %vm353, %v5052
      %5095 = vst.msk [vmem:[%s305 + $0xd0] sm:$0xff] %vm353, %v5055
      %5096 = vst.msk [vmem:[%s305 + $0xd8] sm:$0xff] %vm353, %v5057
      %5097 = vst.msk [vmem:[%s305 + $0xe0] sm:$0xff] %vm353, %v5060
      %5098 = vst.msk [vmem:[%s305 + $0xe8] sm:$0xff] %vm353, %v5062
      %5099 = vst.msk [vmem:[%s305 + $0xf0] sm:$0xff] %vm353, %v5065
      %5100 = vst.msk [vmem:[%s305 + $0xf8] sm:$0xff] %vm353, %v5067
      %p5101 = scmp.lt.s32.totalorder %s19, 1
      %s5102 = scalar_select %p5101, %s19, 1
      %s5103 = smul.addr %s5102, 32
      %s5104 = smul.addr %s5103, 8
      %s5105 = scalar_lea.vmem %s8, %s5104
      // Predicated region
      $region53: #{tpu_custom_call.1} parent=51 // pred_check
        %p5106 = pneg %p210
      $region54: #{tpu_custom_call.1} parent=51 // pred_check_branch
        %5108 = sbr.rel (%p5106) target = $region56
      $region55: #{tpu_custom_call.1} parent=51 // pred_region
        _
      $region56: #{tpu_custom_call.1} parent=51 // pred_fallthru
        _
    $region52: #{tpu_custom_call.1} parent=5 // pred_fallthru
      _
    %p5109 = scmp.le.s32.totalorder 2, %s14
    // Predicated region
    $region57: #{tpu_custom_call.1} parent=5 // pred_check
      %p5110 = pneg %p5109
    $region58: #{tpu_custom_call.1} parent=5 // pred_check_branch
      %5112 = sbr.rel (%p5110) target = $region60
    $region59: #{tpu_custom_call.1} parent=5 // pred_region
      %s5113 = ssub.s32 %s14, 2
      // Predicated region
      $region61: #{tpu_custom_call.1} parent=59 // pred_check
        %p5114 = pneg %p216
      $region62: #{tpu_custom_call.1} parent=59 // pred_check_branch
        %5116 = sbr.rel (%p5114) target = $region64
      $region63: #{tpu_custom_call.1} parent=59 // pred_region
        %p5117 = scmp.lt.s32.totalorder %s20, 1
        %s5118 = scalar_select %p5117, %s20, 1
        %s5119 = smul.addr %s5118, 32
        %s5120 = smul.addr %s5119, 8
        %s5121 = scalar_lea.vmem %s8, %s5120
      $region64: #{tpu_custom_call.1} parent=59 // pred_fallthru
        _
    $region60: #{tpu_custom_call.1} parent=5 // pred_fallthru
      _
  $region6: #{tpu_custom_call.1} parent=0 // loop_footer
    %s18 = sadd.s32 1, %s14
  $region7: #{tpu_custom_call.1} parent=0 // loop_footer_branch
    %13 = sbr.rel target = $region3
  $region8: #{tpu_custom_call.1} parent=0 // loop_exit
    _

</llo_original>
